<compile_context>
chip_gen: v7x
topology: tpu7x:2x2x1
jax: 0.10.0
libtpu: 0.0.40
codegen_flags: <defaults>
</compile_context>

<pallas_src>
import functools

import jax
import jax.numpy as jnp
from jax import lax
from jax.experimental import pallas as pl
from jax.experimental.pallas import tpu as pltpu


# Set to jnp.bfloat16 for ~2-3x MXU rate (esp. v5e) and half the activation DMA
# bytes, at the cost of small drift from the PyTorch f32 reference.
COMPUTE_DTYPE = jnp.float32
TILE_ROWS_CAP = 2048            # target rows (tile_h * W) per grid step
VMEM_LIMIT_BYTES = 48 * 1024 * 1024


# ---------------------------------------------------------------------------
# Pallas kernels
# ---------------------------------------------------------------------------
#
# Input tile layout (built by _conv_input_tiles):
#   the image is zero-padded by (top=1, bottom=2, left=1, right=1) and each row
#   tile of `tile_h` output rows carries padded rows [t*tile_h, t*tile_h+tile_h+3).
#   Flattening (rows, cols) -> rows_in = (tile_h+3)*(W+2) rows of Cin lanes makes
#   tap (dy, dx) of output index m = h*(W+2)+w exactly row  m + dy*(W+2) + dx ,
#   i.e. a static contiguous slice [off, off+M).  Outputs are computed for all
#   W+2 columns; the 2 junk columns per row are discarded by the wrapper.

def _conv3x3_kernel(x_ref, w_ref, b_ref, o_ref, *, wp, act):
    """3x3 conv (stride 1, pad 1) as 9 accumulated MXU matmuls over in-VMEM taps.

    x_ref: (1, rows_in, Cin)   flattened padded row-tile (see above)
    w_ref: (9, Cin, Cout)
    b_ref: (1, Cout)
    o_ref: (1, M, Cout)        M = tile_h * (W + 2)
    act  : "none" | "leaky" | "sigmoid"  (fused activation)
    """
    m, cout = o_ref.shape[1], o_ref.shape[2]
    acc = jnp.zeros((m, cout), jnp.float32)
    for dy in range(3):
        for dx in range(3):
            off = dy * wp + dx
            acc = acc + jnp.dot(x_ref[0, off:off + m, :], w_ref[dy * 3 + dx],
                                preferred_element_type=jnp.float32)
    out = acc + b_ref[...]
    if act == "leaky":
        out = jnp.where(out >= 0, out, 0.1 * out)        # LeakyReLU(0.1)
    elif act == "sigmoid":
        out = jax.nn.sigmoid(out)
    o_ref[0] = out


def _pconv3x3_kernel(xm_ref, ms_ref, w_ref, b_ref, o_ref, mo_ref, *, wp, cin):
    """PartialConv2d(3x3, pad=1, multi_channel=True, return_mask=True, bias=True)
    with the EncodeBlock LeakyReLU(0.1) fused.

    xm_ref: (1, rows_in, Cin)  flattened padded tile of (x * mask)
    ms_ref: (1, rows_in, 1)    flattened padded tile of sum_cin(mask)  (per pixel)
    w_ref : (9, Cin, Cout)
    b_ref : (1, Cout)
    o_ref : (1, M, Cout)
    mo_ref: (1, M, 1)          single-channel update mask (constant over Cout)

    PyTorch semantics:
        raw   = conv(x*m)                     msum = conv(m, ones)   (per out-chan)
        ratio = (9*Cin)/(msum+1e-8);  um = clamp(msum,0,1);  ratio *= um
        out   = leaky(( raw * ratio + bias ) * um, 0.1);   mask_out = um
    """
    m, cout = o_ref.shape[1], o_ref.shape[2]
    acc = jnp.zeros((m, cout), jnp.float32)
    msum = jnp.zeros((m, 1), jnp.float32)
    for dy in range(3):
        for dx in range(3):
            off = dy * wp + dx
            acc = acc + jnp.dot(xm_ref[0, off:off + m, :], w_ref[dy * 3 + dx],
                                preferred_element_type=jnp.float32)
            msum = msum + ms_ref[0, off:off + m, :]
    winsize = jnp.float32(9 * cin)
    ratio = winsize / (msum + 1e-8)
    um = jnp.clip(msum, 0.0, 1.0)
    out = (acc * (ratio * um) + b_ref[...]) * um
    out = jnp.where(out >= 0, out, 0.1 * out)            # fused LeakyReLU(0.1)
    o_ref[0] = out
    mo_ref[0] = um


# ---------------------------------------------------------------------------
# Kernel wrappers (tile building + pallas_call)
# ---------------------------------------------------------------------------

def _pick_tile_h(h, w, cap):
    """Largest divisor of h with tile_h * w <= cap (bounds VMEM / enables row grid)."""
    best = 1
    for th in range(1, h + 1):
        if h % th == 0 and th * w <= cap:
            best = th
    return best


def _conv_input_tiles(x, tile_h):
    """(N,H,W,C) -> (N*T, (tile_h+3)*(W+2), C) flattened zero-padded row tiles."""
    n, h, w, c = x.shape
    t = h // tile_h
    xp = jnp.pad(x, ((0, 0), (1, 2), (1, 1), (0, 0)))            # (N, H+3, W+2, C)
    if t == 1:
        xt = xp[:, None]
    else:
        xt = jnp.stack([xp[:, k * tile_h: k * tile_h + tile_h + 3]
                        for k in range(t)], axis=1)              # tiny halo dup only
    return xt.reshape(n * t, (tile_h + 3) * (w + 2), c)


def _untile_conv_output(y, n, t, tile_h, w):
    """(N*T, tile_h*(W+2), C) -> (N, H, W, C), dropping the 2 junk columns/row."""
    c = y.shape[-1]
    y = y.reshape(n, t, tile_h, w + 2, c)[:, :, :, :w, :]
    return y.reshape(n, t * tile_h, w, c)


def conv3x3(x, w, b, act="none", tile_cap=TILE_ROWS_CAP):
    """nn.Conv2d(k=3, pad=1) + optional fused activation. x: (N,H,W,Cin) f32."""
    n, h, w_dim, cin = x.shape
    cout = w.shape[-1]
    th = _pick_tile_h(h, w_dim, tile_cap)
    t = h // th
    wp = w_dim + 2
    rows_in = (th + 3) * wp
    m = th * wp
    xt = _conv_input_tiles(x.astype(COMPUTE_DTYPE), th)
    w9 = w.reshape(9, cin, cout).astype(COMPUTE_DTYPE)
    b2 = b.reshape(1, cout).astype(jnp.float32)
    out = pl.pallas_call(
        functools.partial(_conv3x3_kernel, wp=wp, act=act),
        out_shape=jax.ShapeDtypeStruct((n * t, m, cout), jnp.float32),
        grid=(n * t,),
        in_specs=[
            pl.BlockSpec((1, rows_in, cin), lambda i: (i, 0, 0)),
            pl.BlockSpec((9, cin, cout), lambda i: (0, 0, 0)),
            pl.BlockSpec((1, cout), lambda i: (0, 0)),
        ],
        out_specs=pl.BlockSpec((1, m, cout), lambda i: (i, 0, 0)),
        compiler_params=pltpu.CompilerParams(
            dimension_semantics=("parallel",),
            vmem_limit_bytes=VMEM_LIMIT_BYTES),
    )(xt, w9, b2)
    return _untile_conv_output(out, n, t, th, w_dim)


def partial_conv3x3(x, mask, w, b, tile_cap=TILE_ROWS_CAP):
    """PartialConv2d + fused LeakyReLU(0.1).

    x: (N,H,W,Cin).  mask: (N,H,W,Cin) (first block) or (N,H,W,1) (carried update
    mask; PyTorch carries Cin identical channels, so this is exact).
    Returns (out (N,H,W,Cout), update_mask (N,H,W,1))."""
    n, h, w_dim, cin = x.shape
    cout = w.shape[-1]
    th = _pick_tile_h(h, w_dim, tile_cap)
    t = h // th
    wp = w_dim + 2
    rows_in = (th + 3) * wp
    m = th * wp

    xm = (x * mask).astype(COMPUTE_DTYPE)                  # premultiplied stream
    if mask.shape[-1] == 1:
        ms = mask * jnp.float32(cin)                       # Cin identical channels
    else:
        ms = jnp.sum(mask, axis=-1, keepdims=True)         # per-pixel channel sum
    xmt = _conv_input_tiles(xm, th)
    mst = _conv_input_tiles(ms.astype(jnp.float32), th)
    w9 = w.reshape(9, cin, cout).astype(COMPUTE_DTYPE)
    b2 = b.reshape(1, cout).astype(jnp.float32)

    out, um = pl.pallas_call(
        functools.partial(_pconv3x3_kernel, wp=wp, cin=cin),
        out_shape=(jax.ShapeDtypeStruct((n * t, m, cout), jnp.float32),
                   jax.ShapeDtypeStruct((n * t, m, 1), jnp.float32)),
        grid=(n * t,),
        in_specs=[
            pl.BlockSpec((1, rows_in, cin), lambda i: (i, 0, 0)),
            pl.BlockSpec((1, rows_in, 1), lambda i: (i, 0, 0)),
            pl.BlockSpec((9, cin, cout), lambda i: (0, 0, 0)),
            pl.BlockSpec((1, cout), lambda i: (0, 0)),
        ],
        out_specs=(pl.BlockSpec((1, m, cout), lambda i: (i, 0, 0)),
                   pl.BlockSpec((1, m, 1), lambda i: (i, 0, 0))),
        compiler_params=pltpu.CompilerParams(
            dimension_semantics=("parallel",),
            vmem_limit_bytes=VMEM_LIMIT_BYTES),
    )(xmt, mst, w9, b2)
    return (_untile_conv_output(out, n, t, th, w_dim),
            _untile_conv_output(um, n, t, th, w_dim))


# ---------------------------------------------------------------------------
# Plain-JAX glue ops (fused by jit into the kernel-input tile producers)
# ---------------------------------------------------------------------------

def maxpool2(x):
    """nn.MaxPool2d(2): 2x2 kernel, stride 2, no padding."""
    n, h, w, c = x.shape
    return x.reshape(n, h // 2, 2, w // 2, 2, c).max(axis=(2, 4))


def _up2_axis(a, axis):
    n = a.shape[axis]
    first = lax.slice_in_dim(a, 0, 1, axis=axis)
    last = lax.slice_in_dim(a, n - 1, n, axis=axis)
    prev = jnp.concatenate([first, lax.slice_in_dim(a, 0, n - 1, axis=axis)], axis=axis)
    nxt = jnp.concatenate([lax.slice_in_dim(a, 1, n, axis=axis), last], axis=axis)
    even = 0.75 * a + 0.25 * prev
    odd = 0.75 * a + 0.25 * nxt
    out = jnp.stack([even, odd], axis=axis + 1)
    new_shape = list(a.shape)
    new_shape[axis] = 2 * n
    return out.reshape(new_shape)


def upsample2x(x):
    """nn.Upsample(scale_factor=2, mode='bilinear', align_corners=False), exact
    separable closed form for scale 2."""
    return _up2_axis(_up2_axis(x, 1), 2)


def dropout(x, p, key):
    """nn.Dropout(p) training semantics (Bernoulli keep, 1/(1-p) scaling).
    # TODO(synk): PyTorch's RNG stream cannot be reproduced; draws come from
    # jax.random.  Could be fused in-kernel with pltpu.prng_* + position-based
    # sampling, but kept in XLA glue (jit fuses it into the tile producer)."""
    if p == 0.0:
        return x
    keep = jax.random.bernoulli(key, 1.0 - p, x.shape)
    return jnp.where(keep, x / (1.0 - p), jnp.zeros_like(x))


# ---------------------------------------------------------------------------
# self2self forward
# ---------------------------------------------------------------------------

def encode_block(x, mask, params, flag):
    out, um = partial_conv3x3(x, mask, params["w"], params["b"])   # leaky fused
    if flag:
        out = maxpool2(out)
        um = maxpool2(um)        # single channel: 48x less mask traffic
    return out, um


def decode_block(x, params, p, key, flag):
    k1, k2, k3 = jax.random.split(key, 3)
    h = conv3x3(dropout(x, p, k1), params["w1"], params["b1"], act="leaky")
    h = conv3x3(dropout(h, p, k2), params["w2"], params["b2"], act="leaky")
    if flag:
        h = conv3x3(dropout(h, p, k3), params["w3"], params["b3"], act="sigmoid")
    return h


def self2self_forward(params, x, mask, p, key):
    keys = jax.random.split(key, 5)
    out_eb0, mask = encode_block(x, mask, params["EB0"], flag=False)
    out_eb1, mask = encode_block(out_eb0, mask, params["EB1"], flag=True)
    out_eb2, mask = encode_block(out_eb1, mask, params["EB2"], flag=True)
    out_eb3, mask = encode_block(out_eb2, mask, params["EB3"], flag=True)
    out_eb4, mask = encode_block(out_eb3, mask, params["EB4"], flag=True)
    out_eb5, mask = encode_block(out_eb4, mask, params["EB5"], flag=True)
    out_eb6, mask = encode_block(out_eb5, mask, params["EB6"], flag=False)

    h = jnp.concatenate([upsample2x(out_eb6), out_eb4], axis=-1)
    h = decode_block(h, params["DB1"], p, keys[0], flag=False)
    h = jnp.concatenate([upsample2x(h), out_eb3], axis=-1)
    h = decode_block(h, params["DB2"], p, keys[1], flag=False)
    h = jnp.concatenate([upsample2x(h), out_eb2], axis=-1)
    h = decode_block(h, params["DB3"], p, keys[2], flag=False)
    h = jnp.concatenate([upsample2x(h), out_eb1], axis=-1)
    h = decode_block(h, params["DB4"], p, keys[3], flag=False)
    h = jnp.concatenate([upsample2x(h), x], axis=-1)
    h = decode_block(h, params["DB5"], p, keys[4], flag=True)
    return h


# ---------------------------------------------------------------------------
# Deterministic parameter init (shapes from the PyTorch __init__)
# ---------------------------------------------------------------------------

def _init_conv(key, cin, cout):
    kw, kb = jax.random.split(key)
    bound = 1.0 / float(cin * 9) ** 0.5          # matches nn.Conv2d default scale
    w = jax.random.uniform(kw, (3, 3, cin, cout), jnp.float32, -bound, bound)
    b = jax.random.uniform(kb, (cout,), jnp.float32, -bound, bound)
    return w, b


def init_params(key, in_channel):
    params = {}
    enc_dims = [(in_channel, 48)] + [(48, 48)] * 6
    for i, (ci, co) in enumerate(enc_dims):
        key, k = jax.random.split(key)
        w, b = _init_conv(k, ci, co)
        params[f"EB{i}"] = {"w": w, "b": b}
    dec_dims = {
        "DB1": (96, 96, 96, None),
        "DB2": (144, 96, 96, None),
        "DB3": (144, 96, 96, None),
        "DB4": (144, 96, 96, None),
        "DB5": (96 + in_channel, 64, 32, in_channel),   # flag=True -> conv3 used
    }
    for name, (ci, mid, out, final) in dec_dims.items():
        key, k1, k2, k3 = jax.random.split(key, 4)
        w1, b1 = _init_conv(k1, ci, mid)
        w2, b2 = _init_conv(k2, mid, out)
        d = {"w1": w1, "b1": b1, "w2": w2, "b2": b2}
        if final is not None:
            w3, b3 = _init_conv(k3, out, final)
            d["w3"] = w3
            d["b3"] = b3
        params[name] = d
    return params


# ---------------------------------------------------------------------------
# Pure-JAX references for the building-block self-check
# ---------------------------------------------------------------------------

def _conv_ref(x, w, b, act="none"):
    y = lax.conv_general_dilated(x, w, (1, 1), "SAME",
                                 dimension_numbers=("NHWC", "HWIO", "NHWC"),
                                 precision=lax.Precision.HIGHEST) + b
    if act == "leaky":
        y = jnp.where(y >= 0, y, 0.1 * y)
    elif act == "sigmoid":
        y = jax.nn.sigmoid(y)
    return y


def _pconv_ref(x, mask, w, b):
    cin = x.shape[-1]
    dn = ("NHWC", "HWIO", "NHWC")
    raw = lax.conv_general_dilated(x * mask, w, (1, 1), "SAME", dimension_numbers=dn,
                                   precision=lax.Precision.HIGHEST)
    msum = lax.conv_general_dilated(mask, jnp.ones((3, 3, cin, 1), jnp.float32),
                                    (1, 1), "SAME", dimension_numbers=dn,
                                    precision=lax.Precision.HIGHEST)
    ratio = (9.0 * cin) / (msum + 1e-8)
    um = jnp.clip(msum, 0.0, 1.0)
    out = (raw * (ratio * um) + b) * um
    out = jnp.where(out >= 0, out, 0.1 * out)
    return out, um


# ---------------------------------------------------------------------------

if __name__ == "__main__":
    key = jax.random.PRNGKey(0)
    kx, km, kp, kd, kc = jax.random.split(key, 5)

    # Small shapes: batch=2, in_channel=3, spatial=32 (must be divisible by 32
    # because of the 5 MaxPool2d(2) stages).
    N, H, W, C = 2, 32, 32, 3
    p = 0.3

    x = jax.random.uniform(kx, (N, H, W, C), jnp.float32)                     # NHWC
    mask = (jax.random.uniform(km, (N, H, W, C)) > 0.3).astype(jnp.float32)   # NHWC
    params = init_params(kp, C)

    # ---- building-block correctness self-check vs XLA conv references ------
    kc1, kc2, kc3, kc4 = jax.random.split(kc, 4)
    xc = jax.random.normal(kc1, (2, 32, 32, 48), jnp.float32)
    wc, bc = _init_conv(kc2, 48, 48)
    got = conv3x3(xc, wc, bc, act="leaky", tile_cap=256)     # forces 4 row tiles
    want = _conv_ref(xc, wc, bc, act="leaky")
    assert jnp.allclose(got, want, atol=2e-3, rtol=2e-3), \
        float(jnp.abs(got - want).max())

    xpv = jax.random.normal(kc3, (2, 32, 32, 3), jnp.float32)
    mpv = (jax.random.uniform(kc4, (2, 32, 32, 3)) > 0.4).astype(jnp.float32)
    wpv, bpv = _init_conv(kc2, 3, 48)
    got_o, got_m = partial_conv3x3(xpv, mpv, wpv, bpv)
    want_o, want_m = _pconv_ref(xpv, mpv, wpv, bpv)
    assert jnp.allclose(got_o, want_o, atol=2e-3, rtol=2e-3), \
        float(jnp.abs(got_o - want_o).max())
    assert jnp.allclose(got_m, want_m)

    # ---- full forward -------------------------------------------------------
    fwd = jax.jit(self2self_forward, static_argnums=(3,))
    out = jax.block_until_ready(fwd(params, x, mask, p, kd))

    assert out.shape == (N, H, W, C), out.shape
    assert bool(jnp.isfinite(out).all())
    assert bool((out >= 0).all()) and bool((out <= 1).all())   # sigmoid output
    print("KERNEL_OK")
</pallas_src>

<mosaic_0001>
module attributes {stable_mosaic.version = 11 : i64} {
  func.func @_conv3x3_kernel(%arg0: i32, %arg1: memref<1x374x48xf32, #tpu.memory_space<vmem>>, %arg2: memref<9x48x48xf32, #tpu.memory_space<vmem>>, %arg3: memref<1x48xf32, #tpu.memory_space<vmem>>, %arg4: memref<1x272x48xf32, #tpu.memory_space<vmem>>) attributes {dimension_semantics = [#tpu.dimension_semantics<parallel>], iteration_bounds = array<i64: 8>, scalar_prefetch = 0 : i64, scratch_operands = 0 : i64, tpu.core_type = #tpu.core_type<tc>, window_params = [{transform_indices = @transform_0, window_bounds = array<i64: 1, 374, 48>}, {pipeline_mode = #tpu.pipeline_mode<synchronous>, transform_indices = @transform_1, window_bounds = array<i64: 9, 48, 48>}, {pipeline_mode = #tpu.pipeline_mode<synchronous>, transform_indices = @transform_2, window_bounds = array<i64: 1, 48>}, {transform_indices = @transform_3, window_bounds = array<i64: 1, 272, 48>}]} {
    %cst = arith.constant 0.000000e+00 : f32
    %0 = vector.broadcast %cst : f32 to vector<272x48xf32>
    %c0 = arith.constant 0 : index
    %c0_0 = arith.constant 0 : index
    %c0_1 = arith.constant 0 : index
    %1 = vector.load %arg1[%c0, %c0_0, %c0_1] : memref<1x374x48xf32, #tpu.memory_space<vmem>>, vector<1x272x48xf32>
    %2 = vector.shape_cast %1 : vector<1x272x48xf32> to vector<272x48xf32>
    %c0_2 = arith.constant 0 : index
    %c0_3 = arith.constant 0 : index
    %c0_4 = arith.constant 0 : index
    %3 = vector.load %arg2[%c0_2, %c0_3, %c0_4] : memref<9x48x48xf32, #tpu.memory_space<vmem>>, vector<1x48x48xf32>
    %4 = vector.shape_cast %3 : vector<1x48x48xf32> to vector<48x48xf32>
    %cst_5 = arith.constant dense<0.000000e+00> : vector<272x48xf32>
    %5 = tpu.matmul %2, %4, %cst_5 {dimension_numbers = #tpu.dot_dimension_numbers<[1], [0], [0], [1], [0, 0, 1, 1], [], []>} : vector<272x48xf32>, vector<48x48xf32>, vector<272x48xf32> -> vector<272x48xf32>
    %6 = arith.addf %0, %5 : vector<272x48xf32>
    %c0_6 = arith.constant 0 : index
    %c1 = arith.constant 1 : index
    %c0_7 = arith.constant 0 : index
    %7 = vector.load %arg1[%c0_6, %c1, %c0_7] : memref<1x374x48xf32, #tpu.memory_space<vmem>>, vector<1x272x48xf32>
    %8 = vector.shape_cast %7 : vector<1x272x48xf32> to vector<272x48xf32>
    %c1_8 = arith.constant 1 : index
    %c0_9 = arith.constant 0 : index
    %c0_10 = arith.constant 0 : index
    %9 = vector.load %arg2[%c1_8, %c0_9, %c0_10] : memref<9x48x48xf32, #tpu.memory_space<vmem>>, vector<1x48x48xf32>
    %10 = vector.shape_cast %9 : vector<1x48x48xf32> to vector<48x48xf32>
    %cst_11 = arith.constant dense<0.000000e+00> : vector<272x48xf32>
    %11 = tpu.matmul %8, %10, %cst_11 {dimension_numbers = #tpu.dot_dimension_numbers<[1], [0], [0], [1], [0, 0, 1, 1], [], []>} : vector<272x48xf32>, vector<48x48xf32>, vector<272x48xf32> -> vector<272x48xf32>
    %12 = arith.addf %6, %11 : vector<272x48xf32>
    %c0_12 = arith.constant 0 : index
    %c2 = arith.constant 2 : index
    %c0_13 = arith.constant 0 : index
    %13 = vector.load %arg1[%c0_12, %c2, %c0_13] : memref<1x374x48xf32, #tpu.memory_space<vmem>>, vector<1x272x48xf32>
    %14 = vector.shape_cast %13 : vector<1x272x48xf32> to vector<272x48xf32>
    %c2_14 = arith.constant 2 : index
    %c0_15 = arith.constant 0 : index
    %c0_16 = arith.constant 0 : index
    %15 = vector.load %arg2[%c2_14, %c0_15, %c0_16] : memref<9x48x48xf32, #tpu.memory_space<vmem>>, vector<1x48x48xf32>
    %16 = vector.shape_cast %15 : vector<1x48x48xf32> to vector<48x48xf32>
    %cst_17 = arith.constant dense<0.000000e+00> : vector<272x48xf32>
    %17 = tpu.matmul %14, %16, %cst_17 {dimension_numbers = #tpu.dot_dimension_numbers<[1], [0], [0], [1], [0, 0, 1, 1], [], []>} : vector<272x48xf32>, vector<48x48xf32>, vector<272x48xf32> -> vector<272x48xf32>
    %18 = arith.addf %12, %17 : vector<272x48xf32>
    %c0_18 = arith.constant 0 : index
    %c34 = arith.constant 34 : index
    %c0_19 = arith.constant 0 : index
    %19 = vector.load %arg1[%c0_18, %c34, %c0_19] : memref<1x374x48xf32, #tpu.memory_space<vmem>>, vector<1x272x48xf32>
    %20 = vector.shape_cast %19 : vector<1x272x48xf32> to vector<272x48xf32>
    %c3 = arith.constant 3 : index
    %c0_20 = arith.constant 0 : index
    %c0_21 = arith.constant 0 : index
    %21 = vector.load %arg2[%c3, %c0_20, %c0_21] : memref<9x48x48xf32, #tpu.memory_space<vmem>>, vector<1x48x48xf32>
    %22 = vector.shape_cast %21 : vector<1x48x48xf32> to vector<48x48xf32>
    %cst_22 = arith.constant dense<0.000000e+00> : vector<272x48xf32>
    %23 = tpu.matmul %20, %22, %cst_22 {dimension_numbers = #tpu.dot_dimension_numbers<[1], [0], [0], [1], [0, 0, 1, 1], [], []>} : vector<272x48xf32>, vector<48x48xf32>, vector<272x48xf32> -> vector<272x48xf32>
    %24 = arith.addf %18, %23 : vector<272x48xf32>
    %c0_23 = arith.constant 0 : index
    %c35 = arith.constant 35 : index
    %c0_24 = arith.constant 0 : index
    %25 = vector.load %arg1[%c0_23, %c35, %c0_24] : memref<1x374x48xf32, #tpu.memory_space<vmem>>, vector<1x272x48xf32>
    %26 = vector.shape_cast %25 : vector<1x272x48xf32> to vector<272x48xf32>
    %c4 = arith.constant 4 : index
    %c0_25 = arith.constant 0 : index
    %c0_26 = arith.constant 0 : index
    %27 = vector.load %arg2[%c4, %c0_25, %c0_26] : memref<9x48x48xf32, #tpu.memory_space<vmem>>, vector<1x48x48xf32>
    %28 = vector.shape_cast %27 : vector<1x48x48xf32> to vector<48x48xf32>
    %cst_27 = arith.constant dense<0.000000e+00> : vector<272x48xf32>
    %29 = tpu.matmul %26, %28, %cst_27 {dimension_numbers = #tpu.dot_dimension_numbers<[1], [0], [0], [1], [0, 0, 1, 1], [], []>} : vector<272x48xf32>, vector<48x48xf32>, vector<272x48xf32> -> vector<272x48xf32>
    %30 = arith.addf %24, %29 : vector<272x48xf32>
    %c0_28 = arith.constant 0 : index
    %c36 = arith.constant 36 : index
    %c0_29 = arith.constant 0 : index
    %31 = vector.load %arg1[%c0_28, %c36, %c0_29] : memref<1x374x48xf32, #tpu.memory_space<vmem>>, vector<1x272x48xf32>
    %32 = vector.shape_cast %31 : vector<1x272x48xf32> to vector<272x48xf32>
    %c5 = arith.constant 5 : index
    %c0_30 = arith.constant 0 : index
    %c0_31 = arith.constant 0 : index
    %33 = vector.load %arg2[%c5, %c0_30, %c0_31] : memref<9x48x48xf32, #tpu.memory_space<vmem>>, vector<1x48x48xf32>
    %34 = vector.shape_cast %33 : vector<1x48x48xf32> to vector<48x48xf32>
    %cst_32 = arith.constant dense<0.000000e+00> : vector<272x48xf32>
    %35 = tpu.matmul %32, %34, %cst_32 {dimension_numbers = #tpu.dot_dimension_numbers<[1], [0], [0], [1], [0, 0, 1, 1], [], []>} : vector<272x48xf32>, vector<48x48xf32>, vector<272x48xf32> -> vector<272x48xf32>
    %36 = arith.addf %30, %35 : vector<272x48xf32>
    %c0_33 = arith.constant 0 : index
    %c68 = arith.constant 68 : index
    %c0_34 = arith.constant 0 : index
    %37 = vector.load %arg1[%c0_33, %c68, %c0_34] : memref<1x374x48xf32, #tpu.memory_space<vmem>>, vector<1x272x48xf32>
    %38 = vector.shape_cast %37 : vector<1x272x48xf32> to vector<272x48xf32>
    %c6 = arith.constant 6 : index
    %c0_35 = arith.constant 0 : index
    %c0_36 = arith.constant 0 : index
    %39 = vector.load %arg2[%c6, %c0_35, %c0_36] : memref<9x48x48xf32, #tpu.memory_space<vmem>>, vector<1x48x48xf32>
    %40 = vector.shape_cast %39 : vector<1x48x48xf32> to vector<48x48xf32>
    %cst_37 = arith.constant dense<0.000000e+00> : vector<272x48xf32>
    %41 = tpu.matmul %38, %40, %cst_37 {dimension_numbers = #tpu.dot_dimension_numbers<[1], [0], [0], [1], [0, 0, 1, 1], [], []>} : vector<272x48xf32>, vector<48x48xf32>, vector<272x48xf32> -> vector<272x48xf32>
    %42 = arith.addf %36, %41 : vector<272x48xf32>
    %c0_38 = arith.constant 0 : index
    %c69 = arith.constant 69 : index
    %c0_39 = arith.constant 0 : index
    %43 = vector.load %arg1[%c0_38, %c69, %c0_39] : memref<1x374x48xf32, #tpu.memory_space<vmem>>, vector<1x272x48xf32>
    %44 = vector.shape_cast %43 : vector<1x272x48xf32> to vector<272x48xf32>
    %c7 = arith.constant 7 : index
    %c0_40 = arith.constant 0 : index
    %c0_41 = arith.constant 0 : index
    %45 = vector.load %arg2[%c7, %c0_40, %c0_41] : memref<9x48x48xf32, #tpu.memory_space<vmem>>, vector<1x48x48xf32>
    %46 = vector.shape_cast %45 : vector<1x48x48xf32> to vector<48x48xf32>
    %cst_42 = arith.constant dense<0.000000e+00> : vector<272x48xf32>
    %47 = tpu.matmul %44, %46, %cst_42 {dimension_numbers = #tpu.dot_dimension_numbers<[1], [0], [0], [1], [0, 0, 1, 1], [], []>} : vector<272x48xf32>, vector<48x48xf32>, vector<272x48xf32> -> vector<272x48xf32>
    %48 = arith.addf %42, %47 : vector<272x48xf32>
    %c0_43 = arith.constant 0 : index
    %c70 = arith.constant 70 : index
    %c0_44 = arith.constant 0 : index
    %49 = vector.load %arg1[%c0_43, %c70, %c0_44] : memref<1x374x48xf32, #tpu.memory_space<vmem>>, vector<1x272x48xf32>
    %50 = vector.shape_cast %49 : vector<1x272x48xf32> to vector<272x48xf32>
    %c8 = arith.constant 8 : index
    %c0_45 = arith.constant 0 : index
    %c0_46 = arith.constant 0 : index
    %51 = vector.load %arg2[%c8, %c0_45, %c0_46] : memref<9x48x48xf32, #tpu.memory_space<vmem>>, vector<1x48x48xf32>
    %52 = vector.shape_cast %51 : vector<1x48x48xf32> to vector<48x48xf32>
    %cst_47 = arith.constant dense<0.000000e+00> : vector<272x48xf32>
    %53 = tpu.matmul %50, %52, %cst_47 {dimension_numbers = #tpu.dot_dimension_numbers<[1], [0], [0], [1], [0, 0, 1, 1], [], []>} : vector<272x48xf32>, vector<48x48xf32>, vector<272x48xf32> -> vector<272x48xf32>
    %54 = arith.addf %48, %53 : vector<272x48xf32>
    %c0_48 = arith.constant 0 : index
    %c0_49 = arith.constant 0 : index
    %55 = vector.load %arg3[%c0_48, %c0_49] : memref<1x48xf32, #tpu.memory_space<vmem>>, vector<1x48xf32>
    %56 = vector.broadcast %55 : vector<1x48xf32> to vector<272x48xf32>
    %57 = arith.addf %54, %56 : vector<272x48xf32>
    %cst_50 = arith.constant 0.000000e+00 : f32
    %58 = vector.broadcast %cst_50 : f32 to vector<272x48xf32>
    %59 = arith.cmpf oge, %57, %58 : vector<272x48xf32>
    %cst_51 = arith.constant 1.000000e-01 : f32
    %60 = vector.broadcast %cst_51 : f32 to vector<272x48xf32>
    %61 = arith.mulf %60, %57 : vector<272x48xf32>
    %62 = arith.select %59, %57, %61 : vector<272x48xi1>, vector<272x48xf32>
    %c0_52 = arith.constant 0 : index
    %c0_53 = arith.constant 0 : index
    %c0_54 = arith.constant 0 : index
    %63 = vector.load %arg4[%c0_52, %c0_53, %c0_54] : memref<1x272x48xf32, #tpu.memory_space<vmem>>, vector<1x272x48xf32>
    %64 = vector.shape_cast %63 : vector<1x272x48xf32> to vector<272x48xf32>
    %65 = vector.shape_cast %62 : vector<272x48xf32> to vector<1x272x48xf32>
    tpu.vector_store %arg4[%c0_52, %c0_53, %c0_54], %65 {strides = array<i32>} : memref<1x272x48xf32, #tpu.memory_space<vmem>>, vector<1x272x48xf32>,
    return
  }
  func.func @transform_0(%arg0: i32) -> (i32, i32, i32) {
    %c0_i32 = arith.constant 0 : i32
    %c0_i32_0 = arith.constant 0 : i32
    %c0_i32_1 = arith.constant 0 : i32
    return %arg0, %c0_i32, %c0_i32_0 : i32, i32, i32
  }
  func.func @transform_1(%arg0: i32) -> (i32, i32, i32) {
    %c0_i32 = arith.constant 0 : i32
    %c0_i32_0 = arith.constant 0 : i32
    %c0_i32_1 = arith.constant 0 : i32
    %c0_i32_2 = arith.constant 0 : i32
    return %c0_i32, %c0_i32_0, %c0_i32_1 : i32, i32, i32
  }
  func.func @transform_2(%arg0: i32) -> (i32, i32) {
    %c0_i32 = arith.constant 0 : i32
    %c0_i32_0 = arith.constant 0 : i32
    %c0_i32_1 = arith.constant 0 : i32
    return %c0_i32, %c0_i32_0 : i32, i32
  }
  func.func @transform_3(%arg0: i32) -> (i32, i32, i32) {
    %c0_i32 = arith.constant 0 : i32
    %c0_i32_0 = arith.constant 0 : i32
    %c0_i32_1 = arith.constant 0 : i32
    return %arg0, %c0_i32, %c0_i32_0 : i32, i32, i32
  }
}

</mosaic_0001>

<llo_original>
// kernel: tpu_custom_call.1
$region0: #{tpu_custom_call.1}
  #allocation0 [shape = 'u32[]', space=smem, size = 0x4, offset = 0x4, fixed_abs, tag = 'smem constant byte address 0x4 - core index']
  #allocation1 [shape = 'u32[144,128]{1,0:T(1,128)}', space=vmem, size = 0x12000, scoped, tag = 'internal scratch']
  %s0 = inlined_call_operand.vmem [shape: f32[8,374,48], index: 0, kind: input, shape index: {}]
  %s1 = inlined_call_operand.vmem [shape: f32[9,48,48], index: 1, kind: input, shape index: {}]
  %s2 = inlined_call_operand.vmem [shape: f32[1,48], index: 2, kind: input, shape index: {}]
  %s3 = inlined_call_operand.vmem [shape: f32[8,272,48], index: 3, kind: output, shape index: {}]
  %s4 = sld [smem:[#allocation0]]
  $region45: #{tpu_custom_call.1} parent=0
    _
  %s6 = ssub.s32 1, %s4
  %s7 = scalar_select 0, %s6, %s4
  loop: start=0, step=1, limit=10
  $region2: #{tpu_custom_call.1} parent=0 // loop_pre_header
    _
  $region3: #{tpu_custom_call.1} parent=0 // loop_header
    %s9 = sphi 0, %s13
    %p10 = scmp.ge.s32.totalorder %s9, 10
    %s19 = sphi 0, %s21
    %s22 = sphi 0, %s19
    %s23 = sphi 0, %s22
    %s39 = sphi 0, %s23
    %s43 = sphi 0, %s43
    %s45 = sphi 0, %s43
    %s46 = sphi 0, %s45
    %s60 = sphi 0, %s46
    %s64 = sphi 0, %s64
    %s66 = sphi 0, %s64
    %s67 = sphi 0, %s66
    %s81 = sphi 0, %s67
    %s87 = sphi 0, %s89
    %s90 = sphi 0, %s87
    %s91 = sphi 0, %s90
    %s107 = sphi 0, %s91
  $region4: #{tpu_custom_call.1} parent=0 // loop_header_branch
    %12 = sbr.rel (%p10) target = $region8
  $region5: #{tpu_custom_call.1} parent=0 // loop_body
    %s14 = ssub.s32 %s9, 1
    %s15 = ssub.s32 %s9, 2
    %s16 = sadd.s32 %s9, 1
    %s17 = ssub.s32 %s9, %s16
    %p18 = scmp.eq.s32.totalorder %s17, 0
    %s20 = sadd.s32 %s19, 1
    %s21 = scalar_select %p18, %s19, %s20
    %p24 = pneg %p18
    %p25 = scmp.eq.s32.totalorder %s9, 7
    %p26 = por %p24, %p25
    %p27 = scmp.ne.s32.totalorder %s19, %s22
    %p28 = scmp.eq.s32.totalorder %s9, 0
    %p29 = por %p27, %p28
    %p30 = scmp.ne.s32.totalorder %s19, %s22
    %p31 = scmp.eq.s32.totalorder %s14, 7
    %p32 = por %p30, %p31
    %p33 = scmp.ne.s32.totalorder %s22, %s23
    %p34 = scmp.eq.s32.totalorder %s14, 0
    %p35 = por %p33, %p34
    %p36 = scmp.ne.s32.totalorder %s22, %s23
    %p37 = scmp.eq.s32.totalorder %s15, 7
    %p38 = por %p36, %p37
    %p40 = scmp.ne.s32.totalorder %s23, %s39
    %p41 = scmp.eq.s32.totalorder %s15, 0
    %p42 = por %p40, %p41
    %s44 = sadd.s32 %s43, 1
    %p47 = scmp.eq.s32.totalorder %s9, 7
    %p48 = scmp.ne.s32.totalorder %s43, %s45
    %p49 = scmp.eq.s32.totalorder %s9, 0
    %p50 = por %p48, %p49
    %p51 = scmp.ne.s32.totalorder %s43, %s45
    %p52 = scmp.eq.s32.totalorder %s14, 7
    %p53 = por %p51, %p52
    %p54 = scmp.ne.s32.totalorder %s45, %s46
    %p55 = scmp.eq.s32.totalorder %s14, 0
    %p56 = por %p54, %p55
    %p57 = scmp.ne.s32.totalorder %s45, %s46
    %p58 = scmp.eq.s32.totalorder %s15, 7
    %p59 = por %p57, %p58
    %p61 = scmp.ne.s32.totalorder %s46, %s60
    %p62 = scmp.eq.s32.totalorder %s15, 0
    %p63 = por %p61, %p62
    %s65 = sadd.s32 %s64, 1
    %p68 = scmp.eq.s32.totalorder %s9, 7
    %p69 = scmp.ne.s32.totalorder %s64, %s66
    %p70 = scmp.eq.s32.totalorder %s9, 0
    %p71 = por %p69, %p70
    %p72 = scmp.ne.s32.totalorder %s64, %s66
    %p73 = scmp.eq.s32.totalorder %s14, 7
    %p74 = por %p72, %p73
    %p75 = scmp.ne.s32.totalorder %s66, %s67
    %p76 = scmp.eq.s32.totalorder %s14, 0
    %p77 = por %p75, %p76
    %p78 = scmp.ne.s32.totalorder %s66, %s67
    %p79 = scmp.eq.s32.totalorder %s15, 7
    %p80 = por %p78, %p79
    %p82 = scmp.ne.s32.totalorder %s67, %s81
    %p83 = scmp.eq.s32.totalorder %s15, 0
    %p84 = por %p82, %p83
    %s85 = ssub.s32 %s9, %s16
    %p86 = scmp.eq.s32.totalorder %s85, 0
    %s88 = sadd.s32 %s87, 1
    %s89 = scalar_select %p86, %s87, %s88
    %p92 = pneg %p86
    %p93 = scmp.eq.s32.totalorder %s9, 7
    %p94 = por %p92, %p93
    %p95 = scmp.ne.s32.totalorder %s87, %s90
    %p96 = scmp.eq.s32.totalorder %s9, 0
    %p97 = por %p95, %p96
    %p98 = scmp.ne.s32.totalorder %s87, %s90
    %p99 = scmp.eq.s32.totalorder %s14, 7
    %p100 = por %p98, %p99
    %p101 = scmp.ne.s32.totalorder %s90, %s91
    %p102 = scmp.eq.s32.totalorder %s14, 0
    %p103 = por %p101, %p102
    %p104 = scmp.ne.s32.totalorder %s90, %s91
    %p105 = scmp.eq.s32.totalorder %s15, 7
    %p106 = por %p104, %p105
    %p108 = scmp.ne.s32.totalorder %s91, %s107
    %p109 = scmp.eq.s32.totalorder %s15, 0
    %p110 = por %p108, %p109
    %p111 = scmp.le.s32.totalorder 1, %s9
    %p112 = scmp.lt.s32.totalorder %s9, 9
    %p113 = pnand %p111, %p112
    %p114 = pneg %p113
    // Predicated region
    $region9: #{tpu_custom_call.1} parent=5 // pred_check
      _
    $region10: #{tpu_custom_call.1} parent=5 // pred_check_branch
      %116 = sbr.rel (%p113) target = $region12
    $region11: #{tpu_custom_call.1} parent=5 // pred_region
      %s117 = ssub.s32 %s9, 1
      // Predicated region
      $region13: #{tpu_custom_call.1} parent=11 // pred_check
        %p118 = pneg %p56
      $region14: #{tpu_custom_call.1} parent=11 // pred_check_branch
        %120 = sbr.rel (%p118) target = $region16
      $region15: #{tpu_custom_call.1} parent=11 // pred_region
        _
      $region16: #{tpu_custom_call.1} parent=11 // pred_fallthru
        _
      // Predicated region
      $region17: #{tpu_custom_call.1} parent=11 // pred_check
        %p121 = pneg %p77
      $region18: #{tpu_custom_call.1} parent=11 // pred_check_branch
        %123 = sbr.rel (%p121) target = $region20
      $region19: #{tpu_custom_call.1} parent=11 // pred_region
        _
      $region20: #{tpu_custom_call.1} parent=11 // pred_fallthru
        _
    $region12: #{tpu_custom_call.1} parent=5 // pred_fallthru
      _
    %p124 = scmp.lt.s32.totalorder %s9, 8
    // Predicated region
    $region21: #{tpu_custom_call.1} parent=5 // pred_check
      %p125 = pneg %p124
    $region22: #{tpu_custom_call.1} parent=5 // pred_check_branch
      %127 = sbr.rel (%p125) target = $region24
    $region23: #{tpu_custom_call.1} parent=5 // pred_region
      // Predicated region
      $region25: #{tpu_custom_call.1} parent=23 // pred_check
        %p128 = pneg %p29
      $region26: #{tpu_custom_call.1} parent=23 // pred_check_branch
        %130 = sbr.rel (%p128) target = $region28
      $region27: #{tpu_custom_call.1} parent=23 // pred_region
        %p131 = scmp.lt.s32.totalorder %s9, 7
        %s132 = scalar_select %p131, %s9, 7
        %s133 = smul.addr %s132, 47
        %s134 = smul.addr %s133, 8
        %s135 = scalar_lea.vmem %s0, %s134
      $region28: #{tpu_custom_call.1} parent=23 // pred_fallthru
        _
    $region24: #{tpu_custom_call.1} parent=5 // pred_fallthru
      _
    %p136 = scmp.le.s32.totalorder 1, %s9
    %p137 = scmp.lt.s32.totalorder %s9, 9
    %p138 = pnand %p136, %p137
    %p139 = pneg %p138
    // Predicated region
    $region29: #{tpu_custom_call.1} parent=5 // pred_check
      _
    $region30: #{tpu_custom_call.1} parent=5 // pred_check_branch
      %141 = sbr.rel (%p138) target = $region32
    $region31: #{tpu_custom_call.1} parent=5 // pred_region
      %s142 = ssub.s32 %s9, 1
      %p143 = scmp.lt.s32.totalorder %s14, 7
      %s144 = scalar_select %p143, %s14, 7
      %s145 = smul.addr %s144, 47
      %s146 = smul.addr %s145, 8
      %s147 = scalar_lea.vmem %s0, %s146
      %p148 = pneg %p35
      %p149 = pneg %p32
      %p150 = pneg %p56
      %p151 = pneg %p53
      %p152 = pneg %p77
      %p153 = pneg %p74
      %p154 = pneg %p103
      %p155 = pneg %p100
      %p156 = scmp.lt.s32.totalorder %s14, 7
      %s157 = scalar_select %p156, %s14, 7
      %s158 = smul.addr %s157, 34
      %s159 = smul.addr %s158, 8
      %s160 = scalar_lea.vmem %s3, %s159
      %p161 = scmp.lt.s32.totalorder %s14, 7
      %s162 = scalar_select %p161, %s14, 7
      %s163 = smul.addr %s162, 47
      %s164 = smul.addr %s163, 8
      %s165 = scalar_lea.vmem %s0, %s164
      %p166 = scmp.lt.s32.totalorder %s14, 7
      %s167 = scalar_select %p166, %s14, 7
      %s168 = smul.addr %s167, 34
      %s169 = smul.addr %s168, 8
      %s170 = scalar_lea.vmem %s3, %s169
      %v171 = vld [vmem:[%s165] sm:$0xff]
      %v172 = vld [vmem:[%s165 + $0x8] sm:$0xff]
      %v173 = vld [vmem:[%s165 + $0x10] sm:$0xff]
      %v174 = vld [vmem:[%s165 + $0x18] sm:$0xff]
      %v175 = vld [vmem:[%s165 + $0x20] sm:$0xff]
      %v176 = vld [vmem:[%s165 + $0x28] sm:$0xff]
      %v177 = vld [vmem:[%s165 + $0x30] sm:$0xff]
      %v178 = vld [vmem:[%s165 + $0x38] sm:$0xff]
      %v179 = vld [vmem:[%s165 + $0x40] sm:$0xff]
      %v180 = vld [vmem:[%s165 + $0x48] sm:$0xff]
      %v181 = vld [vmem:[%s165 + $0x50] sm:$0xff]
      %v182 = vld [vmem:[%s165 + $0x58] sm:$0xff]
      %v183 = vld [vmem:[%s165 + $0x60] sm:$0xff]
      %v184 = vld [vmem:[%s165 + $0x68] sm:$0xff]
      %v185 = vld [vmem:[%s165 + $0x70] sm:$0xff]
      %v186 = vld [vmem:[%s165 + $0x78] sm:$0xff]
      %v187 = vld [vmem:[%s165 + $0x80] sm:$0xff]
      %v188 = vld [vmem:[%s165 + $0x88] sm:$0xff]
      %v189 = vld [vmem:[%s165 + $0x90] sm:$0xff]
      %v190 = vld [vmem:[%s165 + $0x98] sm:$0xff]
      %v191 = vld [vmem:[%s165 + $0xa0] sm:$0xff]
      %v192 = vld [vmem:[%s165 + $0xa8] sm:$0xff]
      %v193 = vld [vmem:[%s165 + $0xb0] sm:$0xff]
      %v194 = vld [vmem:[%s165 + $0xb8] sm:$0xff]
      %v195 = vld [vmem:[%s165 + $0xc0] sm:$0xff]
      %v196 = vld [vmem:[%s165 + $0xc8] sm:$0xff]
      %v197 = vld [vmem:[%s165 + $0xd0] sm:$0xff]
      %v198 = vld [vmem:[%s165 + $0xd8] sm:$0xff]
      %v199 = vld [vmem:[%s165 + $0xe0] sm:$0xff]
      %v200 = vld [vmem:[%s165 + $0xe8] sm:$0xff]
      %v201 = vld [vmem:[%s165 + $0xf0] sm:$0xff]
      %v202 = vld [vmem:[%s165 + $0xf8] sm:$0xff]
      %v203 = vld [vmem:[%s165 + $0x100] sm:$0xff]
      %v204 = vld [vmem:[%s165 + $0x108] sm:$0xff]
      %v205 = vld [vmem:[%s1] sm:$0xff]
      %v206 = vld [vmem:[%s1 + $0x8] sm:$0xff]
      %v207 = vld [vmem:[%s1 + $0x10] sm:$0xff]
      %v208 = vld [vmem:[%s1 + $0x18] sm:$0xff]
      %v209 = vld [vmem:[%s1 + $0x20] sm:$0xff]
      %v210 = vld [vmem:[%s1 + $0x28] sm:$0xff]
      %v211 = vld [vmem:[%s165 + $0x1] sm:$0xff]
      %v212 = vld [vmem:[%s165 + $0x9] sm:$0xff]
      %v213 = vld [vmem:[%s165 + $0x11] sm:$0xff]
      %v214 = vld [vmem:[%s165 + $0x19] sm:$0xff]
      %v215 = vld [vmem:[%s165 + $0x21] sm:$0xff]
      %v216 = vld [vmem:[%s165 + $0x29] sm:$0xff]
      %v217 = vld [vmem:[%s165 + $0x31] sm:$0xff]
      %v218 = vld [vmem:[%s165 + $0x39] sm:$0xff]
      %v219 = vld [vmem:[%s165 + $0x41] sm:$0xff]
      %v220 = vld [vmem:[%s165 + $0x49] sm:$0xff]
      %v221 = vld [vmem:[%s165 + $0x51] sm:$0xff]
      %v222 = vld [vmem:[%s165 + $0x59] sm:$0xff]
      %v223 = vld [vmem:[%s165 + $0x61] sm:$0xff]
      %v224 = vld [vmem:[%s165 + $0x69] sm:$0xff]
      %v225 = vld [vmem:[%s165 + $0x71] sm:$0xff]
      %v226 = vld [vmem:[%s165 + $0x79] sm:$0xff]
      %v227 = vld [vmem:[%s165 + $0x81] sm:$0xff]
      %v228 = vld [vmem:[%s165 + $0x89] sm:$0xff]
      %v229 = vld [vmem:[%s165 + $0x91] sm:$0xff]
      %v230 = vld [vmem:[%s165 + $0x99] sm:$0xff]
      %v231 = vld [vmem:[%s165 + $0xa1] sm:$0xff]
      %v232 = vld [vmem:[%s165 + $0xa9] sm:$0xff]
      %v233 = vld [vmem:[%s165 + $0xb1] sm:$0xff]
      %v234 = vld [vmem:[%s165 + $0xb9] sm:$0xff]
      %v235 = vld [vmem:[%s165 + $0xc1] sm:$0xff]
      %v236 = vld [vmem:[%s165 + $0xc9] sm:$0xff]
      %v237 = vld [vmem:[%s165 + $0xd1] sm:$0xff]
      %v238 = vld [vmem:[%s165 + $0xd9] sm:$0xff]
      %v239 = vld [vmem:[%s165 + $0xe1] sm:$0xff]
      %v240 = vld [vmem:[%s165 + $0xe9] sm:$0xff]
      %v241 = vld [vmem:[%s165 + $0xf1] sm:$0xff]
      %v242 = vld [vmem:[%s165 + $0xf9] sm:$0xff]
      %v243 = vld [vmem:[%s165 + $0x101] sm:$0xff]
      %v244 = vld [vmem:[%s165 + $0x109] sm:$0xff]
      %s245 = scalar_lea.vmem %s1, 48
      %v246 = vld [vmem:[%s245] sm:$0xff]
      %v247 = vld [vmem:[%s245 + $0x8] sm:$0xff]
      %v248 = vld [vmem:[%s245 + $0x10] sm:$0xff]
      %v249 = vld [vmem:[%s245 + $0x18] sm:$0xff]
      %v250 = vld [vmem:[%s245 + $0x20] sm:$0xff]
      %v251 = vld [vmem:[%s245 + $0x28] sm:$0xff]
      %vm252 = vcmask 392192
      %v254 = vsel %vm252, %v211, 0
      %v257 = vsel %vm252, %v212, 0
      %v260 = vsel %vm252, %v213, 0
      %v263 = vsel %vm252, %v214, 0
      %v266 = vsel %vm252, %v215, 0
      %v269 = vsel %vm252, %v216, 0
      %v272 = vsel %vm252, %v217, 0
      %v275 = vsel %vm252, %v218, 0
      %v278 = vsel %vm252, %v219, 0
      %v281 = vsel %vm252, %v220, 0
      %v284 = vsel %vm252, %v221, 0
      %v287 = vsel %vm252, %v222, 0
      %v290 = vsel %vm252, %v223, 0
      %v293 = vsel %vm252, %v224, 0
      %v296 = vsel %vm252, %v225, 0
      %v299 = vsel %vm252, %v226, 0
      %v302 = vsel %vm252, %v227, 0
      %v305 = vsel %vm252, %v228, 0
      %v308 = vsel %vm252, %v229, 0
      %v311 = vsel %vm252, %v230, 0
      %v314 = vsel %vm252, %v231, 0
      %v317 = vsel %vm252, %v232, 0
      %v320 = vsel %vm252, %v233, 0
      %v323 = vsel %vm252, %v234, 0
      %v326 = vsel %vm252, %v235, 0
      %v329 = vsel %vm252, %v236, 0
      %v332 = vsel %vm252, %v237, 0
      %v335 = vsel %vm252, %v238, 0
      %v338 = vsel %vm252, %v239, 0
      %v341 = vsel %vm252, %v240, 0
      %v344 = vsel %vm252, %v241, 0
      %v347 = vsel %vm252, %v242, 0
      %v350 = vsel %vm252, %v243, 0
      %v353 = vsel %vm252, %v244, 0
      %355 = vmatprep.subr.mxu0 0.0
      %356 = vmatpush1.msra.mxu0 %v246
      %357 = vmatprep.subr.mxu0 0.0
      %358 = vmatpush1.msra.mxu0 %v247
      %359 = vmatprep.subr.mxu0 0.0
      %360 = vmatpush1.msra.mxu0 %v248
      %361 = vmatprep.subr.mxu0 0.0
      %362 = vmatpush1.msra.mxu0 %v249
      %363 = vmatprep.subr.mxu0 0.0
      %364 = vmatpush1.msra.mxu0 %v250
      %365 = vmatprep.subr.mxu0 0.0
      %366 = vmatpush1.msra.mxu0 %v251
      %367 = vmatprep.subr.mxu0 0.0
      %368 = vmatpush1.msra.mxu0 0.0
      %369 = vmatprep.subr.mxu0 0.0
      %370 = vmatpush1.msra.mxu0 0.0
      %371 = vmatprep.subr.mxu0 0.0
      %372 = vmatpush1.msra.mxu0 0.0
      %373 = vmatprep.subr.mxu0 0.0
      %374 = vmatpush1.msra.mxu0 0.0
      %375 = vmatprep.subr.mxu0 0.0
      %376 = vmatpush1.msra.mxu0 0.0
      %377 = vmatprep.subr.mxu0 0.0
      %378 = vmatpush1.msra.mxu0 0.0
      %379 = vmatprep.subr.mxu0 0.0
      %380 = vmatpush1.msra.mxu0 0.0
      %381 = vmatprep.subr.mxu0 0.0
      %382 = vmatpush1.msra.mxu0 0.0
      %383 = vmatprep.subr.mxu0 0.0
      %384 = vmatpush1.msra.mxu0 0.0
      %385 = vmatprep.subr.mxu0 0.0
      %386 = vmatpush1.msra.mxu0 0.0
      %387 = vmatprep.subr.mxu0 0.0
      %388 = vmatpush1.msra.mxu0 0.0
      %389 = vmatprep.subr.mxu0 0.0
      %390 = vmatpush1.msra.mxu0 0.0
      %391 = vmatprep.subr.mxu0 0.0
      %392 = vmatpush1.msra.mxu0 0.0
      %393 = vmatprep.subr.mxu0 0.0
      %394 = vmatpush1.msra.mxu0 0.0
      %395 = vmatprep.subr.mxu0 0.0
      %396 = vmatpush1.msra.mxu0 0.0
      %397 = vmatprep.subr.mxu0 0.0
      %398 = vmatpush1.msra.mxu0 0.0
      %399 = vmatprep.subr.mxu0 0.0
      %400 = vmatpush1.msra.mxu0 0.0
      %401 = vmatprep.subr.mxu0 0.0
      %402 = vmatpush1.msra.mxu0 0.0
      %403 = vmatprep.subr.mxu0 0.0
      %404 = vmatpush1.msra.mxu0 0.0
      %405 = vmatprep.subr.mxu0 0.0
      %406 = vmatpush1.msra.mxu0 0.0
      %407 = vmatprep.subr.mxu0 0.0
      %408 = vmatpush1.msra.mxu0 0.0
      %409 = vmatprep.subr.mxu0 0.0
      %410 = vmatpush1.msra.mxu0 0.0
      %411 = vmatprep.subr.mxu0 0.0
      %412 = vmatpush1.msra.mxu0 0.0
      %413 = vmatprep.subr.mxu0 0.0
      %414 = vmatpush1.msra.mxu0 0.0
      %415 = vmatprep.subr.mxu0 0.0
      %416 = vmatpush1.msra.mxu0 0.0
      %417 = vmatprep.subr.mxu0 0.0
      %418 = vmatpush1.msra.mxu0 0.0
      %419 = vmatprep.mubr.f32.mxu0 0.0
      %420 = vmatmul.mubr.f32.gmra.mrb[0].mxu0 %v254
      %v421 = vpop.f32.mrb[0].mxu0
      %v422 = vadd.f32 0.0, %v421
      %v423 = vpop.f32.mrb[0].mxu0
      %424 = vmatprep.mubr.f32.mxu0 0.0
      %425 = vmatmul.mubr.f32.gmra.mrb[0].mxu0 %v257
      %v426 = vpop.f32.mrb[0].mxu0
      %v427 = vadd.f32 0.0, %v426
      %v428 = vpop.f32.mrb[0].mxu0
      %429 = vmatprep.mubr.f32.mxu0 0.0
      %430 = vmatmul.mubr.f32.gmra.mrb[0].mxu0 %v260
      %v431 = vpop.f32.mrb[0].mxu0
      %v432 = vadd.f32 0.0, %v431
      %v433 = vpop.f32.mrb[0].mxu0
      %434 = vmatprep.mubr.f32.mxu0 0.0
      %435 = vmatmul.mubr.f32.gmra.mrb[0].mxu0 %v263
      %v436 = vpop.f32.mrb[0].mxu0
      %v437 = vadd.f32 0.0, %v436
      %v438 = vpop.f32.mrb[0].mxu0
      %439 = vmatprep.mubr.f32.mxu0 0.0
      %440 = vmatmul.mubr.f32.gmra.mrb[0].mxu0 %v266
      %v441 = vpop.f32.mrb[0].mxu0
      %v442 = vadd.f32 0.0, %v441
      %v443 = vpop.f32.mrb[0].mxu0
      %444 = vmatprep.mubr.f32.mxu0 0.0
      %445 = vmatmul.mubr.f32.gmra.mrb[0].mxu0 %v269
      %v446 = vpop.f32.mrb[0].mxu0
      %v447 = vadd.f32 0.0, %v446
      %v448 = vpop.f32.mrb[0].mxu0
      %449 = vmatprep.mubr.f32.mxu0 0.0
      %450 = vmatmul.mubr.f32.gmra.mrb[0].mxu0 %v272
      %v451 = vpop.f32.mrb[0].mxu0
      %v452 = vadd.f32 0.0, %v451
      %v453 = vpop.f32.mrb[0].mxu0
      %454 = vmatprep.mubr.f32.mxu0 0.0
      %455 = vmatmul.mubr.f32.gmra.mrb[0].mxu0 %v275
      %v456 = vpop.f32.mrb[0].mxu0
      %v457 = vadd.f32 0.0, %v456
      %v458 = vpop.f32.mrb[0].mxu0
      %459 = vmatprep.mubr.f32.mxu0 0.0
      %460 = vmatmul.mubr.f32.gmra.mrb[0].mxu0 %v278
      %v461 = vpop.f32.mrb[0].mxu0
      %v462 = vadd.f32 0.0, %v461
      %v463 = vpop.f32.mrb[0].mxu0
      %464 = vmatprep.mubr.f32.mxu0 0.0
      %465 = vmatmul.mubr.f32.gmra.mrb[0].mxu0 %v281
      %v466 = vpop.f32.mrb[0].mxu0
      %v467 = vadd.f32 0.0, %v466
      %v468 = vpop.f32.mrb[0].mxu0
      %469 = vmatprep.mubr.f32.mxu0 0.0
      %470 = vmatmul.mubr.f32.gmra.mrb[0].mxu0 %v284
      %v471 = vpop.f32.mrb[0].mxu0
      %v472 = vadd.f32 0.0, %v471
      %v473 = vpop.f32.mrb[0].mxu0
      %474 = vmatprep.mubr.f32.mxu0 0.0
      %475 = vmatmul.mubr.f32.gmra.mrb[0].mxu0 %v287
      %v476 = vpop.f32.mrb[0].mxu0
      %v477 = vadd.f32 0.0, %v476
      %v478 = vpop.f32.mrb[0].mxu0
      %479 = vmatprep.mubr.f32.mxu0 0.0
      %480 = vmatmul.mubr.f32.gmra.mrb[0].mxu0 %v290
      %v481 = vpop.f32.mrb[0].mxu0
      %v482 = vadd.f32 0.0, %v481
      %v483 = vpop.f32.mrb[0].mxu0
      %484 = vmatprep.mubr.f32.mxu0 0.0
      %485 = vmatmul.mubr.f32.gmra.mrb[0].mxu0 %v293
      %v486 = vpop.f32.mrb[0].mxu0
      %v487 = vadd.f32 0.0, %v486
      %v488 = vpop.f32.mrb[0].mxu0
      %489 = vmatprep.mubr.f32.mxu0 0.0
      %490 = vmatmul.mubr.f32.gmra.mrb[0].mxu0 %v296
      %v491 = vpop.f32.mrb[0].mxu0
      %v492 = vadd.f32 0.0, %v491
      %v493 = vpop.f32.mrb[0].mxu0
      %494 = vmatprep.mubr.f32.mxu0 0.0
      %495 = vmatmul.mubr.f32.gmra.mrb[0].mxu0 %v299
      %v496 = vpop.f32.mrb[0].mxu0
      %v497 = vadd.f32 0.0, %v496
      %v498 = vpop.f32.mrb[0].mxu0
      %499 = vmatprep.mubr.f32.mxu0 0.0
      %500 = vmatmul.mubr.f32.gmra.mrb[0].mxu0 %v302
      %v501 = vpop.f32.mrb[0].mxu0
      %v502 = vadd.f32 0.0, %v501
      %v503 = vpop.f32.mrb[0].mxu0
      %504 = vmatprep.mubr.f32.mxu0 0.0
      %505 = vmatmul.mubr.f32.gmra.mrb[0].mxu0 %v305
      %v506 = vpop.f32.mrb[0].mxu0
      %v507 = vadd.f32 0.0, %v506
      %v508 = vpop.f32.mrb[0].mxu0
      %509 = vmatprep.mubr.f32.mxu0 0.0
      %510 = vmatmul.mubr.f32.gmra.mrb[0].mxu0 %v308
      %v511 = vpop.f32.mrb[0].mxu0
      %v512 = vadd.f32 0.0, %v511
      %v513 = vpop.f32.mrb[0].mxu0
      %514 = vmatprep.mubr.f32.mxu0 0.0
      %515 = vmatmul.mubr.f32.gmra.mrb[0].mxu0 %v311
      %v516 = vpop.f32.mrb[0].mxu0
      %v517 = vadd.f32 0.0, %v516
      %v518 = vpop.f32.mrb[0].mxu0
      %519 = vmatprep.mubr.f32.mxu0 0.0
      %520 = vmatmul.mubr.f32.gmra.mrb[0].mxu0 %v314
      %v521 = vpop.f32.mrb[0].mxu0
      %v522 = vadd.f32 0.0, %v521
      %v523 = vpop.f32.mrb[0].mxu0
      %524 = vmatprep.mubr.f32.mxu0 0.0
      %525 = vmatmul.mubr.f32.gmra.mrb[0].mxu0 %v317
      %v526 = vpop.f32.mrb[0].mxu0
      %v527 = vadd.f32 0.0, %v526
      %v528 = vpop.f32.mrb[0].mxu0
      %529 = vmatprep.mubr.f32.mxu0 0.0
      %530 = vmatmul.mubr.f32.gmra.mrb[0].mxu0 %v320
      %v531 = vpop.f32.mrb[0].mxu0
      %v532 = vadd.f32 0.0, %v531
      %v533 = vpop.f32.mrb[0].mxu0
      %534 = vmatprep.mubr.f32.mxu0 0.0
      %535 = vmatmul.mubr.f32.gmra.mrb[0].mxu0 %v323
      %v536 = vpop.f32.mrb[0].mxu0
      %v537 = vadd.f32 0.0, %v536
      %v538 = vpop.f32.mrb[0].mxu0
      %539 = vmatprep.mubr.f32.mxu0 0.0
      %540 = vmatmul.mubr.f32.gmra.mrb[0].mxu0 %v326
      %v541 = vpop.f32.mrb[0].mxu0
      %v542 = vadd.f32 0.0, %v541
      %v543 = vpop.f32.mrb[0].mxu0
      %544 = vmatprep.mubr.f32.mxu0 0.0
      %545 = vmatmul.mubr.f32.gmra.mrb[0].mxu0 %v329
      %v546 = vpop.f32.mrb[0].mxu0
      %v547 = vadd.f32 0.0, %v546
      %v548 = vpop.f32.mrb[0].mxu0
      %549 = vmatprep.mubr.f32.mxu0 0.0
      %550 = vmatmul.mubr.f32.gmra.mrb[0].mxu0 %v332
      %v551 = vpop.f32.mrb[0].mxu0
      %v552 = vadd.f32 0.0, %v551
      %v553 = vpop.f32.mrb[0].mxu0
      %554 = vmatprep.mubr.f32.mxu0 0.0
      %555 = vmatmul.mubr.f32.gmra.mrb[0].mxu0 %v335
      %v556 = vpop.f32.mrb[0].mxu0
      %v557 = vadd.f32 0.0, %v556
      %v558 = vpop.f32.mrb[0].mxu0
      %559 = vmatprep.mubr.f32.mxu0 0.0
      %560 = vmatmul.mubr.f32.gmra.mrb[0].mxu0 %v338
      %v561 = vpop.f32.mrb[0].mxu0
      %v562 = vadd.f32 0.0, %v561
      %v563 = vpop.f32.mrb[0].mxu0
      %564 = vmatprep.mubr.f32.mxu0 0.0
      %565 = vmatmul.mubr.f32.gmra.mrb[0].mxu0 %v341
      %v566 = vpop.f32.mrb[0].mxu0
      %v567 = vadd.f32 0.0, %v566
      %v568 = vpop.f32.mrb[0].mxu0
      %569 = vmatprep.mubr.f32.mxu0 0.0
      %570 = vmatmul.mubr.f32.gmra.mrb[0].mxu0 %v344
      %v571 = vpop.f32.mrb[0].mxu0
      %v572 = vadd.f32 0.0, %v571
      %v573 = vpop.f32.mrb[0].mxu0
      %574 = vmatprep.mubr.f32.mxu0 0.0
      %575 = vmatmul.mubr.f32.gmra.mrb[0].mxu0 %v347
      %v576 = vpop.f32.mrb[0].mxu0
      %v577 = vadd.f32 0.0, %v576
      %v578 = vpop.f32.mrb[0].mxu0
      %579 = vmatprep.mubr.f32.mxu0 0.0
      %580 = vmatmul.mubr.f32.gmra.mrb[0].mxu0 %v350
      %v581 = vpop.f32.mrb[0].mxu0
      %v582 = vadd.f32 0.0, %v581
      %v583 = vpop.f32.mrb[0].mxu0
      %584 = vmatprep.mubr.f32.mxu0 0.0
      %585 = vmatmul.mubr.f32.gmra.mrb[0].mxu0 %v353
      %v586 = vpop.f32.mrb[0].mxu0
      %v587 = vadd.f32 0.0, %v586
      %v588 = vpop.f32.mrb[0].mxu0
      %589 = vdwg.mxu0
      %v591 = vsel %vm252, %v171, 0
      %v594 = vsel %vm252, %v172, 0
      %v597 = vsel %vm252, %v173, 0
      %v600 = vsel %vm252, %v174, 0
      %v603 = vsel %vm252, %v175, 0
      %v606 = vsel %vm252, %v176, 0
      %v609 = vsel %vm252, %v177, 0
      %v612 = vsel %vm252, %v178, 0
      %v615 = vsel %vm252, %v179, 0
      %v618 = vsel %vm252, %v180, 0
      %v621 = vsel %vm252, %v181, 0
      %v624 = vsel %vm252, %v182, 0
      %v627 = vsel %vm252, %v183, 0
      %v630 = vsel %vm252, %v184, 0
      %v633 = vsel %vm252, %v185, 0
      %v636 = vsel %vm252, %v186, 0
      %v639 = vsel %vm252, %v187, 0
      %v642 = vsel %vm252, %v188, 0
      %v645 = vsel %vm252, %v189, 0
      %v648 = vsel %vm252, %v190, 0
      %v651 = vsel %vm252, %v191, 0
      %v654 = vsel %vm252, %v192, 0
      %v657 = vsel %vm252, %v193, 0
      %v660 = vsel %vm252, %v194, 0
      %v663 = vsel %vm252, %v195, 0
      %v666 = vsel %vm252, %v196, 0
      %v669 = vsel %vm252, %v197, 0
      %v672 = vsel %vm252, %v198, 0
      %v675 = vsel %vm252, %v199, 0
      %v678 = vsel %vm252, %v200, 0
      %v681 = vsel %vm252, %v201, 0
      %v684 = vsel %vm252, %v202, 0
      %v687 = vsel %vm252, %v203, 0
      %v690 = vsel %vm252, %v204, 0
      %692 = vmatprep.subr.mxu0 0.0
      %693 = vmatpush1.msra.mxu0 %v205
      %694 = vmatprep.subr.mxu0 0.0
      %695 = vmatpush1.msra.mxu0 %v206
      %696 = vmatprep.subr.mxu0 0.0
      %697 = vmatpush1.msra.mxu0 %v207
      %698 = vmatprep.subr.mxu0 0.0
      %699 = vmatpush1.msra.mxu0 %v208
      %700 = vmatprep.subr.mxu0 0.0
      %701 = vmatpush1.msra.mxu0 %v209
      %702 = vmatprep.subr.mxu0 0.0
      %703 = vmatpush1.msra.mxu0 %v210
      %704 = vmatprep.subr.mxu0 0.0
      %705 = vmatpush1.msra.mxu0 0.0
      %706 = vmatprep.subr.mxu0 0.0
      %707 = vmatpush1.msra.mxu0 0.0
      %708 = vmatprep.subr.mxu0 0.0
      %709 = vmatpush1.msra.mxu0 0.0
      %710 = vmatprep.subr.mxu0 0.0
      %711 = vmatpush1.msra.mxu0 0.0
      %712 = vmatprep.subr.mxu0 0.0
      %713 = vmatpush1.msra.mxu0 0.0
      %714 = vmatprep.subr.mxu0 0.0
      %715 = vmatpush1.msra.mxu0 0.0
      %716 = vmatprep.subr.mxu0 0.0
      %717 = vmatpush1.msra.mxu0 0.0
      %718 = vmatprep.subr.mxu0 0.0
      %719 = vmatpush1.msra.mxu0 0.0
      %720 = vmatprep.subr.mxu0 0.0
      %721 = vmatpush1.msra.mxu0 0.0
      %722 = vmatprep.subr.mxu0 0.0
      %723 = vmatpush1.msra.mxu0 0.0
      %724 = vmatprep.subr.mxu0 0.0
      %725 = vmatpush1.msra.mxu0 0.0
      %726 = vmatprep.subr.mxu0 0.0
      %727 = vmatpush1.msra.mxu0 0.0
      %728 = vmatprep.subr.mxu0 0.0
      %729 = vmatpush1.msra.mxu0 0.0
      %730 = vmatprep.subr.mxu0 0.0
      %731 = vmatpush1.msra.mxu0 0.0
      %732 = vmatprep.subr.mxu0 0.0
      %733 = vmatpush1.msra.mxu0 0.0
      %734 = vmatprep.subr.mxu0 0.0
      %735 = vmatpush1.msra.mxu0 0.0
      %736 = vmatprep.subr.mxu0 0.0
      %737 = vmatpush1.msra.mxu0 0.0
      %738 = vmatprep.subr.mxu0 0.0
      %739 = vmatpush1.msra.mxu0 0.0
      %740 = vmatprep.subr.mxu0 0.0
      %741 = vmatpush1.msra.mxu0 0.0
      %742 = vmatprep.subr.mxu0 0.0
      %743 = vmatpush1.msra.mxu0 0.0
      %744 = vmatprep.subr.mxu0 0.0
      %745 = vmatpush1.msra.mxu0 0.0
      %746 = vmatprep.subr.mxu0 0.0
      %747 = vmatpush1.msra.mxu0 0.0
      %748 = vmatprep.subr.mxu0 0.0
      %749 = vmatpush1.msra.mxu0 0.0
      %750 = vmatprep.subr.mxu0 0.0
      %751 = vmatpush1.msra.mxu0 0.0
      %752 = vmatprep.subr.mxu0 0.0
      %753 = vmatpush1.msra.mxu0 0.0
      %754 = vmatprep.subr.mxu0 0.0
      %755 = vmatpush1.msra.mxu0 0.0
      %756 = vmatprep.mubr.f32.mxu0 0.0
      %757 = vmatmul.mubr.f32.gmra.mrb[0].mxu0 %v591
      %v758 = vpop.f32.mrb[0].mxu0
      %v759 = vadd.f32 %v422, %v758
      %v760 = vpop.f32.mrb[0].mxu0
      %761 = vmatprep.mubr.f32.mxu0 0.0
      %762 = vmatmul.mubr.f32.gmra.mrb[0].mxu0 %v594
      %v763 = vpop.f32.mrb[0].mxu0
      %v764 = vadd.f32 %v427, %v763
      %v765 = vpop.f32.mrb[0].mxu0
      %766 = vmatprep.mubr.f32.mxu0 0.0
      %767 = vmatmul.mubr.f32.gmra.mrb[0].mxu0 %v597
      %v768 = vpop.f32.mrb[0].mxu0
      %v769 = vadd.f32 %v432, %v768
      %v770 = vpop.f32.mrb[0].mxu0
      %771 = vmatprep.mubr.f32.mxu0 0.0
      %772 = vmatmul.mubr.f32.gmra.mrb[0].mxu0 %v600
      %v773 = vpop.f32.mrb[0].mxu0
      %v774 = vadd.f32 %v437, %v773
      %v775 = vpop.f32.mrb[0].mxu0
      %776 = vmatprep.mubr.f32.mxu0 0.0
      %777 = vmatmul.mubr.f32.gmra.mrb[0].mxu0 %v603
      %v778 = vpop.f32.mrb[0].mxu0
      %v779 = vadd.f32 %v442, %v778
      %v780 = vpop.f32.mrb[0].mxu0
      %781 = vmatprep.mubr.f32.mxu0 0.0
      %782 = vmatmul.mubr.f32.gmra.mrb[0].mxu0 %v606
      %v783 = vpop.f32.mrb[0].mxu0
      %v784 = vadd.f32 %v447, %v783
      %v785 = vpop.f32.mrb[0].mxu0
      %786 = vmatprep.mubr.f32.mxu0 0.0
      %787 = vmatmul.mubr.f32.gmra.mrb[0].mxu0 %v609
      %v788 = vpop.f32.mrb[0].mxu0
      %v789 = vadd.f32 %v452, %v788
      %v790 = vpop.f32.mrb[0].mxu0
      %791 = vmatprep.mubr.f32.mxu0 0.0
      %792 = vmatmul.mubr.f32.gmra.mrb[0].mxu0 %v612
      %v793 = vpop.f32.mrb[0].mxu0
      %v794 = vadd.f32 %v457, %v793
      %v795 = vpop.f32.mrb[0].mxu0
      %796 = vmatprep.mubr.f32.mxu0 0.0
      %797 = vmatmul.mubr.f32.gmra.mrb[0].mxu0 %v615
      %v798 = vpop.f32.mrb[0].mxu0
      %v799 = vadd.f32 %v462, %v798
      %v800 = vpop.f32.mrb[0].mxu0
      %801 = vmatprep.mubr.f32.mxu0 0.0
      %802 = vmatmul.mubr.f32.gmra.mrb[0].mxu0 %v618
      %v803 = vpop.f32.mrb[0].mxu0
      %v804 = vadd.f32 %v467, %v803
      %v805 = vpop.f32.mrb[0].mxu0
      %806 = vmatprep.mubr.f32.mxu0 0.0
      %807 = vmatmul.mubr.f32.gmra.mrb[0].mxu0 %v621
      %v808 = vpop.f32.mrb[0].mxu0
      %v809 = vadd.f32 %v472, %v808
      %v810 = vpop.f32.mrb[0].mxu0
      %811 = vmatprep.mubr.f32.mxu0 0.0
      %812 = vmatmul.mubr.f32.gmra.mrb[0].mxu0 %v624
      %v813 = vpop.f32.mrb[0].mxu0
      %v814 = vadd.f32 %v477, %v813
      %v815 = vpop.f32.mrb[0].mxu0
      %816 = vmatprep.mubr.f32.mxu0 0.0
      %817 = vmatmul.mubr.f32.gmra.mrb[0].mxu0 %v627
      %v818 = vpop.f32.mrb[0].mxu0
      %v819 = vadd.f32 %v482, %v818
      %v820 = vpop.f32.mrb[0].mxu0
      %821 = vmatprep.mubr.f32.mxu0 0.0
      %822 = vmatmul.mubr.f32.gmra.mrb[0].mxu0 %v630
      %v823 = vpop.f32.mrb[0].mxu0
      %v824 = vadd.f32 %v487, %v823
      %v825 = vpop.f32.mrb[0].mxu0
      %826 = vmatprep.mubr.f32.mxu0 0.0
      %827 = vmatmul.mubr.f32.gmra.mrb[0].mxu0 %v633
      %v828 = vpop.f32.mrb[0].mxu0
      %v829 = vadd.f32 %v492, %v828
      %v830 = vpop.f32.mrb[0].mxu0
      %831 = vmatprep.mubr.f32.mxu0 0.0
      %832 = vmatmul.mubr.f32.gmra.mrb[0].mxu0 %v636
      %v833 = vpop.f32.mrb[0].mxu0
      %v834 = vadd.f32 %v497, %v833
      %v835 = vpop.f32.mrb[0].mxu0
      %836 = vmatprep.mubr.f32.mxu0 0.0
      %837 = vmatmul.mubr.f32.gmra.mrb[0].mxu0 %v639
      %v838 = vpop.f32.mrb[0].mxu0
      %v839 = vadd.f32 %v502, %v838
      %v840 = vpop.f32.mrb[0].mxu0
      %841 = vmatprep.mubr.f32.mxu0 0.0
      %842 = vmatmul.mubr.f32.gmra.mrb[0].mxu0 %v642
      %v843 = vpop.f32.mrb[0].mxu0
      %v844 = vadd.f32 %v507, %v843
      %v845 = vpop.f32.mrb[0].mxu0
      %846 = vmatprep.mubr.f32.mxu0 0.0
      %847 = vmatmul.mubr.f32.gmra.mrb[0].mxu0 %v645
      %v848 = vpop.f32.mrb[0].mxu0
      %v849 = vadd.f32 %v512, %v848
      %v850 = vpop.f32.mrb[0].mxu0
      %851 = vmatprep.mubr.f32.mxu0 0.0
      %852 = vmatmul.mubr.f32.gmra.mrb[0].mxu0 %v648
      %v853 = vpop.f32.mrb[0].mxu0
      %v854 = vadd.f32 %v517, %v853
      %v855 = vpop.f32.mrb[0].mxu0
      %856 = vmatprep.mubr.f32.mxu0 0.0
      %857 = vmatmul.mubr.f32.gmra.mrb[0].mxu0 %v651
      %v858 = vpop.f32.mrb[0].mxu0
      %v859 = vadd.f32 %v522, %v858
      %v860 = vpop.f32.mrb[0].mxu0
      %861 = vmatprep.mubr.f32.mxu0 0.0
      %862 = vmatmul.mubr.f32.gmra.mrb[0].mxu0 %v654
      %v863 = vpop.f32.mrb[0].mxu0
      %v864 = vadd.f32 %v527, %v863
      %v865 = vpop.f32.mrb[0].mxu0
      %866 = vmatprep.mubr.f32.mxu0 0.0
      %867 = vmatmul.mubr.f32.gmra.mrb[0].mxu0 %v657
      %v868 = vpop.f32.mrb[0].mxu0
      %v869 = vadd.f32 %v532, %v868
      %v870 = vpop.f32.mrb[0].mxu0
      %871 = vmatprep.mubr.f32.mxu0 0.0
      %872 = vmatmul.mubr.f32.gmra.mrb[0].mxu0 %v660
      %v873 = vpop.f32.mrb[0].mxu0
      %v874 = vadd.f32 %v537, %v873
      %v875 = vpop.f32.mrb[0].mxu0
      %876 = vmatprep.mubr.f32.mxu0 0.0
      %877 = vmatmul.mubr.f32.gmra.mrb[0].mxu0 %v663
      %v878 = vpop.f32.mrb[0].mxu0
      %v879 = vadd.f32 %v542, %v878
      %v880 = vpop.f32.mrb[0].mxu0
      %881 = vmatprep.mubr.f32.mxu0 0.0
      %882 = vmatmul.mubr.f32.gmra.mrb[0].mxu0 %v666
      %v883 = vpop.f32.mrb[0].mxu0
      %v884 = vadd.f32 %v547, %v883
      %v885 = vpop.f32.mrb[0].mxu0
      %886 = vmatprep.mubr.f32.mxu0 0.0
      %887 = vmatmul.mubr.f32.gmra.mrb[0].mxu0 %v669
      %v888 = vpop.f32.mrb[0].mxu0
      %v889 = vadd.f32 %v552, %v888
      %v890 = vpop.f32.mrb[0].mxu0
      %891 = vmatprep.mubr.f32.mxu0 0.0
      %892 = vmatmul.mubr.f32.gmra.mrb[0].mxu0 %v672
      %v893 = vpop.f32.mrb[0].mxu0
      %v894 = vadd.f32 %v557, %v893
      %v895 = vpop.f32.mrb[0].mxu0
      %896 = vmatprep.mubr.f32.mxu0 0.0
      %897 = vmatmul.mubr.f32.gmra.mrb[0].mxu0 %v675
      %v898 = vpop.f32.mrb[0].mxu0
      %v899 = vadd.f32 %v562, %v898
      %v900 = vpop.f32.mrb[0].mxu0
      %901 = vmatprep.mubr.f32.mxu0 0.0
      %902 = vmatmul.mubr.f32.gmra.mrb[0].mxu0 %v678
      %v903 = vpop.f32.mrb[0].mxu0
      %v904 = vadd.f32 %v567, %v903
      %v905 = vpop.f32.mrb[0].mxu0
      %906 = vmatprep.mubr.f32.mxu0 0.0
      %907 = vmatmul.mubr.f32.gmra.mrb[0].mxu0 %v681
      %v908 = vpop.f32.mrb[0].mxu0
      %v909 = vadd.f32 %v572, %v908
      %v910 = vpop.f32.mrb[0].mxu0
      %911 = vmatprep.mubr.f32.mxu0 0.0
      %912 = vmatmul.mubr.f32.gmra.mrb[0].mxu0 %v684
      %v913 = vpop.f32.mrb[0].mxu0
      %v914 = vadd.f32 %v577, %v913
      %v915 = vpop.f32.mrb[0].mxu0
      %916 = vmatprep.mubr.f32.mxu0 0.0
      %917 = vmatmul.mubr.f32.gmra.mrb[0].mxu0 %v687
      %v918 = vpop.f32.mrb[0].mxu0
      %v919 = vadd.f32 %v582, %v918
      %v920 = vpop.f32.mrb[0].mxu0
      %921 = vmatprep.mubr.f32.mxu0 0.0
      %922 = vmatmul.mubr.f32.gmra.mrb[0].mxu0 %v690
      %v923 = vpop.f32.mrb[0].mxu0
      %v924 = vadd.f32 %v587, %v923
      %v925 = vpop.f32.mrb[0].mxu0
      %926 = vdwg.mxu0
      %v927 = vld [vmem:[%s165 + $0x2] sm:$0xff]
      %v928 = vld [vmem:[%s165 + $0xa] sm:$0xff]
      %v929 = vld [vmem:[%s165 + $0x12] sm:$0xff]
      %v930 = vld [vmem:[%s165 + $0x1a] sm:$0xff]
      %v931 = vld [vmem:[%s165 + $0x22] sm:$0xff]
      %v932 = vld [vmem:[%s165 + $0x2a] sm:$0xff]
      %v933 = vld [vmem:[%s165 + $0x32] sm:$0xff]
      %v934 = vld [vmem:[%s165 + $0x3a] sm:$0xff]
      %v935 = vld [vmem:[%s165 + $0x42] sm:$0xff]
      %v936 = vld [vmem:[%s165 + $0x4a] sm:$0xff]
      %v937 = vld [vmem:[%s165 + $0x52] sm:$0xff]
      %v938 = vld [vmem:[%s165 + $0x5a] sm:$0xff]
      %v939 = vld [vmem:[%s165 + $0x62] sm:$0xff]
      %v940 = vld [vmem:[%s165 + $0x6a] sm:$0xff]
      %v941 = vld [vmem:[%s165 + $0x72] sm:$0xff]
      %v942 = vld [vmem:[%s165 + $0x7a] sm:$0xff]
      %v943 = vld [vmem:[%s165 + $0x82] sm:$0xff]
      %v944 = vld [vmem:[%s165 + $0x8a] sm:$0xff]
      %v945 = vld [vmem:[%s165 + $0x92] sm:$0xff]
      %v946 = vld [vmem:[%s165 + $0x9a] sm:$0xff]
      %v947 = vld [vmem:[%s165 + $0xa2] sm:$0xff]
      %v948 = vld [vmem:[%s165 + $0xaa] sm:$0xff]
      %v949 = vld [vmem:[%s165 + $0xb2] sm:$0xff]
      %v950 = vld [vmem:[%s165 + $0xba] sm:$0xff]
      %v951 = vld [vmem:[%s165 + $0xc2] sm:$0xff]
      %v952 = vld [vmem:[%s165 + $0xca] sm:$0xff]
      %v953 = vld [vmem:[%s165 + $0xd2] sm:$0xff]
      %v954 = vld [vmem:[%s165 + $0xda] sm:$0xff]
      %v955 = vld [vmem:[%s165 + $0xe2] sm:$0xff]
      %v956 = vld [vmem:[%s165 + $0xea] sm:$0xff]
      %v957 = vld [vmem:[%s165 + $0xf2] sm:$0xff]
      %v958 = vld [vmem:[%s165 + $0xfa] sm:$0xff]
      %v959 = vld [vmem:[%s165 + $0x102] sm:$0xff]
      %v960 = vld [vmem:[%s165 + $0x10a] sm:$0xff]
      %s961 = scalar_lea.vmem %s1, 96
      %v962 = vld [vmem:[%s961] sm:$0xff]
      %v963 = vld [vmem:[%s961 + $0x8] sm:$0xff]
      %v964 = vld [vmem:[%s961 + $0x10] sm:$0xff]
      %v965 = vld [vmem:[%s961 + $0x18] sm:$0xff]
      %v966 = vld [vmem:[%s961 + $0x20] sm:$0xff]
      %v967 = vld [vmem:[%s961 + $0x28] sm:$0xff]
      %v969 = vsel %vm252, %v927, 0
      %v972 = vsel %vm252, %v928, 0
      %v975 = vsel %vm252, %v929, 0
      %v978 = vsel %vm252, %v930, 0
      %v981 = vsel %vm252, %v931, 0
      %v984 = vsel %vm252, %v932, 0
      %v987 = vsel %vm252, %v933, 0
      %v990 = vsel %vm252, %v934, 0
      %v993 = vsel %vm252, %v935, 0
      %v996 = vsel %vm252, %v936, 0
      %v999 = vsel %vm252, %v937, 0
      %v1002 = vsel %vm252, %v938, 0
      %v1005 = vsel %vm252, %v939, 0
      %v1008 = vsel %vm252, %v940, 0
      %v1011 = vsel %vm252, %v941, 0
      %v1014 = vsel %vm252, %v942, 0
      %v1017 = vsel %vm252, %v943, 0
      %v1020 = vsel %vm252, %v944, 0
      %v1023 = vsel %vm252, %v945, 0
      %v1026 = vsel %vm252, %v946, 0
      %v1029 = vsel %vm252, %v947, 0
      %v1032 = vsel %vm252, %v948, 0
      %v1035 = vsel %vm252, %v949, 0
      %v1038 = vsel %vm252, %v950, 0
      %v1041 = vsel %vm252, %v951, 0
      %v1044 = vsel %vm252, %v952, 0
      %v1047 = vsel %vm252, %v953, 0
      %v1050 = vsel %vm252, %v954, 0
      %v1053 = vsel %vm252, %v955, 0
      %v1056 = vsel %vm252, %v956, 0
      %v1059 = vsel %vm252, %v957, 0
      %v1062 = vsel %vm252, %v958, 0
      %v1065 = vsel %vm252, %v959, 0
      %v1068 = vsel %vm252, %v960, 0
      %1070 = vmatprep.subr.mxu0 0.0
      %1071 = vmatpush1.msra.mxu0 %v962
      %1072 = vmatprep.subr.mxu0 0.0
      %1073 = vmatpush1.msra.mxu0 %v963
      %1074 = vmatprep.subr.mxu0 0.0
      %1075 = vmatpush1.msra.mxu0 %v964
      %1076 = vmatprep.subr.mxu0 0.0
      %1077 = vmatpush1.msra.mxu0 %v965
      %1078 = vmatprep.subr.mxu0 0.0
      %1079 = vmatpush1.msra.mxu0 %v966
      %1080 = vmatprep.subr.mxu0 0.0
      %1081 = vmatpush1.msra.mxu0 %v967
      %1082 = vmatprep.subr.mxu0 0.0
      %1083 = vmatpush1.msra.mxu0 0.0
      %1084 = vmatprep.subr.mxu0 0.0
      %1085 = vmatpush1.msra.mxu0 0.0
      %1086 = vmatprep.subr.mxu0 0.0
      %1087 = vmatpush1.msra.mxu0 0.0
      %1088 = vmatprep.subr.mxu0 0.0
      %1089 = vmatpush1.msra.mxu0 0.0
      %1090 = vmatprep.subr.mxu0 0.0
      %1091 = vmatpush1.msra.mxu0 0.0
      %1092 = vmatprep.subr.mxu0 0.0
      %1093 = vmatpush1.msra.mxu0 0.0
      %1094 = vmatprep.subr.mxu0 0.0
      %1095 = vmatpush1.msra.mxu0 0.0
      %1096 = vmatprep.subr.mxu0 0.0
      %1097 = vmatpush1.msra.mxu0 0.0
      %1098 = vmatprep.subr.mxu0 0.0
      %1099 = vmatpush1.msra.mxu0 0.0
      %1100 = vmatprep.subr.mxu0 0.0
      %1101 = vmatpush1.msra.mxu0 0.0
      %1102 = vmatprep.subr.mxu0 0.0
      %1103 = vmatpush1.msra.mxu0 0.0
      %1104 = vmatprep.subr.mxu0 0.0
      %1105 = vmatpush1.msra.mxu0 0.0
      %1106 = vmatprep.subr.mxu0 0.0
      %1107 = vmatpush1.msra.mxu0 0.0
      %1108 = vmatprep.subr.mxu0 0.0
      %1109 = vmatpush1.msra.mxu0 0.0
      %1110 = vmatprep.subr.mxu0 0.0
      %1111 = vmatpush1.msra.mxu0 0.0
      %1112 = vmatprep.subr.mxu0 0.0
      %1113 = vmatpush1.msra.mxu0 0.0
      %1114 = vmatprep.subr.mxu0 0.0
      %1115 = vmatpush1.msra.mxu0 0.0
      %1116 = vmatprep.subr.mxu0 0.0
      %1117 = vmatpush1.msra.mxu0 0.0
      %1118 = vmatprep.subr.mxu0 0.0
      %1119 = vmatpush1.msra.mxu0 0.0
      %1120 = vmatprep.subr.mxu0 0.0
      %1121 = vmatpush1.msra.mxu0 0.0
      %1122 = vmatprep.subr.mxu0 0.0
      %1123 = vmatpush1.msra.mxu0 0.0
      %1124 = vmatprep.subr.mxu0 0.0
      %1125 = vmatpush1.msra.mxu0 0.0
      %1126 = vmatprep.subr.mxu0 0.0
      %1127 = vmatpush1.msra.mxu0 0.0
      %1128 = vmatprep.subr.mxu0 0.0
      %1129 = vmatpush1.msra.mxu0 0.0
      %1130 = vmatprep.subr.mxu0 0.0
      %1131 = vmatpush1.msra.mxu0 0.0
      %1132 = vmatprep.subr.mxu0 0.0
      %1133 = vmatpush1.msra.mxu0 0.0
      %1134 = vmatprep.mubr.f32.mxu0 0.0
      %1135 = vmatmul.mubr.f32.gmra.mrb[0].mxu0 %v969
      %v1136 = vpop.f32.mrb[0].mxu0
      %v1137 = vadd.f32 0.0, %v1136
      %v1138 = vpop.f32.mrb[0].mxu0
      %1139 = vmatprep.mubr.f32.mxu0 0.0
      %1140 = vmatmul.mubr.f32.gmra.mrb[0].mxu0 %v972
      %v1141 = vpop.f32.mrb[0].mxu0
      %v1142 = vadd.f32 0.0, %v1141
      %v1143 = vpop.f32.mrb[0].mxu0
      %1144 = vmatprep.mubr.f32.mxu0 0.0
      %1145 = vmatmul.mubr.f32.gmra.mrb[0].mxu0 %v975
      %v1146 = vpop.f32.mrb[0].mxu0
      %v1147 = vadd.f32 0.0, %v1146
      %v1148 = vpop.f32.mrb[0].mxu0
      %1149 = vmatprep.mubr.f32.mxu0 0.0
      %1150 = vmatmul.mubr.f32.gmra.mrb[0].mxu0 %v978
      %v1151 = vpop.f32.mrb[0].mxu0
      %v1152 = vadd.f32 0.0, %v1151
      %v1153 = vpop.f32.mrb[0].mxu0
      %1154 = vmatprep.mubr.f32.mxu0 0.0
      %1155 = vmatmul.mubr.f32.gmra.mrb[0].mxu0 %v981
      %v1156 = vpop.f32.mrb[0].mxu0
      %v1157 = vadd.f32 0.0, %v1156
      %v1158 = vpop.f32.mrb[0].mxu0
      %1159 = vmatprep.mubr.f32.mxu0 0.0
      %1160 = vmatmul.mubr.f32.gmra.mrb[0].mxu0 %v984
      %v1161 = vpop.f32.mrb[0].mxu0
      %v1162 = vadd.f32 0.0, %v1161
      %v1163 = vpop.f32.mrb[0].mxu0
      %1164 = vmatprep.mubr.f32.mxu0 0.0
      %1165 = vmatmul.mubr.f32.gmra.mrb[0].mxu0 %v987
      %v1166 = vpop.f32.mrb[0].mxu0
      %v1167 = vadd.f32 0.0, %v1166
      %v1168 = vpop.f32.mrb[0].mxu0
      %1169 = vmatprep.mubr.f32.mxu0 0.0
      %1170 = vmatmul.mubr.f32.gmra.mrb[0].mxu0 %v990
      %v1171 = vpop.f32.mrb[0].mxu0
      %v1172 = vadd.f32 0.0, %v1171
      %v1173 = vpop.f32.mrb[0].mxu0
      %1174 = vmatprep.mubr.f32.mxu0 0.0
      %1175 = vmatmul.mubr.f32.gmra.mrb[0].mxu0 %v993
      %v1176 = vpop.f32.mrb[0].mxu0
      %v1177 = vadd.f32 0.0, %v1176
      %v1178 = vpop.f32.mrb[0].mxu0
      %1179 = vmatprep.mubr.f32.mxu0 0.0
      %1180 = vmatmul.mubr.f32.gmra.mrb[0].mxu0 %v996
      %v1181 = vpop.f32.mrb[0].mxu0
      %v1182 = vadd.f32 0.0, %v1181
      %v1183 = vpop.f32.mrb[0].mxu0
      %1184 = vmatprep.mubr.f32.mxu0 0.0
      %1185 = vmatmul.mubr.f32.gmra.mrb[0].mxu0 %v999
      %v1186 = vpop.f32.mrb[0].mxu0
      %v1187 = vadd.f32 0.0, %v1186
      %v1188 = vpop.f32.mrb[0].mxu0
      %1189 = vmatprep.mubr.f32.mxu0 0.0
      %1190 = vmatmul.mubr.f32.gmra.mrb[0].mxu0 %v1002
      %v1191 = vpop.f32.mrb[0].mxu0
      %v1192 = vadd.f32 0.0, %v1191
      %v1193 = vpop.f32.mrb[0].mxu0
      %1194 = vmatprep.mubr.f32.mxu0 0.0
      %1195 = vmatmul.mubr.f32.gmra.mrb[0].mxu0 %v1005
      %v1196 = vpop.f32.mrb[0].mxu0
      %v1197 = vadd.f32 0.0, %v1196
      %v1198 = vpop.f32.mrb[0].mxu0
      %1199 = vmatprep.mubr.f32.mxu0 0.0
      %1200 = vmatmul.mubr.f32.gmra.mrb[0].mxu0 %v1008
      %v1201 = vpop.f32.mrb[0].mxu0
      %v1202 = vadd.f32 0.0, %v1201
      %v1203 = vpop.f32.mrb[0].mxu0
      %1204 = vmatprep.mubr.f32.mxu0 0.0
      %1205 = vmatmul.mubr.f32.gmra.mrb[0].mxu0 %v1011
      %v1206 = vpop.f32.mrb[0].mxu0
      %v1207 = vadd.f32 0.0, %v1206
      %v1208 = vpop.f32.mrb[0].mxu0
      %1209 = vmatprep.mubr.f32.mxu0 0.0
      %1210 = vmatmul.mubr.f32.gmra.mrb[0].mxu0 %v1014
      %v1211 = vpop.f32.mrb[0].mxu0
      %v1212 = vadd.f32 0.0, %v1211
      %v1213 = vpop.f32.mrb[0].mxu0
      %1214 = vmatprep.mubr.f32.mxu0 0.0
      %1215 = vmatmul.mubr.f32.gmra.mrb[0].mxu0 %v1017
      %v1216 = vpop.f32.mrb[0].mxu0
      %v1217 = vadd.f32 0.0, %v1216
      %v1218 = vpop.f32.mrb[0].mxu0
      %1219 = vmatprep.mubr.f32.mxu0 0.0
      %1220 = vmatmul.mubr.f32.gmra.mrb[0].mxu0 %v1020
      %v1221 = vpop.f32.mrb[0].mxu0
      %v1222 = vadd.f32 0.0, %v1221
      %v1223 = vpop.f32.mrb[0].mxu0
      %1224 = vmatprep.mubr.f32.mxu0 0.0
      %1225 = vmatmul.mubr.f32.gmra.mrb[0].mxu0 %v1023
      %v1226 = vpop.f32.mrb[0].mxu0
      %v1227 = vadd.f32 0.0, %v1226
      %v1228 = vpop.f32.mrb[0].mxu0
      %1229 = vmatprep.mubr.f32.mxu0 0.0
      %1230 = vmatmul.mubr.f32.gmra.mrb[0].mxu0 %v1026
      %v1231 = vpop.f32.mrb[0].mxu0
      %v1232 = vadd.f32 0.0, %v1231
      %v1233 = vpop.f32.mrb[0].mxu0
      %1234 = vmatprep.mubr.f32.mxu0 0.0
      %1235 = vmatmul.mubr.f32.gmra.mrb[0].mxu0 %v1029
      %v1236 = vpop.f32.mrb[0].mxu0
      %v1237 = vadd.f32 0.0, %v1236
      %v1238 = vpop.f32.mrb[0].mxu0
      %1239 = vmatprep.mubr.f32.mxu0 0.0
      %1240 = vmatmul.mubr.f32.gmra.mrb[0].mxu0 %v1032
      %v1241 = vpop.f32.mrb[0].mxu0
      %v1242 = vadd.f32 0.0, %v1241
      %v1243 = vpop.f32.mrb[0].mxu0
      %1244 = vmatprep.mubr.f32.mxu0 0.0
      %1245 = vmatmul.mubr.f32.gmra.mrb[0].mxu0 %v1035
      %v1246 = vpop.f32.mrb[0].mxu0
      %v1247 = vadd.f32 0.0, %v1246
      %v1248 = vpop.f32.mrb[0].mxu0
      %1249 = vmatprep.mubr.f32.mxu0 0.0
      %1250 = vmatmul.mubr.f32.gmra.mrb[0].mxu0 %v1038
      %v1251 = vpop.f32.mrb[0].mxu0
      %v1252 = vadd.f32 0.0, %v1251
      %v1253 = vpop.f32.mrb[0].mxu0
      %1254 = vmatprep.mubr.f32.mxu0 0.0
      %1255 = vmatmul.mubr.f32.gmra.mrb[0].mxu0 %v1041
      %v1256 = vpop.f32.mrb[0].mxu0
      %v1257 = vadd.f32 0.0, %v1256
      %v1258 = vpop.f32.mrb[0].mxu0
      %1259 = vmatprep.mubr.f32.mxu0 0.0
      %1260 = vmatmul.mubr.f32.gmra.mrb[0].mxu0 %v1044
      %v1261 = vpop.f32.mrb[0].mxu0
      %v1262 = vadd.f32 0.0, %v1261
      %v1263 = vpop.f32.mrb[0].mxu0
      %1264 = vmatprep.mubr.f32.mxu0 0.0
      %1265 = vmatmul.mubr.f32.gmra.mrb[0].mxu0 %v1047
      %v1266 = vpop.f32.mrb[0].mxu0
      %v1267 = vadd.f32 0.0, %v1266
      %v1268 = vpop.f32.mrb[0].mxu0
      %1269 = vmatprep.mubr.f32.mxu0 0.0
      %1270 = vmatmul.mubr.f32.gmra.mrb[0].mxu0 %v1050
      %v1271 = vpop.f32.mrb[0].mxu0
      %v1272 = vadd.f32 0.0, %v1271
      %v1273 = vpop.f32.mrb[0].mxu0
      %1274 = vmatprep.mubr.f32.mxu0 0.0
      %1275 = vmatmul.mubr.f32.gmra.mrb[0].mxu0 %v1053
      %v1276 = vpop.f32.mrb[0].mxu0
      %v1277 = vadd.f32 0.0, %v1276
      %v1278 = vpop.f32.mrb[0].mxu0
      %1279 = vmatprep.mubr.f32.mxu0 0.0
      %1280 = vmatmul.mubr.f32.gmra.mrb[0].mxu0 %v1056
      %v1281 = vpop.f32.mrb[0].mxu0
      %v1282 = vadd.f32 0.0, %v1281
      %v1283 = vpop.f32.mrb[0].mxu0
      %1284 = vmatprep.mubr.f32.mxu0 0.0
      %1285 = vmatmul.mubr.f32.gmra.mrb[0].mxu0 %v1059
      %v1286 = vpop.f32.mrb[0].mxu0
      %v1287 = vadd.f32 0.0, %v1286
      %v1288 = vpop.f32.mrb[0].mxu0
      %1289 = vmatprep.mubr.f32.mxu0 0.0
      %1290 = vmatmul.mubr.f32.gmra.mrb[0].mxu0 %v1062
      %v1291 = vpop.f32.mrb[0].mxu0
      %v1292 = vadd.f32 0.0, %v1291
      %v1293 = vpop.f32.mrb[0].mxu0
      %1294 = vmatprep.mubr.f32.mxu0 0.0
      %1295 = vmatmul.mubr.f32.gmra.mrb[0].mxu0 %v1065
      %v1296 = vpop.f32.mrb[0].mxu0
      %v1297 = vadd.f32 0.0, %v1296
      %v1298 = vpop.f32.mrb[0].mxu0
      %1299 = vmatprep.mubr.f32.mxu0 0.0
      %1300 = vmatmul.mubr.f32.gmra.mrb[0].mxu0 %v1068
      %v1301 = vpop.f32.mrb[0].mxu0
      %v1302 = vadd.f32 0.0, %v1301
      %v1303 = vpop.f32.mrb[0].mxu0
      %1304 = vdwg.mxu0
      %v1305 = vadd.f32 %v759, %v1137
      %v1306 = vadd.f32 %v764, %v1142
      %v1307 = vadd.f32 %v769, %v1147
      %v1308 = vadd.f32 %v774, %v1152
      %v1309 = vadd.f32 %v779, %v1157
      %v1310 = vadd.f32 %v784, %v1162
      %v1311 = vadd.f32 %v789, %v1167
      %v1312 = vadd.f32 %v794, %v1172
      %v1313 = vadd.f32 %v799, %v1177
      %v1314 = vadd.f32 %v804, %v1182
      %v1315 = vadd.f32 %v809, %v1187
      %v1316 = vadd.f32 %v814, %v1192
      %v1317 = vadd.f32 %v819, %v1197
      %v1318 = vadd.f32 %v824, %v1202
      %v1319 = vadd.f32 %v829, %v1207
      %v1320 = vadd.f32 %v834, %v1212
      %v1321 = vadd.f32 %v839, %v1217
      %v1322 = vadd.f32 %v844, %v1222
      %v1323 = vadd.f32 %v849, %v1227
      %v1324 = vadd.f32 %v854, %v1232
      %v1325 = vadd.f32 %v859, %v1237
      %v1326 = vadd.f32 %v864, %v1242
      %v1327 = vadd.f32 %v869, %v1247
      %v1328 = vadd.f32 %v874, %v1252
      %v1329 = vadd.f32 %v879, %v1257
      %v1330 = vadd.f32 %v884, %v1262
      %v1331 = vadd.f32 %v889, %v1267
      %v1332 = vadd.f32 %v894, %v1272
      %v1333 = vadd.f32 %v899, %v1277
      %v1334 = vadd.f32 %v904, %v1282
      %v1335 = vadd.f32 %v909, %v1287
      %v1336 = vadd.f32 %v914, %v1292
      %v1337 = vadd.f32 %v919, %v1297
      %v1338 = vadd.f32 %v924, %v1302
      %v1339 = vld [vmem:[%s165 + $0x22] sm:$0xff]
      %v1340 = vld [vmem:[%s165 + $0x2a] sm:$0xff]
      %v1341 = vld [vmem:[%s165 + $0x32] sm:$0xff]
      %v1342 = vld [vmem:[%s165 + $0x3a] sm:$0xff]
      %v1343 = vld [vmem:[%s165 + $0x42] sm:$0xff]
      %v1344 = vld [vmem:[%s165 + $0x4a] sm:$0xff]
      %v1345 = vld [vmem:[%s165 + $0x52] sm:$0xff]
      %v1346 = vld [vmem:[%s165 + $0x5a] sm:$0xff]
      %v1347 = vld [vmem:[%s165 + $0x62] sm:$0xff]
      %v1348 = vld [vmem:[%s165 + $0x6a] sm:$0xff]
      %v1349 = vld [vmem:[%s165 + $0x72] sm:$0xff]
      %v1350 = vld [vmem:[%s165 + $0x7a] sm:$0xff]
      %v1351 = vld [vmem:[%s165 + $0x82] sm:$0xff]
      %v1352 = vld [vmem:[%s165 + $0x8a] sm:$0xff]
      %v1353 = vld [vmem:[%s165 + $0x92] sm:$0xff]
      %v1354 = vld [vmem:[%s165 + $0x9a] sm:$0xff]
      %v1355 = vld [vmem:[%s165 + $0xa2] sm:$0xff]
      %v1356 = vld [vmem:[%s165 + $0xaa] sm:$0xff]
      %v1357 = vld [vmem:[%s165 + $0xb2] sm:$0xff]
      %v1358 = vld [vmem:[%s165 + $0xba] sm:$0xff]
      %v1359 = vld [vmem:[%s165 + $0xc2] sm:$0xff]
      %v1360 = vld [vmem:[%s165 + $0xca] sm:$0xff]
      %v1361 = vld [vmem:[%s165 + $0xd2] sm:$0xff]
      %v1362 = vld [vmem:[%s165 + $0xda] sm:$0xff]
      %v1363 = vld [vmem:[%s165 + $0xe2] sm:$0xff]
      %v1364 = vld [vmem:[%s165 + $0xea] sm:$0xff]
      %v1365 = vld [vmem:[%s165 + $0xf2] sm:$0xff]
      %v1366 = vld [vmem:[%s165 + $0xfa] sm:$0xff]
      %v1367 = vld [vmem:[%s165 + $0x102] sm:$0xff]
      %v1368 = vld [vmem:[%s165 + $0x10a] sm:$0xff]
      %v1369 = vld [vmem:[%s165 + $0x112] sm:$0xff]
      %v1370 = vld [vmem:[%s165 + $0x11a] sm:$0xff]
      %v1371 = vld [vmem:[%s165 + $0x122] sm:$0xff]
      %v1372 = vld [vmem:[%s165 + $0x12a] sm:$0xff]
      %s1373 = scalar_lea.vmem %s1, 144
      %v1374 = vld [vmem:[%s1373] sm:$0xff]
      %v1375 = vld [vmem:[%s1373 + $0x8] sm:$0xff]
      %v1376 = vld [vmem:[%s1373 + $0x10] sm:$0xff]
      %v1377 = vld [vmem:[%s1373 + $0x18] sm:$0xff]
      %v1378 = vld [vmem:[%s1373 + $0x20] sm:$0xff]
      %v1379 = vld [vmem:[%s1373 + $0x28] sm:$0xff]
      %v1381 = vsel %vm252, %v1339, 0
      %v1384 = vsel %vm252, %v1340, 0
      %v1387 = vsel %vm252, %v1341, 0
      %v1390 = vsel %vm252, %v1342, 0
      %v1393 = vsel %vm252, %v1343, 0
      %v1396 = vsel %vm252, %v1344, 0
      %v1399 = vsel %vm252, %v1345, 0
      %v1402 = vsel %vm252, %v1346, 0
      %v1405 = vsel %vm252, %v1347, 0
      %v1408 = vsel %vm252, %v1348, 0
      %v1411 = vsel %vm252, %v1349, 0
      %v1414 = vsel %vm252, %v1350, 0
      %v1417 = vsel %vm252, %v1351, 0
      %v1420 = vsel %vm252, %v1352, 0
      %v1423 = vsel %vm252, %v1353, 0
      %v1426 = vsel %vm252, %v1354, 0
      %v1429 = vsel %vm252, %v1355, 0
      %v1432 = vsel %vm252, %v1356, 0
      %v1435 = vsel %vm252, %v1357, 0
      %v1438 = vsel %vm252, %v1358, 0
      %v1441 = vsel %vm252, %v1359, 0
      %v1444 = vsel %vm252, %v1360, 0
      %v1447 = vsel %vm252, %v1361, 0
      %v1450 = vsel %vm252, %v1362, 0
      %v1453 = vsel %vm252, %v1363, 0
      %v1456 = vsel %vm252, %v1364, 0
      %v1459 = vsel %vm252, %v1365, 0
      %v1462 = vsel %vm252, %v1366, 0
      %v1465 = vsel %vm252, %v1367, 0
      %v1468 = vsel %vm252, %v1368, 0
      %v1471 = vsel %vm252, %v1369, 0
      %v1474 = vsel %vm252, %v1370, 0
      %v1477 = vsel %vm252, %v1371, 0
      %v1480 = vsel %vm252, %v1372, 0
      %1482 = vmatprep.subr.mxu0 0.0
      %1483 = vmatpush1.msra.mxu0 %v1374
      %1484 = vmatprep.subr.mxu0 0.0
      %1485 = vmatpush1.msra.mxu0 %v1375
      %1486 = vmatprep.subr.mxu0 0.0
      %1487 = vmatpush1.msra.mxu0 %v1376
      %1488 = vmatprep.subr.mxu0 0.0
      %1489 = vmatpush1.msra.mxu0 %v1377
      %1490 = vmatprep.subr.mxu0 0.0
      %1491 = vmatpush1.msra.mxu0 %v1378
      %1492 = vmatprep.subr.mxu0 0.0
      %1493 = vmatpush1.msra.mxu0 %v1379
      %1494 = vmatprep.subr.mxu0 0.0
      %1495 = vmatpush1.msra.mxu0 0.0
      %1496 = vmatprep.subr.mxu0 0.0
      %1497 = vmatpush1.msra.mxu0 0.0
      %1498 = vmatprep.subr.mxu0 0.0
      %1499 = vmatpush1.msra.mxu0 0.0
      %1500 = vmatprep.subr.mxu0 0.0
      %1501 = vmatpush1.msra.mxu0 0.0
      %1502 = vmatprep.subr.mxu0 0.0
      %1503 = vmatpush1.msra.mxu0 0.0
      %1504 = vmatprep.subr.mxu0 0.0
      %1505 = vmatpush1.msra.mxu0 0.0
      %1506 = vmatprep.subr.mxu0 0.0
      %1507 = vmatpush1.msra.mxu0 0.0
      %1508 = vmatprep.subr.mxu0 0.0
      %1509 = vmatpush1.msra.mxu0 0.0
      %1510 = vmatprep.subr.mxu0 0.0
      %1511 = vmatpush1.msra.mxu0 0.0
      %1512 = vmatprep.subr.mxu0 0.0
      %1513 = vmatpush1.msra.mxu0 0.0
      %1514 = vmatprep.subr.mxu0 0.0
      %1515 = vmatpush1.msra.mxu0 0.0
      %1516 = vmatprep.subr.mxu0 0.0
      %1517 = vmatpush1.msra.mxu0 0.0
      %1518 = vmatprep.subr.mxu0 0.0
      %1519 = vmatpush1.msra.mxu0 0.0
      %1520 = vmatprep.subr.mxu0 0.0
      %1521 = vmatpush1.msra.mxu0 0.0
      %1522 = vmatprep.subr.mxu0 0.0
      %1523 = vmatpush1.msra.mxu0 0.0
      %1524 = vmatprep.subr.mxu0 0.0
      %1525 = vmatpush1.msra.mxu0 0.0
      %1526 = vmatprep.subr.mxu0 0.0
      %1527 = vmatpush1.msra.mxu0 0.0
      %1528 = vmatprep.subr.mxu0 0.0
      %1529 = vmatpush1.msra.mxu0 0.0
      %1530 = vmatprep.subr.mxu0 0.0
      %1531 = vmatpush1.msra.mxu0 0.0
      %1532 = vmatprep.subr.mxu0 0.0
      %1533 = vmatpush1.msra.mxu0 0.0
      %1534 = vmatprep.subr.mxu0 0.0
      %1535 = vmatpush1.msra.mxu0 0.0
      %1536 = vmatprep.subr.mxu0 0.0
      %1537 = vmatpush1.msra.mxu0 0.0
      %1538 = vmatprep.subr.mxu0 0.0
      %1539 = vmatpush1.msra.mxu0 0.0
      %1540 = vmatprep.subr.mxu0 0.0
      %1541 = vmatpush1.msra.mxu0 0.0
      %1542 = vmatprep.subr.mxu0 0.0
      %1543 = vmatpush1.msra.mxu0 0.0
      %1544 = vmatprep.subr.mxu0 0.0
      %1545 = vmatpush1.msra.mxu0 0.0
      %1546 = vmatprep.mubr.f32.mxu0 0.0
      %1547 = vmatmul.mubr.f32.gmra.mrb[0].mxu0 %v1381
      %v1548 = vpop.f32.mrb[0].mxu0
      %v1549 = vadd.f32 0.0, %v1548
      %v1550 = vpop.f32.mrb[0].mxu0
      %1551 = vmatprep.mubr.f32.mxu0 0.0
      %1552 = vmatmul.mubr.f32.gmra.mrb[0].mxu0 %v1384
      %v1553 = vpop.f32.mrb[0].mxu0
      %v1554 = vadd.f32 0.0, %v1553
      %v1555 = vpop.f32.mrb[0].mxu0
      %1556 = vmatprep.mubr.f32.mxu0 0.0
      %1557 = vmatmul.mubr.f32.gmra.mrb[0].mxu0 %v1387
      %v1558 = vpop.f32.mrb[0].mxu0
      %v1559 = vadd.f32 0.0, %v1558
      %v1560 = vpop.f32.mrb[0].mxu0
      %1561 = vmatprep.mubr.f32.mxu0 0.0
      %1562 = vmatmul.mubr.f32.gmra.mrb[0].mxu0 %v1390
      %v1563 = vpop.f32.mrb[0].mxu0
      %v1564 = vadd.f32 0.0, %v1563
      %v1565 = vpop.f32.mrb[0].mxu0
      %1566 = vmatprep.mubr.f32.mxu0 0.0
      %1567 = vmatmul.mubr.f32.gmra.mrb[0].mxu0 %v1393
      %v1568 = vpop.f32.mrb[0].mxu0
      %v1569 = vadd.f32 0.0, %v1568
      %v1570 = vpop.f32.mrb[0].mxu0
      %1571 = vmatprep.mubr.f32.mxu0 0.0
      %1572 = vmatmul.mubr.f32.gmra.mrb[0].mxu0 %v1396
      %v1573 = vpop.f32.mrb[0].mxu0
      %v1574 = vadd.f32 0.0, %v1573
      %v1575 = vpop.f32.mrb[0].mxu0
      %1576 = vmatprep.mubr.f32.mxu0 0.0
      %1577 = vmatmul.mubr.f32.gmra.mrb[0].mxu0 %v1399
      %v1578 = vpop.f32.mrb[0].mxu0
      %v1579 = vadd.f32 0.0, %v1578
      %v1580 = vpop.f32.mrb[0].mxu0
      %1581 = vmatprep.mubr.f32.mxu0 0.0
      %1582 = vmatmul.mubr.f32.gmra.mrb[0].mxu0 %v1402
      %v1583 = vpop.f32.mrb[0].mxu0
      %v1584 = vadd.f32 0.0, %v1583
      %v1585 = vpop.f32.mrb[0].mxu0
      %1586 = vmatprep.mubr.f32.mxu0 0.0
      %1587 = vmatmul.mubr.f32.gmra.mrb[0].mxu0 %v1405
      %v1588 = vpop.f32.mrb[0].mxu0
      %v1589 = vadd.f32 0.0, %v1588
      %v1590 = vpop.f32.mrb[0].mxu0
      %1591 = vmatprep.mubr.f32.mxu0 0.0
      %1592 = vmatmul.mubr.f32.gmra.mrb[0].mxu0 %v1408
      %v1593 = vpop.f32.mrb[0].mxu0
      %v1594 = vadd.f32 0.0, %v1593
      %v1595 = vpop.f32.mrb[0].mxu0
      %1596 = vmatprep.mubr.f32.mxu0 0.0
      %1597 = vmatmul.mubr.f32.gmra.mrb[0].mxu0 %v1411
      %v1598 = vpop.f32.mrb[0].mxu0
      %v1599 = vadd.f32 0.0, %v1598
      %v1600 = vpop.f32.mrb[0].mxu0
      %1601 = vmatprep.mubr.f32.mxu0 0.0
      %1602 = vmatmul.mubr.f32.gmra.mrb[0].mxu0 %v1414
      %v1603 = vpop.f32.mrb[0].mxu0
      %v1604 = vadd.f32 0.0, %v1603
      %v1605 = vpop.f32.mrb[0].mxu0
      %1606 = vmatprep.mubr.f32.mxu0 0.0
      %1607 = vmatmul.mubr.f32.gmra.mrb[0].mxu0 %v1417
      %v1608 = vpop.f32.mrb[0].mxu0
      %v1609 = vadd.f32 0.0, %v1608
      %v1610 = vpop.f32.mrb[0].mxu0
      %1611 = vmatprep.mubr.f32.mxu0 0.0
      %1612 = vmatmul.mubr.f32.gmra.mrb[0].mxu0 %v1420
      %v1613 = vpop.f32.mrb[0].mxu0
      %v1614 = vadd.f32 0.0, %v1613
      %v1615 = vpop.f32.mrb[0].mxu0
      %1616 = vmatprep.mubr.f32.mxu0 0.0
      %1617 = vmatmul.mubr.f32.gmra.mrb[0].mxu0 %v1423
      %v1618 = vpop.f32.mrb[0].mxu0
      %v1619 = vadd.f32 0.0, %v1618
      %v1620 = vpop.f32.mrb[0].mxu0
      %1621 = vmatprep.mubr.f32.mxu0 0.0
      %1622 = vmatmul.mubr.f32.gmra.mrb[0].mxu0 %v1426
      %v1623 = vpop.f32.mrb[0].mxu0
      %v1624 = vadd.f32 0.0, %v1623
      %v1625 = vpop.f32.mrb[0].mxu0
      %1626 = vmatprep.mubr.f32.mxu0 0.0
      %1627 = vmatmul.mubr.f32.gmra.mrb[0].mxu0 %v1429
      %v1628 = vpop.f32.mrb[0].mxu0
      %v1629 = vadd.f32 0.0, %v1628
      %v1630 = vpop.f32.mrb[0].mxu0
      %1631 = vmatprep.mubr.f32.mxu0 0.0
      %1632 = vmatmul.mubr.f32.gmra.mrb[0].mxu0 %v1432
      %v1633 = vpop.f32.mrb[0].mxu0
      %v1634 = vadd.f32 0.0, %v1633
      %v1635 = vpop.f32.mrb[0].mxu0
      %1636 = vmatprep.mubr.f32.mxu0 0.0
      %1637 = vmatmul.mubr.f32.gmra.mrb[0].mxu0 %v1435
      %v1638 = vpop.f32.mrb[0].mxu0
      %v1639 = vadd.f32 0.0, %v1638
      %v1640 = vpop.f32.mrb[0].mxu0
      %1641 = vmatprep.mubr.f32.mxu0 0.0
      %1642 = vmatmul.mubr.f32.gmra.mrb[0].mxu0 %v1438
      %v1643 = vpop.f32.mrb[0].mxu0
      %v1644 = vadd.f32 0.0, %v1643
      %v1645 = vpop.f32.mrb[0].mxu0
      %1646 = vmatprep.mubr.f32.mxu0 0.0
      %1647 = vmatmul.mubr.f32.gmra.mrb[0].mxu0 %v1441
      %v1648 = vpop.f32.mrb[0].mxu0
      %v1649 = vadd.f32 0.0, %v1648
      %v1650 = vpop.f32.mrb[0].mxu0
      %1651 = vmatprep.mubr.f32.mxu0 0.0
      %1652 = vmatmul.mubr.f32.gmra.mrb[0].mxu0 %v1444
      %v1653 = vpop.f32.mrb[0].mxu0
      %v1654 = vadd.f32 0.0, %v1653
      %v1655 = vpop.f32.mrb[0].mxu0
      %1656 = vmatprep.mubr.f32.mxu0 0.0
      %1657 = vmatmul.mubr.f32.gmra.mrb[0].mxu0 %v1447
      %v1658 = vpop.f32.mrb[0].mxu0
      %v1659 = vadd.f32 0.0, %v1658
      %v1660 = vpop.f32.mrb[0].mxu0
      %1661 = vmatprep.mubr.f32.mxu0 0.0
      %1662 = vmatmul.mubr.f32.gmra.mrb[0].mxu0 %v1450
      %v1663 = vpop.f32.mrb[0].mxu0
      %v1664 = vadd.f32 0.0, %v1663
      %v1665 = vpop.f32.mrb[0].mxu0
      %1666 = vmatprep.mubr.f32.mxu0 0.0
      %1667 = vmatmul.mubr.f32.gmra.mrb[0].mxu0 %v1453
      %v1668 = vpop.f32.mrb[0].mxu0
      %v1669 = vadd.f32 0.0, %v1668
      %v1670 = vpop.f32.mrb[0].mxu0
      %1671 = vmatprep.mubr.f32.mxu0 0.0
      %1672 = vmatmul.mubr.f32.gmra.mrb[0].mxu0 %v1456
      %v1673 = vpop.f32.mrb[0].mxu0
      %v1674 = vadd.f32 0.0, %v1673
      %v1675 = vpop.f32.mrb[0].mxu0
      %1676 = vmatprep.mubr.f32.mxu0 0.0
      %1677 = vmatmul.mubr.f32.gmra.mrb[0].mxu0 %v1459
      %v1678 = vpop.f32.mrb[0].mxu0
      %v1679 = vadd.f32 0.0, %v1678
      %v1680 = vpop.f32.mrb[0].mxu0
      %1681 = vmatprep.mubr.f32.mxu0 0.0
      %1682 = vmatmul.mubr.f32.gmra.mrb[0].mxu0 %v1462
      %v1683 = vpop.f32.mrb[0].mxu0
      %v1684 = vadd.f32 0.0, %v1683
      %v1685 = vpop.f32.mrb[0].mxu0
      %1686 = vmatprep.mubr.f32.mxu0 0.0
      %1687 = vmatmul.mubr.f32.gmra.mrb[0].mxu0 %v1465
      %v1688 = vpop.f32.mrb[0].mxu0
      %v1689 = vadd.f32 0.0, %v1688
      %v1690 = vpop.f32.mrb[0].mxu0
      %1691 = vmatprep.mubr.f32.mxu0 0.0
      %1692 = vmatmul.mubr.f32.gmra.mrb[0].mxu0 %v1468
      %v1693 = vpop.f32.mrb[0].mxu0
      %v1694 = vadd.f32 0.0, %v1693
      %v1695 = vpop.f32.mrb[0].mxu0
      %1696 = vmatprep.mubr.f32.mxu0 0.0
      %1697 = vmatmul.mubr.f32.gmra.mrb[0].mxu0 %v1471
      %v1698 = vpop.f32.mrb[0].mxu0
      %v1699 = vadd.f32 0.0, %v1698
      %v1700 = vpop.f32.mrb[0].mxu0
      %1701 = vmatprep.mubr.f32.mxu0 0.0
      %1702 = vmatmul.mubr.f32.gmra.mrb[0].mxu0 %v1474
      %v1703 = vpop.f32.mrb[0].mxu0
      %v1704 = vadd.f32 0.0, %v1703
      %v1705 = vpop.f32.mrb[0].mxu0
      %1706 = vmatprep.mubr.f32.mxu0 0.0
      %1707 = vmatmul.mubr.f32.gmra.mrb[0].mxu0 %v1477
      %v1708 = vpop.f32.mrb[0].mxu0
      %v1709 = vadd.f32 0.0, %v1708
      %v1710 = vpop.f32.mrb[0].mxu0
      %1711 = vmatprep.mubr.f32.mxu0 0.0
      %1712 = vmatmul.mubr.f32.gmra.mrb[0].mxu0 %v1480
      %v1713 = vpop.f32.mrb[0].mxu0
      %v1714 = vadd.f32 0.0, %v1713
      %v1715 = vpop.f32.mrb[0].mxu0
      %1716 = vdwg.mxu0
      %v1717 = vadd.f32 %v1305, %v1549
      %v1718 = vadd.f32 %v1306, %v1554
      %v1719 = vadd.f32 %v1307, %v1559
      %v1720 = vadd.f32 %v1308, %v1564
      %v1721 = vadd.f32 %v1309, %v1569
      %v1722 = vadd.f32 %v1310, %v1574
      %v1723 = vadd.f32 %v1311, %v1579
      %v1724 = vadd.f32 %v1312, %v1584
      %v1725 = vadd.f32 %v1313, %v1589
      %v1726 = vadd.f32 %v1314, %v1594
      %v1727 = vadd.f32 %v1315, %v1599
      %v1728 = vadd.f32 %v1316, %v1604
      %v1729 = vadd.f32 %v1317, %v1609
      %v1730 = vadd.f32 %v1318, %v1614
      %v1731 = vadd.f32 %v1319, %v1619
      %v1732 = vadd.f32 %v1320, %v1624
      %v1733 = vadd.f32 %v1321, %v1629
      %v1734 = vadd.f32 %v1322, %v1634
      %v1735 = vadd.f32 %v1323, %v1639
      %v1736 = vadd.f32 %v1324, %v1644
      %v1737 = vadd.f32 %v1325, %v1649
      %v1738 = vadd.f32 %v1326, %v1654
      %v1739 = vadd.f32 %v1327, %v1659
      %v1740 = vadd.f32 %v1328, %v1664
      %v1741 = vadd.f32 %v1329, %v1669
      %v1742 = vadd.f32 %v1330, %v1674
      %v1743 = vadd.f32 %v1331, %v1679
      %v1744 = vadd.f32 %v1332, %v1684
      %v1745 = vadd.f32 %v1333, %v1689
      %v1746 = vadd.f32 %v1334, %v1694
      %v1747 = vadd.f32 %v1335, %v1699
      %v1748 = vadd.f32 %v1336, %v1704
      %v1749 = vadd.f32 %v1337, %v1709
      %v1750 = vadd.f32 %v1338, %v1714
      %v1751 = vld [vmem:[%s165 + $0x23] sm:$0xff]
      %v1752 = vld [vmem:[%s165 + $0x2b] sm:$0xff]
      %v1753 = vld [vmem:[%s165 + $0x33] sm:$0xff]
      %v1754 = vld [vmem:[%s165 + $0x3b] sm:$0xff]
      %v1755 = vld [vmem:[%s165 + $0x43] sm:$0xff]
      %v1756 = vld [vmem:[%s165 + $0x4b] sm:$0xff]
      %v1757 = vld [vmem:[%s165 + $0x53] sm:$0xff]
      %v1758 = vld [vmem:[%s165 + $0x5b] sm:$0xff]
      %v1759 = vld [vmem:[%s165 + $0x63] sm:$0xff]
      %v1760 = vld [vmem:[%s165 + $0x6b] sm:$0xff]
      %v1761 = vld [vmem:[%s165 + $0x73] sm:$0xff]
      %v1762 = vld [vmem:[%s165 + $0x7b] sm:$0xff]
      %v1763 = vld [vmem:[%s165 + $0x83] sm:$0xff]
      %v1764 = vld [vmem:[%s165 + $0x8b] sm:$0xff]
      %v1765 = vld [vmem:[%s165 + $0x93] sm:$0xff]
      %v1766 = vld [vmem:[%s165 + $0x9b] sm:$0xff]
      %v1767 = vld [vmem:[%s165 + $0xa3] sm:$0xff]
      %v1768 = vld [vmem:[%s165 + $0xab] sm:$0xff]
      %v1769 = vld [vmem:[%s165 + $0xb3] sm:$0xff]
      %v1770 = vld [vmem:[%s165 + $0xbb] sm:$0xff]
      %v1771 = vld [vmem:[%s165 + $0xc3] sm:$0xff]
      %v1772 = vld [vmem:[%s165 + $0xcb] sm:$0xff]
      %v1773 = vld [vmem:[%s165 + $0xd3] sm:$0xff]
      %v1774 = vld [vmem:[%s165 + $0xdb] sm:$0xff]
      %v1775 = vld [vmem:[%s165 + $0xe3] sm:$0xff]
      %v1776 = vld [vmem:[%s165 + $0xeb] sm:$0xff]
      %v1777 = vld [vmem:[%s165 + $0xf3] sm:$0xff]
      %v1778 = vld [vmem:[%s165 + $0xfb] sm:$0xff]
      %v1779 = vld [vmem:[%s165 + $0x103] sm:$0xff]
      %v1780 = vld [vmem:[%s165 + $0x10b] sm:$0xff]
      %v1781 = vld [vmem:[%s165 + $0x113] sm:$0xff]
      %v1782 = vld [vmem:[%s165 + $0x11b] sm:$0xff]
      %v1783 = vld [vmem:[%s165 + $0x123] sm:$0xff]
      %v1784 = vld [vmem:[%s165 + $0x12b] sm:$0xff]
      %s1785 = scalar_lea.vmem %s1, 192
      %v1786 = vld [vmem:[%s1785] sm:$0xff]
      %v1787 = vld [vmem:[%s1785 + $0x8] sm:$0xff]
      %v1788 = vld [vmem:[%s1785 + $0x10] sm:$0xff]
      %v1789 = vld [vmem:[%s1785 + $0x18] sm:$0xff]
      %v1790 = vld [vmem:[%s1785 + $0x20] sm:$0xff]
      %v1791 = vld [vmem:[%s1785 + $0x28] sm:$0xff]
      %v1793 = vsel %vm252, %v1751, 0
      %v1796 = vsel %vm252, %v1752, 0
      %v1799 = vsel %vm252, %v1753, 0
      %v1802 = vsel %vm252, %v1754, 0
      %v1805 = vsel %vm252, %v1755, 0
      %v1808 = vsel %vm252, %v1756, 0
      %v1811 = vsel %vm252, %v1757, 0
      %v1814 = vsel %vm252, %v1758, 0
      %v1817 = vsel %vm252, %v1759, 0
      %v1820 = vsel %vm252, %v1760, 0
      %v1823 = vsel %vm252, %v1761, 0
      %v1826 = vsel %vm252, %v1762, 0
      %v1829 = vsel %vm252, %v1763, 0
      %v1832 = vsel %vm252, %v1764, 0
      %v1835 = vsel %vm252, %v1765, 0
      %v1838 = vsel %vm252, %v1766, 0
      %v1841 = vsel %vm252, %v1767, 0
      %v1844 = vsel %vm252, %v1768, 0
      %v1847 = vsel %vm252, %v1769, 0
      %v1850 = vsel %vm252, %v1770, 0
      %v1853 = vsel %vm252, %v1771, 0
      %v1856 = vsel %vm252, %v1772, 0
      %v1859 = vsel %vm252, %v1773, 0
      %v1862 = vsel %vm252, %v1774, 0
      %v1865 = vsel %vm252, %v1775, 0
      %v1868 = vsel %vm252, %v1776, 0
      %v1871 = vsel %vm252, %v1777, 0
      %v1874 = vsel %vm252, %v1778, 0
      %v1877 = vsel %vm252, %v1779, 0
      %v1880 = vsel %vm252, %v1780, 0
      %v1883 = vsel %vm252, %v1781, 0
      %v1886 = vsel %vm252, %v1782, 0
      %v1889 = vsel %vm252, %v1783, 0
      %v1892 = vsel %vm252, %v1784, 0
      %1894 = vmatprep.subr.mxu0 0.0
      %1895 = vmatpush1.msra.mxu0 %v1786
      %1896 = vmatprep.subr.mxu0 0.0
      %1897 = vmatpush1.msra.mxu0 %v1787
      %1898 = vmatprep.subr.mxu0 0.0
      %1899 = vmatpush1.msra.mxu0 %v1788
      %1900 = vmatprep.subr.mxu0 0.0
      %1901 = vmatpush1.msra.mxu0 %v1789
      %1902 = vmatprep.subr.mxu0 0.0
      %1903 = vmatpush1.msra.mxu0 %v1790
      %1904 = vmatprep.subr.mxu0 0.0
      %1905 = vmatpush1.msra.mxu0 %v1791
      %1906 = vmatprep.subr.mxu0 0.0
      %1907 = vmatpush1.msra.mxu0 0.0
      %1908 = vmatprep.subr.mxu0 0.0
      %1909 = vmatpush1.msra.mxu0 0.0
      %1910 = vmatprep.subr.mxu0 0.0
      %1911 = vmatpush1.msra.mxu0 0.0
      %1912 = vmatprep.subr.mxu0 0.0
      %1913 = vmatpush1.msra.mxu0 0.0
      %1914 = vmatprep.subr.mxu0 0.0
      %1915 = vmatpush1.msra.mxu0 0.0
      %1916 = vmatprep.subr.mxu0 0.0
      %1917 = vmatpush1.msra.mxu0 0.0
      %1918 = vmatprep.subr.mxu0 0.0
      %1919 = vmatpush1.msra.mxu0 0.0
      %1920 = vmatprep.subr.mxu0 0.0
      %1921 = vmatpush1.msra.mxu0 0.0
      %1922 = vmatprep.subr.mxu0 0.0
      %1923 = vmatpush1.msra.mxu0 0.0
      %1924 = vmatprep.subr.mxu0 0.0
      %1925 = vmatpush1.msra.mxu0 0.0
      %1926 = vmatprep.subr.mxu0 0.0
      %1927 = vmatpush1.msra.mxu0 0.0
      %1928 = vmatprep.subr.mxu0 0.0
      %1929 = vmatpush1.msra.mxu0 0.0
      %1930 = vmatprep.subr.mxu0 0.0
      %1931 = vmatpush1.msra.mxu0 0.0
      %1932 = vmatprep.subr.mxu0 0.0
      %1933 = vmatpush1.msra.mxu0 0.0
      %1934 = vmatprep.subr.mxu0 0.0
      %1935 = vmatpush1.msra.mxu0 0.0
      %1936 = vmatprep.subr.mxu0 0.0
      %1937 = vmatpush1.msra.mxu0 0.0
      %1938 = vmatprep.subr.mxu0 0.0
      %1939 = vmatpush1.msra.mxu0 0.0
      %1940 = vmatprep.subr.mxu0 0.0
      %1941 = vmatpush1.msra.mxu0 0.0
      %1942 = vmatprep.subr.mxu0 0.0
      %1943 = vmatpush1.msra.mxu0 0.0
      %1944 = vmatprep.subr.mxu0 0.0
      %1945 = vmatpush1.msra.mxu0 0.0
      %1946 = vmatprep.subr.mxu0 0.0
      %1947 = vmatpush1.msra.mxu0 0.0
      %1948 = vmatprep.subr.mxu0 0.0
      %1949 = vmatpush1.msra.mxu0 0.0
      %1950 = vmatprep.subr.mxu0 0.0
      %1951 = vmatpush1.msra.mxu0 0.0
      %1952 = vmatprep.subr.mxu0 0.0
      %1953 = vmatpush1.msra.mxu0 0.0
      %1954 = vmatprep.subr.mxu0 0.0
      %1955 = vmatpush1.msra.mxu0 0.0
      %1956 = vmatprep.subr.mxu0 0.0
      %1957 = vmatpush1.msra.mxu0 0.0
      %1958 = vmatprep.mubr.f32.mxu0 0.0
      %1959 = vmatmul.mubr.f32.gmra.mrb[0].mxu0 %v1793
      %v1960 = vpop.f32.mrb[0].mxu0
      %v1961 = vadd.f32 0.0, %v1960
      %v1962 = vpop.f32.mrb[0].mxu0
      %1963 = vmatprep.mubr.f32.mxu0 0.0
      %1964 = vmatmul.mubr.f32.gmra.mrb[0].mxu0 %v1796
      %v1965 = vpop.f32.mrb[0].mxu0
      %v1966 = vadd.f32 0.0, %v1965
      %v1967 = vpop.f32.mrb[0].mxu0
      %1968 = vmatprep.mubr.f32.mxu0 0.0
      %1969 = vmatmul.mubr.f32.gmra.mrb[0].mxu0 %v1799
      %v1970 = vpop.f32.mrb[0].mxu0
      %v1971 = vadd.f32 0.0, %v1970
      %v1972 = vpop.f32.mrb[0].mxu0
      %1973 = vmatprep.mubr.f32.mxu0 0.0
      %1974 = vmatmul.mubr.f32.gmra.mrb[0].mxu0 %v1802
      %v1975 = vpop.f32.mrb[0].mxu0
      %v1976 = vadd.f32 0.0, %v1975
      %v1977 = vpop.f32.mrb[0].mxu0
      %1978 = vmatprep.mubr.f32.mxu0 0.0
      %1979 = vmatmul.mubr.f32.gmra.mrb[0].mxu0 %v1805
      %v1980 = vpop.f32.mrb[0].mxu0
      %v1981 = vadd.f32 0.0, %v1980
      %v1982 = vpop.f32.mrb[0].mxu0
      %1983 = vmatprep.mubr.f32.mxu0 0.0
      %1984 = vmatmul.mubr.f32.gmra.mrb[0].mxu0 %v1808
      %v1985 = vpop.f32.mrb[0].mxu0
      %v1986 = vadd.f32 0.0, %v1985
      %v1987 = vpop.f32.mrb[0].mxu0
      %1988 = vmatprep.mubr.f32.mxu0 0.0
      %1989 = vmatmul.mubr.f32.gmra.mrb[0].mxu0 %v1811
      %v1990 = vpop.f32.mrb[0].mxu0
      %v1991 = vadd.f32 0.0, %v1990
      %v1992 = vpop.f32.mrb[0].mxu0
      %1993 = vmatprep.mubr.f32.mxu0 0.0
      %1994 = vmatmul.mubr.f32.gmra.mrb[0].mxu0 %v1814
      %v1995 = vpop.f32.mrb[0].mxu0
      %v1996 = vadd.f32 0.0, %v1995
      %v1997 = vpop.f32.mrb[0].mxu0
      %1998 = vmatprep.mubr.f32.mxu0 0.0
      %1999 = vmatmul.mubr.f32.gmra.mrb[0].mxu0 %v1817
      %v2000 = vpop.f32.mrb[0].mxu0
      %v2001 = vadd.f32 0.0, %v2000
      %v2002 = vpop.f32.mrb[0].mxu0
      %2003 = vmatprep.mubr.f32.mxu0 0.0
      %2004 = vmatmul.mubr.f32.gmra.mrb[0].mxu0 %v1820
      %v2005 = vpop.f32.mrb[0].mxu0
      %v2006 = vadd.f32 0.0, %v2005
      %v2007 = vpop.f32.mrb[0].mxu0
      %2008 = vmatprep.mubr.f32.mxu0 0.0
      %2009 = vmatmul.mubr.f32.gmra.mrb[0].mxu0 %v1823
      %v2010 = vpop.f32.mrb[0].mxu0
      %v2011 = vadd.f32 0.0, %v2010
      %v2012 = vpop.f32.mrb[0].mxu0
      %2013 = vmatprep.mubr.f32.mxu0 0.0
      %2014 = vmatmul.mubr.f32.gmra.mrb[0].mxu0 %v1826
      %v2015 = vpop.f32.mrb[0].mxu0
      %v2016 = vadd.f32 0.0, %v2015
      %v2017 = vpop.f32.mrb[0].mxu0
      %2018 = vmatprep.mubr.f32.mxu0 0.0
      %2019 = vmatmul.mubr.f32.gmra.mrb[0].mxu0 %v1829
      %v2020 = vpop.f32.mrb[0].mxu0
      %v2021 = vadd.f32 0.0, %v2020
      %v2022 = vpop.f32.mrb[0].mxu0
      %2023 = vmatprep.mubr.f32.mxu0 0.0
      %2024 = vmatmul.mubr.f32.gmra.mrb[0].mxu0 %v1832
      %v2025 = vpop.f32.mrb[0].mxu0
      %v2026 = vadd.f32 0.0, %v2025
      %v2027 = vpop.f32.mrb[0].mxu0
      %2028 = vmatprep.mubr.f32.mxu0 0.0
      %2029 = vmatmul.mubr.f32.gmra.mrb[0].mxu0 %v1835
      %v2030 = vpop.f32.mrb[0].mxu0
      %v2031 = vadd.f32 0.0, %v2030
      %v2032 = vpop.f32.mrb[0].mxu0
      %2033 = vmatprep.mubr.f32.mxu0 0.0
      %2034 = vmatmul.mubr.f32.gmra.mrb[0].mxu0 %v1838
      %v2035 = vpop.f32.mrb[0].mxu0
      %v2036 = vadd.f32 0.0, %v2035
      %v2037 = vpop.f32.mrb[0].mxu0
      %2038 = vmatprep.mubr.f32.mxu0 0.0
      %2039 = vmatmul.mubr.f32.gmra.mrb[0].mxu0 %v1841
      %v2040 = vpop.f32.mrb[0].mxu0
      %v2041 = vadd.f32 0.0, %v2040
      %v2042 = vpop.f32.mrb[0].mxu0
      %2043 = vmatprep.mubr.f32.mxu0 0.0
      %2044 = vmatmul.mubr.f32.gmra.mrb[0].mxu0 %v1844
      %v2045 = vpop.f32.mrb[0].mxu0
      %v2046 = vadd.f32 0.0, %v2045
      %v2047 = vpop.f32.mrb[0].mxu0
      %2048 = vmatprep.mubr.f32.mxu0 0.0
      %2049 = vmatmul.mubr.f32.gmra.mrb[0].mxu0 %v1847
      %v2050 = vpop.f32.mrb[0].mxu0
      %v2051 = vadd.f32 0.0, %v2050
      %v2052 = vpop.f32.mrb[0].mxu0
      %2053 = vmatprep.mubr.f32.mxu0 0.0
      %2054 = vmatmul.mubr.f32.gmra.mrb[0].mxu0 %v1850
      %v2055 = vpop.f32.mrb[0].mxu0
      %v2056 = vadd.f32 0.0, %v2055
      %v2057 = vpop.f32.mrb[0].mxu0
      %2058 = vmatprep.mubr.f32.mxu0 0.0
      %2059 = vmatmul.mubr.f32.gmra.mrb[0].mxu0 %v1853
      %v2060 = vpop.f32.mrb[0].mxu0
      %v2061 = vadd.f32 0.0, %v2060
      %v2062 = vpop.f32.mrb[0].mxu0
      %2063 = vmatprep.mubr.f32.mxu0 0.0
      %2064 = vmatmul.mubr.f32.gmra.mrb[0].mxu0 %v1856
      %v2065 = vpop.f32.mrb[0].mxu0
      %v2066 = vadd.f32 0.0, %v2065
      %v2067 = vpop.f32.mrb[0].mxu0
      %2068 = vmatprep.mubr.f32.mxu0 0.0
      %2069 = vmatmul.mubr.f32.gmra.mrb[0].mxu0 %v1859
      %v2070 = vpop.f32.mrb[0].mxu0
      %v2071 = vadd.f32 0.0, %v2070
      %v2072 = vpop.f32.mrb[0].mxu0
      %2073 = vmatprep.mubr.f32.mxu0 0.0
      %2074 = vmatmul.mubr.f32.gmra.mrb[0].mxu0 %v1862
      %v2075 = vpop.f32.mrb[0].mxu0
      %v2076 = vadd.f32 0.0, %v2075
      %v2077 = vpop.f32.mrb[0].mxu0
      %2078 = vmatprep.mubr.f32.mxu0 0.0
      %2079 = vmatmul.mubr.f32.gmra.mrb[0].mxu0 %v1865
      %v2080 = vpop.f32.mrb[0].mxu0
      %v2081 = vadd.f32 0.0, %v2080
      %v2082 = vpop.f32.mrb[0].mxu0
      %2083 = vmatprep.mubr.f32.mxu0 0.0
      %2084 = vmatmul.mubr.f32.gmra.mrb[0].mxu0 %v1868
      %v2085 = vpop.f32.mrb[0].mxu0
      %v2086 = vadd.f32 0.0, %v2085
      %v2087 = vpop.f32.mrb[0].mxu0
      %2088 = vmatprep.mubr.f32.mxu0 0.0
      %2089 = vmatmul.mubr.f32.gmra.mrb[0].mxu0 %v1871
      %v2090 = vpop.f32.mrb[0].mxu0
      %v2091 = vadd.f32 0.0, %v2090
      %v2092 = vpop.f32.mrb[0].mxu0
      %2093 = vmatprep.mubr.f32.mxu0 0.0
      %2094 = vmatmul.mubr.f32.gmra.mrb[0].mxu0 %v1874
      %v2095 = vpop.f32.mrb[0].mxu0
      %v2096 = vadd.f32 0.0, %v2095
      %v2097 = vpop.f32.mrb[0].mxu0
      %2098 = vmatprep.mubr.f32.mxu0 0.0
      %2099 = vmatmul.mubr.f32.gmra.mrb[0].mxu0 %v1877
      %v2100 = vpop.f32.mrb[0].mxu0
      %v2101 = vadd.f32 0.0, %v2100
      %v2102 = vpop.f32.mrb[0].mxu0
      %2103 = vmatprep.mubr.f32.mxu0 0.0
      %2104 = vmatmul.mubr.f32.gmra.mrb[0].mxu0 %v1880
      %v2105 = vpop.f32.mrb[0].mxu0
      %v2106 = vadd.f32 0.0, %v2105
      %v2107 = vpop.f32.mrb[0].mxu0
      %2108 = vmatprep.mubr.f32.mxu0 0.0
      %2109 = vmatmul.mubr.f32.gmra.mrb[0].mxu0 %v1883
      %v2110 = vpop.f32.mrb[0].mxu0
      %v2111 = vadd.f32 0.0, %v2110
      %v2112 = vpop.f32.mrb[0].mxu0
      %2113 = vmatprep.mubr.f32.mxu0 0.0
      %2114 = vmatmul.mubr.f32.gmra.mrb[0].mxu0 %v1886
      %v2115 = vpop.f32.mrb[0].mxu0
      %v2116 = vadd.f32 0.0, %v2115
      %v2117 = vpop.f32.mrb[0].mxu0
      %2118 = vmatprep.mubr.f32.mxu0 0.0
      %2119 = vmatmul.mubr.f32.gmra.mrb[0].mxu0 %v1889
      %v2120 = vpop.f32.mrb[0].mxu0
      %v2121 = vadd.f32 0.0, %v2120
      %v2122 = vpop.f32.mrb[0].mxu0
      %2123 = vmatprep.mubr.f32.mxu0 0.0
      %2124 = vmatmul.mubr.f32.gmra.mrb[0].mxu0 %v1892
      %v2125 = vpop.f32.mrb[0].mxu0
      %v2126 = vadd.f32 0.0, %v2125
      %v2127 = vpop.f32.mrb[0].mxu0
      %2128 = vdwg.mxu0
      %v2129 = vadd.f32 %v1717, %v1961
      %v2130 = vadd.f32 %v1718, %v1966
      %v2131 = vadd.f32 %v1719, %v1971
      %v2132 = vadd.f32 %v1720, %v1976
      %v2133 = vadd.f32 %v1721, %v1981
      %v2134 = vadd.f32 %v1722, %v1986
      %v2135 = vadd.f32 %v1723, %v1991
      %v2136 = vadd.f32 %v1724, %v1996
      %v2137 = vadd.f32 %v1725, %v2001
      %v2138 = vadd.f32 %v1726, %v2006
      %v2139 = vadd.f32 %v1727, %v2011
      %v2140 = vadd.f32 %v1728, %v2016
      %v2141 = vadd.f32 %v1729, %v2021
      %v2142 = vadd.f32 %v1730, %v2026
      %v2143 = vadd.f32 %v1731, %v2031
      %v2144 = vadd.f32 %v1732, %v2036
      %v2145 = vadd.f32 %v1733, %v2041
      %v2146 = vadd.f32 %v1734, %v2046
      %v2147 = vadd.f32 %v1735, %v2051
      %v2148 = vadd.f32 %v1736, %v2056
      %v2149 = vadd.f32 %v1737, %v2061
      %v2150 = vadd.f32 %v1738, %v2066
      %v2151 = vadd.f32 %v1739, %v2071
      %v2152 = vadd.f32 %v1740, %v2076
      %v2153 = vadd.f32 %v1741, %v2081
      %v2154 = vadd.f32 %v1742, %v2086
      %v2155 = vadd.f32 %v1743, %v2091
      %v2156 = vadd.f32 %v1744, %v2096
      %v2157 = vadd.f32 %v1745, %v2101
      %v2158 = vadd.f32 %v1746, %v2106
      %v2159 = vadd.f32 %v1747, %v2111
      %v2160 = vadd.f32 %v1748, %v2116
      %v2161 = vadd.f32 %v1749, %v2121
      %v2162 = vadd.f32 %v1750, %v2126
      %v2163 = vld [vmem:[%s165 + $0x24] sm:$0xff]
      %v2164 = vld [vmem:[%s165 + $0x2c] sm:$0xff]
      %v2165 = vld [vmem:[%s165 + $0x34] sm:$0xff]
      %v2166 = vld [vmem:[%s165 + $0x3c] sm:$0xff]
      %v2167 = vld [vmem:[%s165 + $0x44] sm:$0xff]
      %v2168 = vld [vmem:[%s165 + $0x4c] sm:$0xff]
      %v2169 = vld [vmem:[%s165 + $0x54] sm:$0xff]
      %v2170 = vld [vmem:[%s165 + $0x5c] sm:$0xff]
      %v2171 = vld [vmem:[%s165 + $0x64] sm:$0xff]
      %v2172 = vld [vmem:[%s165 + $0x6c] sm:$0xff]
      %v2173 = vld [vmem:[%s165 + $0x74] sm:$0xff]
      %v2174 = vld [vmem:[%s165 + $0x7c] sm:$0xff]
      %v2175 = vld [vmem:[%s165 + $0x84] sm:$0xff]
      %v2176 = vld [vmem:[%s165 + $0x8c] sm:$0xff]
      %v2177 = vld [vmem:[%s165 + $0x94] sm:$0xff]
      %v2178 = vld [vmem:[%s165 + $0x9c] sm:$0xff]
      %v2179 = vld [vmem:[%s165 + $0xa4] sm:$0xff]
      %v2180 = vld [vmem:[%s165 + $0xac] sm:$0xff]
      %v2181 = vld [vmem:[%s165 + $0xb4] sm:$0xff]
      %v2182 = vld [vmem:[%s165 + $0xbc] sm:$0xff]
      %v2183 = vld [vmem:[%s165 + $0xc4] sm:$0xff]
      %v2184 = vld [vmem:[%s165 + $0xcc] sm:$0xff]
      %v2185 = vld [vmem:[%s165 + $0xd4] sm:$0xff]
      %v2186 = vld [vmem:[%s165 + $0xdc] sm:$0xff]
      %v2187 = vld [vmem:[%s165 + $0xe4] sm:$0xff]
      %v2188 = vld [vmem:[%s165 + $0xec] sm:$0xff]
      %v2189 = vld [vmem:[%s165 + $0xf4] sm:$0xff]
      %v2190 = vld [vmem:[%s165 + $0xfc] sm:$0xff]
      %v2191 = vld [vmem:[%s165 + $0x104] sm:$0xff]
      %v2192 = vld [vmem:[%s165 + $0x10c] sm:$0xff]
      %v2193 = vld [vmem:[%s165 + $0x114] sm:$0xff]
      %v2194 = vld [vmem:[%s165 + $0x11c] sm:$0xff]
      %v2195 = vld [vmem:[%s165 + $0x124] sm:$0xff]
      %v2196 = vld [vmem:[%s165 + $0x12c] sm:$0xff]
      %s2197 = scalar_lea.vmem %s1, 240
      %v2198 = vld [vmem:[%s2197] sm:$0xff]
      %v2199 = vld [vmem:[%s2197 + $0x8] sm:$0xff]
      %v2200 = vld [vmem:[%s2197 + $0x10] sm:$0xff]
      %v2201 = vld [vmem:[%s2197 + $0x18] sm:$0xff]
      %v2202 = vld [vmem:[%s2197 + $0x20] sm:$0xff]
      %v2203 = vld [vmem:[%s2197 + $0x28] sm:$0xff]
      %v2205 = vsel %vm252, %v2163, 0
      %v2208 = vsel %vm252, %v2164, 0
      %v2211 = vsel %vm252, %v2165, 0
      %v2214 = vsel %vm252, %v2166, 0
      %v2217 = vsel %vm252, %v2167, 0
      %v2220 = vsel %vm252, %v2168, 0
      %v2223 = vsel %vm252, %v2169, 0
      %v2226 = vsel %vm252, %v2170, 0
      %v2229 = vsel %vm252, %v2171, 0
      %v2232 = vsel %vm252, %v2172, 0
      %v2235 = vsel %vm252, %v2173, 0
      %v2238 = vsel %vm252, %v2174, 0
      %v2241 = vsel %vm252, %v2175, 0
      %v2244 = vsel %vm252, %v2176, 0
      %v2247 = vsel %vm252, %v2177, 0
      %v2250 = vsel %vm252, %v2178, 0
      %v2253 = vsel %vm252, %v2179, 0
      %v2256 = vsel %vm252, %v2180, 0
      %v2259 = vsel %vm252, %v2181, 0
      %v2262 = vsel %vm252, %v2182, 0
      %v2265 = vsel %vm252, %v2183, 0
      %v2268 = vsel %vm252, %v2184, 0
      %v2271 = vsel %vm252, %v2185, 0
      %v2274 = vsel %vm252, %v2186, 0
      %v2277 = vsel %vm252, %v2187, 0
      %v2280 = vsel %vm252, %v2188, 0
      %v2283 = vsel %vm252, %v2189, 0
      %v2286 = vsel %vm252, %v2190, 0
      %v2289 = vsel %vm252, %v2191, 0
      %v2292 = vsel %vm252, %v2192, 0
      %v2295 = vsel %vm252, %v2193, 0
      %v2298 = vsel %vm252, %v2194, 0
      %v2301 = vsel %vm252, %v2195, 0
      %v2304 = vsel %vm252, %v2196, 0
      %2306 = vmatprep.subr.mxu0 0.0
      %2307 = vmatpush1.msra.mxu0 %v2198
      %2308 = vmatprep.subr.mxu0 0.0
      %2309 = vmatpush1.msra.mxu0 %v2199
      %2310 = vmatprep.subr.mxu0 0.0
      %2311 = vmatpush1.msra.mxu0 %v2200
      %2312 = vmatprep.subr.mxu0 0.0
      %2313 = vmatpush1.msra.mxu0 %v2201
      %2314 = vmatprep.subr.mxu0 0.0
      %2315 = vmatpush1.msra.mxu0 %v2202
      %2316 = vmatprep.subr.mxu0 0.0
      %2317 = vmatpush1.msra.mxu0 %v2203
      %2318 = vmatprep.subr.mxu0 0.0
      %2319 = vmatpush1.msra.mxu0 0.0
      %2320 = vmatprep.subr.mxu0 0.0
      %2321 = vmatpush1.msra.mxu0 0.0
      %2322 = vmatprep.subr.mxu0 0.0
      %2323 = vmatpush1.msra.mxu0 0.0
      %2324 = vmatprep.subr.mxu0 0.0
      %2325 = vmatpush1.msra.mxu0 0.0
      %2326 = vmatprep.subr.mxu0 0.0
      %2327 = vmatpush1.msra.mxu0 0.0
      %2328 = vmatprep.subr.mxu0 0.0
      %2329 = vmatpush1.msra.mxu0 0.0
      %2330 = vmatprep.subr.mxu0 0.0
      %2331 = vmatpush1.msra.mxu0 0.0
      %2332 = vmatprep.subr.mxu0 0.0
      %2333 = vmatpush1.msra.mxu0 0.0
      %2334 = vmatprep.subr.mxu0 0.0
      %2335 = vmatpush1.msra.mxu0 0.0
      %2336 = vmatprep.subr.mxu0 0.0
      %2337 = vmatpush1.msra.mxu0 0.0
      %2338 = vmatprep.subr.mxu0 0.0
      %2339 = vmatpush1.msra.mxu0 0.0
      %2340 = vmatprep.subr.mxu0 0.0
      %2341 = vmatpush1.msra.mxu0 0.0
      %2342 = vmatprep.subr.mxu0 0.0
      %2343 = vmatpush1.msra.mxu0 0.0
      %2344 = vmatprep.subr.mxu0 0.0
      %2345 = vmatpush1.msra.mxu0 0.0
      %2346 = vmatprep.subr.mxu0 0.0
      %2347 = vmatpush1.msra.mxu0 0.0
      %2348 = vmatprep.subr.mxu0 0.0
      %2349 = vmatpush1.msra.mxu0 0.0
      %2350 = vmatprep.subr.mxu0 0.0
      %2351 = vmatpush1.msra.mxu0 0.0
      %2352 = vmatprep.subr.mxu0 0.0
      %2353 = vmatpush1.msra.mxu0 0.0
      %2354 = vmatprep.subr.mxu0 0.0
      %2355 = vmatpush1.msra.mxu0 0.0
      %2356 = vmatprep.subr.mxu0 0.0
      %2357 = vmatpush1.msra.mxu0 0.0
      %2358 = vmatprep.subr.mxu0 0.0
      %2359 = vmatpush1.msra.mxu0 0.0
      %2360 = vmatprep.subr.mxu0 0.0
      %2361 = vmatpush1.msra.mxu0 0.0
      %2362 = vmatprep.subr.mxu0 0.0
      %2363 = vmatpush1.msra.mxu0 0.0
      %2364 = vmatprep.subr.mxu0 0.0
      %2365 = vmatpush1.msra.mxu0 0.0
      %2366 = vmatprep.subr.mxu0 0.0
      %2367 = vmatpush1.msra.mxu0 0.0
      %2368 = vmatprep.subr.mxu0 0.0
      %2369 = vmatpush1.msra.mxu0 0.0
      %2370 = vmatprep.mubr.f32.mxu0 0.0
      %2371 = vmatmul.mubr.f32.gmra.mrb[0].mxu0 %v2205
      %v2372 = vpop.f32.mrb[0].mxu0
      %v2373 = vadd.f32 0.0, %v2372
      %v2374 = vpop.f32.mrb[0].mxu0
      %2375 = vmatprep.mubr.f32.mxu0 0.0
      %2376 = vmatmul.mubr.f32.gmra.mrb[0].mxu0 %v2208
      %v2377 = vpop.f32.mrb[0].mxu0
      %v2378 = vadd.f32 0.0, %v2377
      %v2379 = vpop.f32.mrb[0].mxu0
      %2380 = vmatprep.mubr.f32.mxu0 0.0
      %2381 = vmatmul.mubr.f32.gmra.mrb[0].mxu0 %v2211
      %v2382 = vpop.f32.mrb[0].mxu0
      %v2383 = vadd.f32 0.0, %v2382
      %v2384 = vpop.f32.mrb[0].mxu0
      %2385 = vmatprep.mubr.f32.mxu0 0.0
      %2386 = vmatmul.mubr.f32.gmra.mrb[0].mxu0 %v2214
      %v2387 = vpop.f32.mrb[0].mxu0
      %v2388 = vadd.f32 0.0, %v2387
      %v2389 = vpop.f32.mrb[0].mxu0
      %2390 = vmatprep.mubr.f32.mxu0 0.0
      %2391 = vmatmul.mubr.f32.gmra.mrb[0].mxu0 %v2217
      %v2392 = vpop.f32.mrb[0].mxu0
      %v2393 = vadd.f32 0.0, %v2392
      %v2394 = vpop.f32.mrb[0].mxu0
      %2395 = vmatprep.mubr.f32.mxu0 0.0
      %2396 = vmatmul.mubr.f32.gmra.mrb[0].mxu0 %v2220
      %v2397 = vpop.f32.mrb[0].mxu0
      %v2398 = vadd.f32 0.0, %v2397
      %v2399 = vpop.f32.mrb[0].mxu0
      %2400 = vmatprep.mubr.f32.mxu0 0.0
      %2401 = vmatmul.mubr.f32.gmra.mrb[0].mxu0 %v2223
      %v2402 = vpop.f32.mrb[0].mxu0
      %v2403 = vadd.f32 0.0, %v2402
      %v2404 = vpop.f32.mrb[0].mxu0
      %2405 = vmatprep.mubr.f32.mxu0 0.0
      %2406 = vmatmul.mubr.f32.gmra.mrb[0].mxu0 %v2226
      %v2407 = vpop.f32.mrb[0].mxu0
      %v2408 = vadd.f32 0.0, %v2407
      %v2409 = vpop.f32.mrb[0].mxu0
      %2410 = vmatprep.mubr.f32.mxu0 0.0
      %2411 = vmatmul.mubr.f32.gmra.mrb[0].mxu0 %v2229
      %v2412 = vpop.f32.mrb[0].mxu0
      %v2413 = vadd.f32 0.0, %v2412
      %v2414 = vpop.f32.mrb[0].mxu0
      %2415 = vmatprep.mubr.f32.mxu0 0.0
      %2416 = vmatmul.mubr.f32.gmra.mrb[0].mxu0 %v2232
      %v2417 = vpop.f32.mrb[0].mxu0
      %v2418 = vadd.f32 0.0, %v2417
      %v2419 = vpop.f32.mrb[0].mxu0
      %2420 = vmatprep.mubr.f32.mxu0 0.0
      %2421 = vmatmul.mubr.f32.gmra.mrb[0].mxu0 %v2235
      %v2422 = vpop.f32.mrb[0].mxu0
      %v2423 = vadd.f32 0.0, %v2422
      %v2424 = vpop.f32.mrb[0].mxu0
      %2425 = vmatprep.mubr.f32.mxu0 0.0
      %2426 = vmatmul.mubr.f32.gmra.mrb[0].mxu0 %v2238
      %v2427 = vpop.f32.mrb[0].mxu0
      %v2428 = vadd.f32 0.0, %v2427
      %v2429 = vpop.f32.mrb[0].mxu0
      %2430 = vmatprep.mubr.f32.mxu0 0.0
      %2431 = vmatmul.mubr.f32.gmra.mrb[0].mxu0 %v2241
      %v2432 = vpop.f32.mrb[0].mxu0
      %v2433 = vadd.f32 0.0, %v2432
      %v2434 = vpop.f32.mrb[0].mxu0
      %2435 = vmatprep.mubr.f32.mxu0 0.0
      %2436 = vmatmul.mubr.f32.gmra.mrb[0].mxu0 %v2244
      %v2437 = vpop.f32.mrb[0].mxu0
      %v2438 = vadd.f32 0.0, %v2437
      %v2439 = vpop.f32.mrb[0].mxu0
      %2440 = vmatprep.mubr.f32.mxu0 0.0
      %2441 = vmatmul.mubr.f32.gmra.mrb[0].mxu0 %v2247
      %v2442 = vpop.f32.mrb[0].mxu0
      %v2443 = vadd.f32 0.0, %v2442
      %v2444 = vpop.f32.mrb[0].mxu0
      %2445 = vmatprep.mubr.f32.mxu0 0.0
      %2446 = vmatmul.mubr.f32.gmra.mrb[0].mxu0 %v2250
      %v2447 = vpop.f32.mrb[0].mxu0
      %v2448 = vadd.f32 0.0, %v2447
      %v2449 = vpop.f32.mrb[0].mxu0
      %2450 = vmatprep.mubr.f32.mxu0 0.0
      %2451 = vmatmul.mubr.f32.gmra.mrb[0].mxu0 %v2253
      %v2452 = vpop.f32.mrb[0].mxu0
      %v2453 = vadd.f32 0.0, %v2452
      %v2454 = vpop.f32.mrb[0].mxu0
      %2455 = vmatprep.mubr.f32.mxu0 0.0
      %2456 = vmatmul.mubr.f32.gmra.mrb[0].mxu0 %v2256
      %v2457 = vpop.f32.mrb[0].mxu0
      %v2458 = vadd.f32 0.0, %v2457
      %v2459 = vpop.f32.mrb[0].mxu0
      %2460 = vmatprep.mubr.f32.mxu0 0.0
      %2461 = vmatmul.mubr.f32.gmra.mrb[0].mxu0 %v2259
      %v2462 = vpop.f32.mrb[0].mxu0
      %v2463 = vadd.f32 0.0, %v2462
      %v2464 = vpop.f32.mrb[0].mxu0
      %2465 = vmatprep.mubr.f32.mxu0 0.0
      %2466 = vmatmul.mubr.f32.gmra.mrb[0].mxu0 %v2262
      %v2467 = vpop.f32.mrb[0].mxu0
      %v2468 = vadd.f32 0.0, %v2467
      %v2469 = vpop.f32.mrb[0].mxu0
      %2470 = vmatprep.mubr.f32.mxu0 0.0
      %2471 = vmatmul.mubr.f32.gmra.mrb[0].mxu0 %v2265
      %v2472 = vpop.f32.mrb[0].mxu0
      %v2473 = vadd.f32 0.0, %v2472
      %v2474 = vpop.f32.mrb[0].mxu0
      %2475 = vmatprep.mubr.f32.mxu0 0.0
      %2476 = vmatmul.mubr.f32.gmra.mrb[0].mxu0 %v2268
      %v2477 = vpop.f32.mrb[0].mxu0
      %v2478 = vadd.f32 0.0, %v2477
      %v2479 = vpop.f32.mrb[0].mxu0
      %2480 = vmatprep.mubr.f32.mxu0 0.0
      %2481 = vmatmul.mubr.f32.gmra.mrb[0].mxu0 %v2271
      %v2482 = vpop.f32.mrb[0].mxu0
      %v2483 = vadd.f32 0.0, %v2482
      %v2484 = vpop.f32.mrb[0].mxu0
      %2485 = vmatprep.mubr.f32.mxu0 0.0
      %2486 = vmatmul.mubr.f32.gmra.mrb[0].mxu0 %v2274
      %v2487 = vpop.f32.mrb[0].mxu0
      %v2488 = vadd.f32 0.0, %v2487
      %v2489 = vpop.f32.mrb[0].mxu0
      %2490 = vmatprep.mubr.f32.mxu0 0.0
      %2491 = vmatmul.mubr.f32.gmra.mrb[0].mxu0 %v2277
      %v2492 = vpop.f32.mrb[0].mxu0
      %v2493 = vadd.f32 0.0, %v2492
      %v2494 = vpop.f32.mrb[0].mxu0
      %2495 = vmatprep.mubr.f32.mxu0 0.0
      %2496 = vmatmul.mubr.f32.gmra.mrb[0].mxu0 %v2280
      %v2497 = vpop.f32.mrb[0].mxu0
      %v2498 = vadd.f32 0.0, %v2497
      %v2499 = vpop.f32.mrb[0].mxu0
      %2500 = vmatprep.mubr.f32.mxu0 0.0
      %2501 = vmatmul.mubr.f32.gmra.mrb[0].mxu0 %v2283
      %v2502 = vpop.f32.mrb[0].mxu0
      %v2503 = vadd.f32 0.0, %v2502
      %v2504 = vpop.f32.mrb[0].mxu0
      %2505 = vmatprep.mubr.f32.mxu0 0.0
      %2506 = vmatmul.mubr.f32.gmra.mrb[0].mxu0 %v2286
      %v2507 = vpop.f32.mrb[0].mxu0
      %v2508 = vadd.f32 0.0, %v2507
      %v2509 = vpop.f32.mrb[0].mxu0
      %2510 = vmatprep.mubr.f32.mxu0 0.0
      %2511 = vmatmul.mubr.f32.gmra.mrb[0].mxu0 %v2289
      %v2512 = vpop.f32.mrb[0].mxu0
      %v2513 = vadd.f32 0.0, %v2512
      %v2514 = vpop.f32.mrb[0].mxu0
      %2515 = vmatprep.mubr.f32.mxu0 0.0
      %2516 = vmatmul.mubr.f32.gmra.mrb[0].mxu0 %v2292
      %v2517 = vpop.f32.mrb[0].mxu0
      %v2518 = vadd.f32 0.0, %v2517
      %v2519 = vpop.f32.mrb[0].mxu0
      %2520 = vmatprep.mubr.f32.mxu0 0.0
      %2521 = vmatmul.mubr.f32.gmra.mrb[0].mxu0 %v2295
      %v2522 = vpop.f32.mrb[0].mxu0
      %v2523 = vadd.f32 0.0, %v2522
      %v2524 = vpop.f32.mrb[0].mxu0
      %2525 = vmatprep.mubr.f32.mxu0 0.0
      %2526 = vmatmul.mubr.f32.gmra.mrb[0].mxu0 %v2298
      %v2527 = vpop.f32.mrb[0].mxu0
      %v2528 = vadd.f32 0.0, %v2527
      %v2529 = vpop.f32.mrb[0].mxu0
      %2530 = vmatprep.mubr.f32.mxu0 0.0
      %2531 = vmatmul.mubr.f32.gmra.mrb[0].mxu0 %v2301
      %v2532 = vpop.f32.mrb[0].mxu0
      %v2533 = vadd.f32 0.0, %v2532
      %v2534 = vpop.f32.mrb[0].mxu0
      %2535 = vmatprep.mubr.f32.mxu0 0.0
      %2536 = vmatmul.mubr.f32.gmra.mrb[0].mxu0 %v2304
      %v2537 = vpop.f32.mrb[0].mxu0
      %v2538 = vadd.f32 0.0, %v2537
      %v2539 = vpop.f32.mrb[0].mxu0
      %2540 = vdwg.mxu0
      %v2541 = vadd.f32 %v2129, %v2373
      %v2542 = vadd.f32 %v2130, %v2378
      %v2543 = vadd.f32 %v2131, %v2383
      %v2544 = vadd.f32 %v2132, %v2388
      %v2545 = vadd.f32 %v2133, %v2393
      %v2546 = vadd.f32 %v2134, %v2398
      %v2547 = vadd.f32 %v2135, %v2403
      %v2548 = vadd.f32 %v2136, %v2408
      %v2549 = vadd.f32 %v2137, %v2413
      %v2550 = vadd.f32 %v2138, %v2418
      %v2551 = vadd.f32 %v2139, %v2423
      %v2552 = vadd.f32 %v2140, %v2428
      %v2553 = vadd.f32 %v2141, %v2433
      %v2554 = vadd.f32 %v2142, %v2438
      %v2555 = vadd.f32 %v2143, %v2443
      %v2556 = vadd.f32 %v2144, %v2448
      %v2557 = vadd.f32 %v2145, %v2453
      %v2558 = vadd.f32 %v2146, %v2458
      %v2559 = vadd.f32 %v2147, %v2463
      %v2560 = vadd.f32 %v2148, %v2468
      %v2561 = vadd.f32 %v2149, %v2473
      %v2562 = vadd.f32 %v2150, %v2478
      %v2563 = vadd.f32 %v2151, %v2483
      %v2564 = vadd.f32 %v2152, %v2488
      %v2565 = vadd.f32 %v2153, %v2493
      %v2566 = vadd.f32 %v2154, %v2498
      %v2567 = vadd.f32 %v2155, %v2503
      %v2568 = vadd.f32 %v2156, %v2508
      %v2569 = vadd.f32 %v2157, %v2513
      %v2570 = vadd.f32 %v2158, %v2518
      %v2571 = vadd.f32 %v2159, %v2523
      %v2572 = vadd.f32 %v2160, %v2528
      %v2573 = vadd.f32 %v2161, %v2533
      %v2574 = vadd.f32 %v2162, %v2538
      %v2575 = vld [vmem:[%s165 + $0x44] sm:$0xff]
      %v2576 = vld [vmem:[%s165 + $0x4c] sm:$0xff]
      %v2577 = vld [vmem:[%s165 + $0x54] sm:$0xff]
      %v2578 = vld [vmem:[%s165 + $0x5c] sm:$0xff]
      %v2579 = vld [vmem:[%s165 + $0x64] sm:$0xff]
      %v2580 = vld [vmem:[%s165 + $0x6c] sm:$0xff]
      %v2581 = vld [vmem:[%s165 + $0x74] sm:$0xff]
      %v2582 = vld [vmem:[%s165 + $0x7c] sm:$0xff]
      %v2583 = vld [vmem:[%s165 + $0x84] sm:$0xff]
      %v2584 = vld [vmem:[%s165 + $0x8c] sm:$0xff]
      %v2585 = vld [vmem:[%s165 + $0x94] sm:$0xff]
      %v2586 = vld [vmem:[%s165 + $0x9c] sm:$0xff]
      %v2587 = vld [vmem:[%s165 + $0xa4] sm:$0xff]
      %v2588 = vld [vmem:[%s165 + $0xac] sm:$0xff]
      %v2589 = vld [vmem:[%s165 + $0xb4] sm:$0xff]
      %v2590 = vld [vmem:[%s165 + $0xbc] sm:$0xff]
      %v2591 = vld [vmem:[%s165 + $0xc4] sm:$0xff]
      %v2592 = vld [vmem:[%s165 + $0xcc] sm:$0xff]
      %v2593 = vld [vmem:[%s165 + $0xd4] sm:$0xff]
      %v2594 = vld [vmem:[%s165 + $0xdc] sm:$0xff]
      %v2595 = vld [vmem:[%s165 + $0xe4] sm:$0xff]
      %v2596 = vld [vmem:[%s165 + $0xec] sm:$0xff]
      %v2597 = vld [vmem:[%s165 + $0xf4] sm:$0xff]
      %v2598 = vld [vmem:[%s165 + $0xfc] sm:$0xff]
      %v2599 = vld [vmem:[%s165 + $0x104] sm:$0xff]
      %v2600 = vld [vmem:[%s165 + $0x10c] sm:$0xff]
      %v2601 = vld [vmem:[%s165 + $0x114] sm:$0xff]
      %v2602 = vld [vmem:[%s165 + $0x11c] sm:$0xff]
      %v2603 = vld [vmem:[%s165 + $0x124] sm:$0xff]
      %v2604 = vld [vmem:[%s165 + $0x12c] sm:$0xff]
      %v2605 = vld [vmem:[%s165 + $0x134] sm:$0xff]
      %v2606 = vld [vmem:[%s165 + $0x13c] sm:$0xff]
      %v2607 = vld [vmem:[%s165 + $0x144] sm:$0xff]
      %v2608 = vld [vmem:[%s165 + $0x14c] sm:$0xff]
      %s2609 = scalar_lea.vmem %s1, 288
      %v2610 = vld [vmem:[%s2609] sm:$0xff]
      %v2611 = vld [vmem:[%s2609 + $0x8] sm:$0xff]
      %v2612 = vld [vmem:[%s2609 + $0x10] sm:$0xff]
      %v2613 = vld [vmem:[%s2609 + $0x18] sm:$0xff]
      %v2614 = vld [vmem:[%s2609 + $0x20] sm:$0xff]
      %v2615 = vld [vmem:[%s2609 + $0x28] sm:$0xff]
      %v2617 = vsel %vm252, %v2575, 0
      %v2620 = vsel %vm252, %v2576, 0
      %v2623 = vsel %vm252, %v2577, 0
      %v2626 = vsel %vm252, %v2578, 0
      %v2629 = vsel %vm252, %v2579, 0
      %v2632 = vsel %vm252, %v2580, 0
      %v2635 = vsel %vm252, %v2581, 0
      %v2638 = vsel %vm252, %v2582, 0
      %v2641 = vsel %vm252, %v2583, 0
      %v2644 = vsel %vm252, %v2584, 0
      %v2647 = vsel %vm252, %v2585, 0
      %v2650 = vsel %vm252, %v2586, 0
      %v2653 = vsel %vm252, %v2587, 0
      %v2656 = vsel %vm252, %v2588, 0
      %v2659 = vsel %vm252, %v2589, 0
      %v2662 = vsel %vm252, %v2590, 0
      %v2665 = vsel %vm252, %v2591, 0
      %v2668 = vsel %vm252, %v2592, 0
      %v2671 = vsel %vm252, %v2593, 0
      %v2674 = vsel %vm252, %v2594, 0
      %v2677 = vsel %vm252, %v2595, 0
      %v2680 = vsel %vm252, %v2596, 0
      %v2683 = vsel %vm252, %v2597, 0
      %v2686 = vsel %vm252, %v2598, 0
      %v2689 = vsel %vm252, %v2599, 0
      %v2692 = vsel %vm252, %v2600, 0
      %v2695 = vsel %vm252, %v2601, 0
      %v2698 = vsel %vm252, %v2602, 0
      %v2701 = vsel %vm252, %v2603, 0
      %v2704 = vsel %vm252, %v2604, 0
      %v2707 = vsel %vm252, %v2605, 0
      %v2710 = vsel %vm252, %v2606, 0
      %v2713 = vsel %vm252, %v2607, 0
      %v2716 = vsel %vm252, %v2608, 0
      %2718 = vmatprep.subr.mxu0 0.0
      %2719 = vmatpush1.msra.mxu0 %v2610
      %2720 = vmatprep.subr.mxu0 0.0
      %2721 = vmatpush1.msra.mxu0 %v2611
      %2722 = vmatprep.subr.mxu0 0.0
      %2723 = vmatpush1.msra.mxu0 %v2612
      %2724 = vmatprep.subr.mxu0 0.0
      %2725 = vmatpush1.msra.mxu0 %v2613
      %2726 = vmatprep.subr.mxu0 0.0
      %2727 = vmatpush1.msra.mxu0 %v2614
      %2728 = vmatprep.subr.mxu0 0.0
      %2729 = vmatpush1.msra.mxu0 %v2615
      %2730 = vmatprep.subr.mxu0 0.0
      %2731 = vmatpush1.msra.mxu0 0.0
      %2732 = vmatprep.subr.mxu0 0.0
      %2733 = vmatpush1.msra.mxu0 0.0
      %2734 = vmatprep.subr.mxu0 0.0
      %2735 = vmatpush1.msra.mxu0 0.0
      %2736 = vmatprep.subr.mxu0 0.0
      %2737 = vmatpush1.msra.mxu0 0.0
      %2738 = vmatprep.subr.mxu0 0.0
      %2739 = vmatpush1.msra.mxu0 0.0
      %2740 = vmatprep.subr.mxu0 0.0
      %2741 = vmatpush1.msra.mxu0 0.0
      %2742 = vmatprep.subr.mxu0 0.0
      %2743 = vmatpush1.msra.mxu0 0.0
      %2744 = vmatprep.subr.mxu0 0.0
      %2745 = vmatpush1.msra.mxu0 0.0
      %2746 = vmatprep.subr.mxu0 0.0
      %2747 = vmatpush1.msra.mxu0 0.0
      %2748 = vmatprep.subr.mxu0 0.0
      %2749 = vmatpush1.msra.mxu0 0.0
      %2750 = vmatprep.subr.mxu0 0.0
      %2751 = vmatpush1.msra.mxu0 0.0
      %2752 = vmatprep.subr.mxu0 0.0
      %2753 = vmatpush1.msra.mxu0 0.0
      %2754 = vmatprep.subr.mxu0 0.0
      %2755 = vmatpush1.msra.mxu0 0.0
      %2756 = vmatprep.subr.mxu0 0.0
      %2757 = vmatpush1.msra.mxu0 0.0
      %2758 = vmatprep.subr.mxu0 0.0
      %2759 = vmatpush1.msra.mxu0 0.0
      %2760 = vmatprep.subr.mxu0 0.0
      %2761 = vmatpush1.msra.mxu0 0.0
      %2762 = vmatprep.subr.mxu0 0.0
      %2763 = vmatpush1.msra.mxu0 0.0
      %2764 = vmatprep.subr.mxu0 0.0
      %2765 = vmatpush1.msra.mxu0 0.0
      %2766 = vmatprep.subr.mxu0 0.0
      %2767 = vmatpush1.msra.mxu0 0.0
      %2768 = vmatprep.subr.mxu0 0.0
      %2769 = vmatpush1.msra.mxu0 0.0
      %2770 = vmatprep.subr.mxu0 0.0
      %2771 = vmatpush1.msra.mxu0 0.0
      %2772 = vmatprep.subr.mxu0 0.0
      %2773 = vmatpush1.msra.mxu0 0.0
      %2774 = vmatprep.subr.mxu0 0.0
      %2775 = vmatpush1.msra.mxu0 0.0
      %2776 = vmatprep.subr.mxu0 0.0
      %2777 = vmatpush1.msra.mxu0 0.0
      %2778 = vmatprep.subr.mxu0 0.0
      %2779 = vmatpush1.msra.mxu0 0.0
      %2780 = vmatprep.subr.mxu0 0.0
      %2781 = vmatpush1.msra.mxu0 0.0
      %2782 = vmatprep.mubr.f32.mxu0 0.0
      %2783 = vmatmul.mubr.f32.gmra.mrb[0].mxu0 %v2617
      %v2784 = vpop.f32.mrb[0].mxu0
      %v2785 = vadd.f32 0.0, %v2784
      %v2786 = vpop.f32.mrb[0].mxu0
      %2787 = vmatprep.mubr.f32.mxu0 0.0
      %2788 = vmatmul.mubr.f32.gmra.mrb[0].mxu0 %v2620
      %v2789 = vpop.f32.mrb[0].mxu0
      %v2790 = vadd.f32 0.0, %v2789
      %v2791 = vpop.f32.mrb[0].mxu0
      %2792 = vmatprep.mubr.f32.mxu0 0.0
      %2793 = vmatmul.mubr.f32.gmra.mrb[0].mxu0 %v2623
      %v2794 = vpop.f32.mrb[0].mxu0
      %v2795 = vadd.f32 0.0, %v2794
      %v2796 = vpop.f32.mrb[0].mxu0
      %2797 = vmatprep.mubr.f32.mxu0 0.0
      %2798 = vmatmul.mubr.f32.gmra.mrb[0].mxu0 %v2626
      %v2799 = vpop.f32.mrb[0].mxu0
      %v2800 = vadd.f32 0.0, %v2799
      %v2801 = vpop.f32.mrb[0].mxu0
      %2802 = vmatprep.mubr.f32.mxu0 0.0
      %2803 = vmatmul.mubr.f32.gmra.mrb[0].mxu0 %v2629
      %v2804 = vpop.f32.mrb[0].mxu0
      %v2805 = vadd.f32 0.0, %v2804
      %v2806 = vpop.f32.mrb[0].mxu0
      %2807 = vmatprep.mubr.f32.mxu0 0.0
      %2808 = vmatmul.mubr.f32.gmra.mrb[0].mxu0 %v2632
      %v2809 = vpop.f32.mrb[0].mxu0
      %v2810 = vadd.f32 0.0, %v2809
      %v2811 = vpop.f32.mrb[0].mxu0
      %2812 = vmatprep.mubr.f32.mxu0 0.0
      %2813 = vmatmul.mubr.f32.gmra.mrb[0].mxu0 %v2635
      %v2814 = vpop.f32.mrb[0].mxu0
      %v2815 = vadd.f32 0.0, %v2814
      %v2816 = vpop.f32.mrb[0].mxu0
      %2817 = vmatprep.mubr.f32.mxu0 0.0
      %2818 = vmatmul.mubr.f32.gmra.mrb[0].mxu0 %v2638
      %v2819 = vpop.f32.mrb[0].mxu0
      %v2820 = vadd.f32 0.0, %v2819
      %v2821 = vpop.f32.mrb[0].mxu0
      %2822 = vmatprep.mubr.f32.mxu0 0.0
      %2823 = vmatmul.mubr.f32.gmra.mrb[0].mxu0 %v2641
      %v2824 = vpop.f32.mrb[0].mxu0
      %v2825 = vadd.f32 0.0, %v2824
      %v2826 = vpop.f32.mrb[0].mxu0
      %2827 = vmatprep.mubr.f32.mxu0 0.0
      %2828 = vmatmul.mubr.f32.gmra.mrb[0].mxu0 %v2644
      %v2829 = vpop.f32.mrb[0].mxu0
      %v2830 = vadd.f32 0.0, %v2829
      %v2831 = vpop.f32.mrb[0].mxu0
      %2832 = vmatprep.mubr.f32.mxu0 0.0
      %2833 = vmatmul.mubr.f32.gmra.mrb[0].mxu0 %v2647
      %v2834 = vpop.f32.mrb[0].mxu0
      %v2835 = vadd.f32 0.0, %v2834
      %v2836 = vpop.f32.mrb[0].mxu0
      %2837 = vmatprep.mubr.f32.mxu0 0.0
      %2838 = vmatmul.mubr.f32.gmra.mrb[0].mxu0 %v2650
      %v2839 = vpop.f32.mrb[0].mxu0
      %v2840 = vadd.f32 0.0, %v2839
      %v2841 = vpop.f32.mrb[0].mxu0
      %2842 = vmatprep.mubr.f32.mxu0 0.0
      %2843 = vmatmul.mubr.f32.gmra.mrb[0].mxu0 %v2653
      %v2844 = vpop.f32.mrb[0].mxu0
      %v2845 = vadd.f32 0.0, %v2844
      %v2846 = vpop.f32.mrb[0].mxu0
      %2847 = vmatprep.mubr.f32.mxu0 0.0
      %2848 = vmatmul.mubr.f32.gmra.mrb[0].mxu0 %v2656
      %v2849 = vpop.f32.mrb[0].mxu0
      %v2850 = vadd.f32 0.0, %v2849
      %v2851 = vpop.f32.mrb[0].mxu0
      %2852 = vmatprep.mubr.f32.mxu0 0.0
      %2853 = vmatmul.mubr.f32.gmra.mrb[0].mxu0 %v2659
      %v2854 = vpop.f32.mrb[0].mxu0
      %v2855 = vadd.f32 0.0, %v2854
      %v2856 = vpop.f32.mrb[0].mxu0
      %2857 = vmatprep.mubr.f32.mxu0 0.0
      %2858 = vmatmul.mubr.f32.gmra.mrb[0].mxu0 %v2662
      %v2859 = vpop.f32.mrb[0].mxu0
      %v2860 = vadd.f32 0.0, %v2859
      %v2861 = vpop.f32.mrb[0].mxu0
      %2862 = vmatprep.mubr.f32.mxu0 0.0
      %2863 = vmatmul.mubr.f32.gmra.mrb[0].mxu0 %v2665
      %v2864 = vpop.f32.mrb[0].mxu0
      %v2865 = vadd.f32 0.0, %v2864
      %v2866 = vpop.f32.mrb[0].mxu0
      %2867 = vmatprep.mubr.f32.mxu0 0.0
      %2868 = vmatmul.mubr.f32.gmra.mrb[0].mxu0 %v2668
      %v2869 = vpop.f32.mrb[0].mxu0
      %v2870 = vadd.f32 0.0, %v2869
      %v2871 = vpop.f32.mrb[0].mxu0
      %2872 = vmatprep.mubr.f32.mxu0 0.0
      %2873 = vmatmul.mubr.f32.gmra.mrb[0].mxu0 %v2671
      %v2874 = vpop.f32.mrb[0].mxu0
      %v2875 = vadd.f32 0.0, %v2874
      %v2876 = vpop.f32.mrb[0].mxu0
      %2877 = vmatprep.mubr.f32.mxu0 0.0
      %2878 = vmatmul.mubr.f32.gmra.mrb[0].mxu0 %v2674
      %v2879 = vpop.f32.mrb[0].mxu0
      %v2880 = vadd.f32 0.0, %v2879
      %v2881 = vpop.f32.mrb[0].mxu0
      %2882 = vmatprep.mubr.f32.mxu0 0.0
      %2883 = vmatmul.mubr.f32.gmra.mrb[0].mxu0 %v2677
      %v2884 = vpop.f32.mrb[0].mxu0
      %v2885 = vadd.f32 0.0, %v2884
      %v2886 = vpop.f32.mrb[0].mxu0
      %2887 = vmatprep.mubr.f32.mxu0 0.0
      %2888 = vmatmul.mubr.f32.gmra.mrb[0].mxu0 %v2680
      %v2889 = vpop.f32.mrb[0].mxu0
      %v2890 = vadd.f32 0.0, %v2889
      %v2891 = vpop.f32.mrb[0].mxu0
      %2892 = vmatprep.mubr.f32.mxu0 0.0
      %2893 = vmatmul.mubr.f32.gmra.mrb[0].mxu0 %v2683
      %v2894 = vpop.f32.mrb[0].mxu0
      %v2895 = vadd.f32 0.0, %v2894
      %v2896 = vpop.f32.mrb[0].mxu0
      %2897 = vmatprep.mubr.f32.mxu0 0.0
      %2898 = vmatmul.mubr.f32.gmra.mrb[0].mxu0 %v2686
      %v2899 = vpop.f32.mrb[0].mxu0
      %v2900 = vadd.f32 0.0, %v2899
      %v2901 = vpop.f32.mrb[0].mxu0
      %2902 = vmatprep.mubr.f32.mxu0 0.0
      %2903 = vmatmul.mubr.f32.gmra.mrb[0].mxu0 %v2689
      %v2904 = vpop.f32.mrb[0].mxu0
      %v2905 = vadd.f32 0.0, %v2904
      %v2906 = vpop.f32.mrb[0].mxu0
      %2907 = vmatprep.mubr.f32.mxu0 0.0
      %2908 = vmatmul.mubr.f32.gmra.mrb[0].mxu0 %v2692
      %v2909 = vpop.f32.mrb[0].mxu0
      %v2910 = vadd.f32 0.0, %v2909
      %v2911 = vpop.f32.mrb[0].mxu0
      %2912 = vmatprep.mubr.f32.mxu0 0.0
      %2913 = vmatmul.mubr.f32.gmra.mrb[0].mxu0 %v2695
      %v2914 = vpop.f32.mrb[0].mxu0
      %v2915 = vadd.f32 0.0, %v2914
      %v2916 = vpop.f32.mrb[0].mxu0
      %2917 = vmatprep.mubr.f32.mxu0 0.0
      %2918 = vmatmul.mubr.f32.gmra.mrb[0].mxu0 %v2698
      %v2919 = vpop.f32.mrb[0].mxu0
      %v2920 = vadd.f32 0.0, %v2919
      %v2921 = vpop.f32.mrb[0].mxu0
      %2922 = vmatprep.mubr.f32.mxu0 0.0
      %2923 = vmatmul.mubr.f32.gmra.mrb[0].mxu0 %v2701
      %v2924 = vpop.f32.mrb[0].mxu0
      %v2925 = vadd.f32 0.0, %v2924
      %v2926 = vpop.f32.mrb[0].mxu0
      %2927 = vmatprep.mubr.f32.mxu0 0.0
      %2928 = vmatmul.mubr.f32.gmra.mrb[0].mxu0 %v2704
      %v2929 = vpop.f32.mrb[0].mxu0
      %v2930 = vadd.f32 0.0, %v2929
      %v2931 = vpop.f32.mrb[0].mxu0
      %2932 = vmatprep.mubr.f32.mxu0 0.0
      %2933 = vmatmul.mubr.f32.gmra.mrb[0].mxu0 %v2707
      %v2934 = vpop.f32.mrb[0].mxu0
      %v2935 = vadd.f32 0.0, %v2934
      %v2936 = vpop.f32.mrb[0].mxu0
      %2937 = vmatprep.mubr.f32.mxu0 0.0
      %2938 = vmatmul.mubr.f32.gmra.mrb[0].mxu0 %v2710
      %v2939 = vpop.f32.mrb[0].mxu0
      %v2940 = vadd.f32 0.0, %v2939
      %v2941 = vpop.f32.mrb[0].mxu0
      %2942 = vmatprep.mubr.f32.mxu0 0.0
      %2943 = vmatmul.mubr.f32.gmra.mrb[0].mxu0 %v2713
      %v2944 = vpop.f32.mrb[0].mxu0
      %v2945 = vadd.f32 0.0, %v2944
      %v2946 = vpop.f32.mrb[0].mxu0
      %2947 = vmatprep.mubr.f32.mxu0 0.0
      %2948 = vmatmul.mubr.f32.gmra.mrb[0].mxu0 %v2716
      %v2949 = vpop.f32.mrb[0].mxu0
      %v2950 = vadd.f32 0.0, %v2949
      %v2951 = vpop.f32.mrb[0].mxu0
      %2952 = vdwg.mxu0
      %v2953 = vadd.f32 %v2541, %v2785
      %v2954 = vadd.f32 %v2542, %v2790
      %v2955 = vadd.f32 %v2543, %v2795
      %v2956 = vadd.f32 %v2544, %v2800
      %v2957 = vadd.f32 %v2545, %v2805
      %v2958 = vadd.f32 %v2546, %v2810
      %v2959 = vadd.f32 %v2547, %v2815
      %v2960 = vadd.f32 %v2548, %v2820
      %v2961 = vadd.f32 %v2549, %v2825
      %v2962 = vadd.f32 %v2550, %v2830
      %v2963 = vadd.f32 %v2551, %v2835
      %v2964 = vadd.f32 %v2552, %v2840
      %v2965 = vadd.f32 %v2553, %v2845
      %v2966 = vadd.f32 %v2554, %v2850
      %v2967 = vadd.f32 %v2555, %v2855
      %v2968 = vadd.f32 %v2556, %v2860
      %v2969 = vadd.f32 %v2557, %v2865
      %v2970 = vadd.f32 %v2558, %v2870
      %v2971 = vadd.f32 %v2559, %v2875
      %v2972 = vadd.f32 %v2560, %v2880
      %v2973 = vadd.f32 %v2561, %v2885
      %v2974 = vadd.f32 %v2562, %v2890
      %v2975 = vadd.f32 %v2563, %v2895
      %v2976 = vadd.f32 %v2564, %v2900
      %v2977 = vadd.f32 %v2565, %v2905
      %v2978 = vadd.f32 %v2566, %v2910
      %v2979 = vadd.f32 %v2567, %v2915
      %v2980 = vadd.f32 %v2568, %v2920
      %v2981 = vadd.f32 %v2569, %v2925
      %v2982 = vadd.f32 %v2570, %v2930
      %v2983 = vadd.f32 %v2571, %v2935
      %v2984 = vadd.f32 %v2572, %v2940
      %v2985 = vadd.f32 %v2573, %v2945
      %v2986 = vadd.f32 %v2574, %v2950
      %v2987 = vld [vmem:[%s165 + $0x45] sm:$0xff]
      %v2988 = vld [vmem:[%s165 + $0x4d] sm:$0xff]
      %v2989 = vld [vmem:[%s165 + $0x55] sm:$0xff]
      %v2990 = vld [vmem:[%s165 + $0x5d] sm:$0xff]
      %v2991 = vld [vmem:[%s165 + $0x65] sm:$0xff]
      %v2992 = vld [vmem:[%s165 + $0x6d] sm:$0xff]
      %v2993 = vld [vmem:[%s165 + $0x75] sm:$0xff]
      %v2994 = vld [vmem:[%s165 + $0x7d] sm:$0xff]
      %v2995 = vld [vmem:[%s165 + $0x85] sm:$0xff]
      %v2996 = vld [vmem:[%s165 + $0x8d] sm:$0xff]
      %v2997 = vld [vmem:[%s165 + $0x95] sm:$0xff]
      %v2998 = vld [vmem:[%s165 + $0x9d] sm:$0xff]
      %v2999 = vld [vmem:[%s165 + $0xa5] sm:$0xff]
      %v3000 = vld [vmem:[%s165 + $0xad] sm:$0xff]
      %v3001 = vld [vmem:[%s165 + $0xb5] sm:$0xff]
      %v3002 = vld [vmem:[%s165 + $0xbd] sm:$0xff]
      %v3003 = vld [vmem:[%s165 + $0xc5] sm:$0xff]
      %v3004 = vld [vmem:[%s165 + $0xcd] sm:$0xff]
      %v3005 = vld [vmem:[%s165 + $0xd5] sm:$0xff]
      %v3006 = vld [vmem:[%s165 + $0xdd] sm:$0xff]
      %v3007 = vld [vmem:[%s165 + $0xe5] sm:$0xff]
      %v3008 = vld [vmem:[%s165 + $0xed] sm:$0xff]
      %v3009 = vld [vmem:[%s165 + $0xf5] sm:$0xff]
      %v3010 = vld [vmem:[%s165 + $0xfd] sm:$0xff]
      %v3011 = vld [vmem:[%s165 + $0x105] sm:$0xff]
      %v3012 = vld [vmem:[%s165 + $0x10d] sm:$0xff]
      %v3013 = vld [vmem:[%s165 + $0x115] sm:$0xff]
      %v3014 = vld [vmem:[%s165 + $0x11d] sm:$0xff]
      %v3015 = vld [vmem:[%s165 + $0x125] sm:$0xff]
      %v3016 = vld [vmem:[%s165 + $0x12d] sm:$0xff]
      %v3017 = vld [vmem:[%s165 + $0x135] sm:$0xff]
      %v3018 = vld [vmem:[%s165 + $0x13d] sm:$0xff]
      %v3019 = vld [vmem:[%s165 + $0x145] sm:$0xff]
      %v3020 = vld [vmem:[%s165 + $0x14d] sm:$0xff]
      %s3021 = scalar_lea.vmem %s1, 336
      %v3022 = vld [vmem:[%s3021] sm:$0xff]
      %v3023 = vld [vmem:[%s3021 + $0x8] sm:$0xff]
      %v3024 = vld [vmem:[%s3021 + $0x10] sm:$0xff]
      %v3025 = vld [vmem:[%s3021 + $0x18] sm:$0xff]
      %v3026 = vld [vmem:[%s3021 + $0x20] sm:$0xff]
      %v3027 = vld [vmem:[%s3021 + $0x28] sm:$0xff]
      %v3029 = vsel %vm252, %v2987, 0
      %v3032 = vsel %vm252, %v2988, 0
      %v3035 = vsel %vm252, %v2989, 0
      %v3038 = vsel %vm252, %v2990, 0
      %v3041 = vsel %vm252, %v2991, 0
      %v3044 = vsel %vm252, %v2992, 0
      %v3047 = vsel %vm252, %v2993, 0
      %v3050 = vsel %vm252, %v2994, 0
      %v3053 = vsel %vm252, %v2995, 0
      %v3056 = vsel %vm252, %v2996, 0
      %v3059 = vsel %vm252, %v2997, 0
      %v3062 = vsel %vm252, %v2998, 0
      %v3065 = vsel %vm252, %v2999, 0
      %v3068 = vsel %vm252, %v3000, 0
      %v3071 = vsel %vm252, %v3001, 0
      %v3074 = vsel %vm252, %v3002, 0
      %v3077 = vsel %vm252, %v3003, 0
      %v3080 = vsel %vm252, %v3004, 0
      %v3083 = vsel %vm252, %v3005, 0
      %v3086 = vsel %vm252, %v3006, 0
      %v3089 = vsel %vm252, %v3007, 0
      %v3092 = vsel %vm252, %v3008, 0
      %v3095 = vsel %vm252, %v3009, 0
      %v3098 = vsel %vm252, %v3010, 0
      %v3101 = vsel %vm252, %v3011, 0
      %v3104 = vsel %vm252, %v3012, 0
      %v3107 = vsel %vm252, %v3013, 0
      %v3110 = vsel %vm252, %v3014, 0
      %v3113 = vsel %vm252, %v3015, 0
      %v3116 = vsel %vm252, %v3016, 0
      %v3119 = vsel %vm252, %v3017, 0
      %v3122 = vsel %vm252, %v3018, 0
      %v3125 = vsel %vm252, %v3019, 0
      %v3128 = vsel %vm252, %v3020, 0
      %3130 = vmatprep.subr.mxu0 0.0
      %3131 = vmatpush1.msra.mxu0 %v3022
      %3132 = vmatprep.subr.mxu0 0.0
      %3133 = vmatpush1.msra.mxu0 %v3023
      %3134 = vmatprep.subr.mxu0 0.0
      %3135 = vmatpush1.msra.mxu0 %v3024
      %3136 = vmatprep.subr.mxu0 0.0
      %3137 = vmatpush1.msra.mxu0 %v3025
      %3138 = vmatprep.subr.mxu0 0.0
      %3139 = vmatpush1.msra.mxu0 %v3026
      %3140 = vmatprep.subr.mxu0 0.0
      %3141 = vmatpush1.msra.mxu0 %v3027
      %3142 = vmatprep.subr.mxu0 0.0
      %3143 = vmatpush1.msra.mxu0 0.0
      %3144 = vmatprep.subr.mxu0 0.0
      %3145 = vmatpush1.msra.mxu0 0.0
      %3146 = vmatprep.subr.mxu0 0.0
      %3147 = vmatpush1.msra.mxu0 0.0
      %3148 = vmatprep.subr.mxu0 0.0
      %3149 = vmatpush1.msra.mxu0 0.0
      %3150 = vmatprep.subr.mxu0 0.0
      %3151 = vmatpush1.msra.mxu0 0.0
      %3152 = vmatprep.subr.mxu0 0.0
      %3153 = vmatpush1.msra.mxu0 0.0
      %3154 = vmatprep.subr.mxu0 0.0
      %3155 = vmatpush1.msra.mxu0 0.0
      %3156 = vmatprep.subr.mxu0 0.0
      %3157 = vmatpush1.msra.mxu0 0.0
      %3158 = vmatprep.subr.mxu0 0.0
      %3159 = vmatpush1.msra.mxu0 0.0
      %3160 = vmatprep.subr.mxu0 0.0
      %3161 = vmatpush1.msra.mxu0 0.0
      %3162 = vmatprep.subr.mxu0 0.0
      %3163 = vmatpush1.msra.mxu0 0.0
      %3164 = vmatprep.subr.mxu0 0.0
      %3165 = vmatpush1.msra.mxu0 0.0
      %3166 = vmatprep.subr.mxu0 0.0
      %3167 = vmatpush1.msra.mxu0 0.0
      %3168 = vmatprep.subr.mxu0 0.0
      %3169 = vmatpush1.msra.mxu0 0.0
      %3170 = vmatprep.subr.mxu0 0.0
      %3171 = vmatpush1.msra.mxu0 0.0
      %3172 = vmatprep.subr.mxu0 0.0
      %3173 = vmatpush1.msra.mxu0 0.0
      %3174 = vmatprep.subr.mxu0 0.0
      %3175 = vmatpush1.msra.mxu0 0.0
      %3176 = vmatprep.subr.mxu0 0.0
      %3177 = vmatpush1.msra.mxu0 0.0
      %3178 = vmatprep.subr.mxu0 0.0
      %3179 = vmatpush1.msra.mxu0 0.0
      %3180 = vmatprep.subr.mxu0 0.0
      %3181 = vmatpush1.msra.mxu0 0.0
      %3182 = vmatprep.subr.mxu0 0.0
      %3183 = vmatpush1.msra.mxu0 0.0
      %3184 = vmatprep.subr.mxu0 0.0
      %3185 = vmatpush1.msra.mxu0 0.0
      %3186 = vmatprep.subr.mxu0 0.0
      %3187 = vmatpush1.msra.mxu0 0.0
      %3188 = vmatprep.subr.mxu0 0.0
      %3189 = vmatpush1.msra.mxu0 0.0
      %3190 = vmatprep.subr.mxu0 0.0
      %3191 = vmatpush1.msra.mxu0 0.0
      %3192 = vmatprep.subr.mxu0 0.0
      %3193 = vmatpush1.msra.mxu0 0.0
      %3194 = vmatprep.mubr.f32.mxu0 0.0
      %3195 = vmatmul.mubr.f32.gmra.mrb[0].mxu0 %v3029
      %v3196 = vpop.f32.mrb[0].mxu0
      %v3197 = vadd.f32 0.0, %v3196
      %v3198 = vpop.f32.mrb[0].mxu0
      %3199 = vmatprep.mubr.f32.mxu0 0.0
      %3200 = vmatmul.mubr.f32.gmra.mrb[0].mxu0 %v3032
      %v3201 = vpop.f32.mrb[0].mxu0
      %v3202 = vadd.f32 0.0, %v3201
      %v3203 = vpop.f32.mrb[0].mxu0
      %3204 = vmatprep.mubr.f32.mxu0 0.0
      %3205 = vmatmul.mubr.f32.gmra.mrb[0].mxu0 %v3035
      %v3206 = vpop.f32.mrb[0].mxu0
      %v3207 = vadd.f32 0.0, %v3206
      %v3208 = vpop.f32.mrb[0].mxu0
      %3209 = vmatprep.mubr.f32.mxu0 0.0
      %3210 = vmatmul.mubr.f32.gmra.mrb[0].mxu0 %v3038
      %v3211 = vpop.f32.mrb[0].mxu0
      %v3212 = vadd.f32 0.0, %v3211
      %v3213 = vpop.f32.mrb[0].mxu0
      %3214 = vmatprep.mubr.f32.mxu0 0.0
      %3215 = vmatmul.mubr.f32.gmra.mrb[0].mxu0 %v3041
      %v3216 = vpop.f32.mrb[0].mxu0
      %v3217 = vadd.f32 0.0, %v3216
      %v3218 = vpop.f32.mrb[0].mxu0
      %3219 = vmatprep.mubr.f32.mxu0 0.0
      %3220 = vmatmul.mubr.f32.gmra.mrb[0].mxu0 %v3044
      %v3221 = vpop.f32.mrb[0].mxu0
      %v3222 = vadd.f32 0.0, %v3221
      %v3223 = vpop.f32.mrb[0].mxu0
      %3224 = vmatprep.mubr.f32.mxu0 0.0
      %3225 = vmatmul.mubr.f32.gmra.mrb[0].mxu0 %v3047
      %v3226 = vpop.f32.mrb[0].mxu0
      %v3227 = vadd.f32 0.0, %v3226
      %v3228 = vpop.f32.mrb[0].mxu0
      %3229 = vmatprep.mubr.f32.mxu0 0.0
      %3230 = vmatmul.mubr.f32.gmra.mrb[0].mxu0 %v3050
      %v3231 = vpop.f32.mrb[0].mxu0
      %v3232 = vadd.f32 0.0, %v3231
      %v3233 = vpop.f32.mrb[0].mxu0
      %3234 = vmatprep.mubr.f32.mxu0 0.0
      %3235 = vmatmul.mubr.f32.gmra.mrb[0].mxu0 %v3053
      %v3236 = vpop.f32.mrb[0].mxu0
      %v3237 = vadd.f32 0.0, %v3236
      %v3238 = vpop.f32.mrb[0].mxu0
      %3239 = vmatprep.mubr.f32.mxu0 0.0
      %3240 = vmatmul.mubr.f32.gmra.mrb[0].mxu0 %v3056
      %v3241 = vpop.f32.mrb[0].mxu0
      %v3242 = vadd.f32 0.0, %v3241
      %v3243 = vpop.f32.mrb[0].mxu0
      %3244 = vmatprep.mubr.f32.mxu0 0.0
      %3245 = vmatmul.mubr.f32.gmra.mrb[0].mxu0 %v3059
      %v3246 = vpop.f32.mrb[0].mxu0
      %v3247 = vadd.f32 0.0, %v3246
      %v3248 = vpop.f32.mrb[0].mxu0
      %3249 = vmatprep.mubr.f32.mxu0 0.0
      %3250 = vmatmul.mubr.f32.gmra.mrb[0].mxu0 %v3062
      %v3251 = vpop.f32.mrb[0].mxu0
      %v3252 = vadd.f32 0.0, %v3251
      %v3253 = vpop.f32.mrb[0].mxu0
      %3254 = vmatprep.mubr.f32.mxu0 0.0
      %3255 = vmatmul.mubr.f32.gmra.mrb[0].mxu0 %v3065
      %v3256 = vpop.f32.mrb[0].mxu0
      %v3257 = vadd.f32 0.0, %v3256
      %v3258 = vpop.f32.mrb[0].mxu0
      %3259 = vmatprep.mubr.f32.mxu0 0.0
      %3260 = vmatmul.mubr.f32.gmra.mrb[0].mxu0 %v3068
      %v3261 = vpop.f32.mrb[0].mxu0
      %v3262 = vadd.f32 0.0, %v3261
      %v3263 = vpop.f32.mrb[0].mxu0
      %3264 = vmatprep.mubr.f32.mxu0 0.0
      %3265 = vmatmul.mubr.f32.gmra.mrb[0].mxu0 %v3071
      %v3266 = vpop.f32.mrb[0].mxu0
      %v3267 = vadd.f32 0.0, %v3266
      %v3268 = vpop.f32.mrb[0].mxu0
      %3269 = vmatprep.mubr.f32.mxu0 0.0
      %3270 = vmatmul.mubr.f32.gmra.mrb[0].mxu0 %v3074
      %v3271 = vpop.f32.mrb[0].mxu0
      %v3272 = vadd.f32 0.0, %v3271
      %v3273 = vpop.f32.mrb[0].mxu0
      %3274 = vmatprep.mubr.f32.mxu0 0.0
      %3275 = vmatmul.mubr.f32.gmra.mrb[0].mxu0 %v3077
      %v3276 = vpop.f32.mrb[0].mxu0
      %v3277 = vadd.f32 0.0, %v3276
      %v3278 = vpop.f32.mrb[0].mxu0
      %3279 = vmatprep.mubr.f32.mxu0 0.0
      %3280 = vmatmul.mubr.f32.gmra.mrb[0].mxu0 %v3080
      %v3281 = vpop.f32.mrb[0].mxu0
      %v3282 = vadd.f32 0.0, %v3281
      %v3283 = vpop.f32.mrb[0].mxu0
      %3284 = vmatprep.mubr.f32.mxu0 0.0
      %3285 = vmatmul.mubr.f32.gmra.mrb[0].mxu0 %v3083
      %v3286 = vpop.f32.mrb[0].mxu0
      %v3287 = vadd.f32 0.0, %v3286
      %v3288 = vpop.f32.mrb[0].mxu0
      %3289 = vmatprep.mubr.f32.mxu0 0.0
      %3290 = vmatmul.mubr.f32.gmra.mrb[0].mxu0 %v3086
      %v3291 = vpop.f32.mrb[0].mxu0
      %v3292 = vadd.f32 0.0, %v3291
      %v3293 = vpop.f32.mrb[0].mxu0
      %3294 = vmatprep.mubr.f32.mxu0 0.0
      %3295 = vmatmul.mubr.f32.gmra.mrb[0].mxu0 %v3089
      %v3296 = vpop.f32.mrb[0].mxu0
      %v3297 = vadd.f32 0.0, %v3296
      %v3298 = vpop.f32.mrb[0].mxu0
      %3299 = vmatprep.mubr.f32.mxu0 0.0
      %3300 = vmatmul.mubr.f32.gmra.mrb[0].mxu0 %v3092
      %v3301 = vpop.f32.mrb[0].mxu0
      %v3302 = vadd.f32 0.0, %v3301
      %v3303 = vpop.f32.mrb[0].mxu0
      %3304 = vmatprep.mubr.f32.mxu0 0.0
      %3305 = vmatmul.mubr.f32.gmra.mrb[0].mxu0 %v3095
      %v3306 = vpop.f32.mrb[0].mxu0
      %v3307 = vadd.f32 0.0, %v3306
      %v3308 = vpop.f32.mrb[0].mxu0
      %3309 = vmatprep.mubr.f32.mxu0 0.0
      %3310 = vmatmul.mubr.f32.gmra.mrb[0].mxu0 %v3098
      %v3311 = vpop.f32.mrb[0].mxu0
      %v3312 = vadd.f32 0.0, %v3311
      %v3313 = vpop.f32.mrb[0].mxu0
      %3314 = vmatprep.mubr.f32.mxu0 0.0
      %3315 = vmatmul.mubr.f32.gmra.mrb[0].mxu0 %v3101
      %v3316 = vpop.f32.mrb[0].mxu0
      %v3317 = vadd.f32 0.0, %v3316
      %v3318 = vpop.f32.mrb[0].mxu0
      %3319 = vmatprep.mubr.f32.mxu0 0.0
      %3320 = vmatmul.mubr.f32.gmra.mrb[0].mxu0 %v3104
      %v3321 = vpop.f32.mrb[0].mxu0
      %v3322 = vadd.f32 0.0, %v3321
      %v3323 = vpop.f32.mrb[0].mxu0
      %3324 = vmatprep.mubr.f32.mxu0 0.0
      %3325 = vmatmul.mubr.f32.gmra.mrb[0].mxu0 %v3107
      %v3326 = vpop.f32.mrb[0].mxu0
      %v3327 = vadd.f32 0.0, %v3326
      %v3328 = vpop.f32.mrb[0].mxu0
      %3329 = vmatprep.mubr.f32.mxu0 0.0
      %3330 = vmatmul.mubr.f32.gmra.mrb[0].mxu0 %v3110
      %v3331 = vpop.f32.mrb[0].mxu0
      %v3332 = vadd.f32 0.0, %v3331
      %v3333 = vpop.f32.mrb[0].mxu0
      %3334 = vmatprep.mubr.f32.mxu0 0.0
      %3335 = vmatmul.mubr.f32.gmra.mrb[0].mxu0 %v3113
      %v3336 = vpop.f32.mrb[0].mxu0
      %v3337 = vadd.f32 0.0, %v3336
      %v3338 = vpop.f32.mrb[0].mxu0
      %3339 = vmatprep.mubr.f32.mxu0 0.0
      %3340 = vmatmul.mubr.f32.gmra.mrb[0].mxu0 %v3116
      %v3341 = vpop.f32.mrb[0].mxu0
      %v3342 = vadd.f32 0.0, %v3341
      %v3343 = vpop.f32.mrb[0].mxu0
      %3344 = vmatprep.mubr.f32.mxu0 0.0
      %3345 = vmatmul.mubr.f32.gmra.mrb[0].mxu0 %v3119
      %v3346 = vpop.f32.mrb[0].mxu0
      %v3347 = vadd.f32 0.0, %v3346
      %v3348 = vpop.f32.mrb[0].mxu0
      %3349 = vmatprep.mubr.f32.mxu0 0.0
      %3350 = vmatmul.mubr.f32.gmra.mrb[0].mxu0 %v3122
      %v3351 = vpop.f32.mrb[0].mxu0
      %v3352 = vadd.f32 0.0, %v3351
      %v3353 = vpop.f32.mrb[0].mxu0
      %3354 = vmatprep.mubr.f32.mxu0 0.0
      %3355 = vmatmul.mubr.f32.gmra.mrb[0].mxu0 %v3125
      %v3356 = vpop.f32.mrb[0].mxu0
      %v3357 = vadd.f32 0.0, %v3356
      %v3358 = vpop.f32.mrb[0].mxu0
      %3359 = vmatprep.mubr.f32.mxu0 0.0
      %3360 = vmatmul.mubr.f32.gmra.mrb[0].mxu0 %v3128
      %v3361 = vpop.f32.mrb[0].mxu0
      %v3362 = vadd.f32 0.0, %v3361
      %v3363 = vpop.f32.mrb[0].mxu0
      %3364 = vdwg.mxu0
      %v3365 = vadd.f32 %v2953, %v3197
      %v3366 = vadd.f32 %v2954, %v3202
      %v3367 = vadd.f32 %v2955, %v3207
      %v3368 = vadd.f32 %v2956, %v3212
      %v3369 = vadd.f32 %v2957, %v3217
      %v3370 = vadd.f32 %v2958, %v3222
      %v3371 = vadd.f32 %v2959, %v3227
      %v3372 = vadd.f32 %v2960, %v3232
      %v3373 = vadd.f32 %v2961, %v3237
      %v3374 = vadd.f32 %v2962, %v3242
      %v3375 = vadd.f32 %v2963, %v3247
      %v3376 = vadd.f32 %v2964, %v3252
      %v3377 = vadd.f32 %v2965, %v3257
      %v3378 = vadd.f32 %v2966, %v3262
      %v3379 = vadd.f32 %v2967, %v3267
      %v3380 = vadd.f32 %v2968, %v3272
      %v3381 = vadd.f32 %v2969, %v3277
      %v3382 = vadd.f32 %v2970, %v3282
      %v3383 = vadd.f32 %v2971, %v3287
      %v3384 = vadd.f32 %v2972, %v3292
      %v3385 = vadd.f32 %v2973, %v3297
      %v3386 = vadd.f32 %v2974, %v3302
      %v3387 = vadd.f32 %v2975, %v3307
      %v3388 = vadd.f32 %v2976, %v3312
      %v3389 = vadd.f32 %v2977, %v3317
      %v3390 = vadd.f32 %v2978, %v3322
      %v3391 = vadd.f32 %v2979, %v3327
      %v3392 = vadd.f32 %v2980, %v3332
      %v3393 = vadd.f32 %v2981, %v3337
      %v3394 = vadd.f32 %v2982, %v3342
      %v3395 = vadd.f32 %v2983, %v3347
      %v3396 = vadd.f32 %v2984, %v3352
      %v3397 = vadd.f32 %v2985, %v3357
      %v3398 = vadd.f32 %v2986, %v3362
      %v3399 = vld [vmem:[%s165 + $0x46] sm:$0xff]
      %v3400 = vld [vmem:[%s165 + $0x4e] sm:$0xff]
      %v3401 = vld [vmem:[%s165 + $0x56] sm:$0xff]
      %v3402 = vld [vmem:[%s165 + $0x5e] sm:$0xff]
      %v3403 = vld [vmem:[%s165 + $0x66] sm:$0xff]
      %v3404 = vld [vmem:[%s165 + $0x6e] sm:$0xff]
      %v3405 = vld [vmem:[%s165 + $0x76] sm:$0xff]
      %v3406 = vld [vmem:[%s165 + $0x7e] sm:$0xff]
      %v3407 = vld [vmem:[%s165 + $0x86] sm:$0xff]
      %v3408 = vld [vmem:[%s165 + $0x8e] sm:$0xff]
      %v3409 = vld [vmem:[%s165 + $0x96] sm:$0xff]
      %v3410 = vld [vmem:[%s165 + $0x9e] sm:$0xff]
      %v3411 = vld [vmem:[%s165 + $0xa6] sm:$0xff]
      %v3412 = vld [vmem:[%s165 + $0xae] sm:$0xff]
      %v3413 = vld [vmem:[%s165 + $0xb6] sm:$0xff]
      %v3414 = vld [vmem:[%s165 + $0xbe] sm:$0xff]
      %v3415 = vld [vmem:[%s165 + $0xc6] sm:$0xff]
      %v3416 = vld [vmem:[%s165 + $0xce] sm:$0xff]
      %v3417 = vld [vmem:[%s165 + $0xd6] sm:$0xff]
      %v3418 = vld [vmem:[%s165 + $0xde] sm:$0xff]
      %v3419 = vld [vmem:[%s165 + $0xe6] sm:$0xff]
      %v3420 = vld [vmem:[%s165 + $0xee] sm:$0xff]
      %v3421 = vld [vmem:[%s165 + $0xf6] sm:$0xff]
      %v3422 = vld [vmem:[%s165 + $0xfe] sm:$0xff]
      %v3423 = vld [vmem:[%s165 + $0x106] sm:$0xff]
      %v3424 = vld [vmem:[%s165 + $0x10e] sm:$0xff]
      %v3425 = vld [vmem:[%s165 + $0x116] sm:$0xff]
      %v3426 = vld [vmem:[%s165 + $0x11e] sm:$0xff]
      %v3427 = vld [vmem:[%s165 + $0x126] sm:$0xff]
      %v3428 = vld [vmem:[%s165 + $0x12e] sm:$0xff]
      %v3429 = vld [vmem:[%s165 + $0x136] sm:$0xff]
      %v3430 = vld [vmem:[%s165 + $0x13e] sm:$0xff]
      %v3431 = vld [vmem:[%s165 + $0x146] sm:$0xff]
      %v3432 = vld [vmem:[%s165 + $0x14e] sm:$0xff]
      %s3433 = scalar_lea.vmem %s1, 384
      %v3434 = vld [vmem:[%s3433] sm:$0xff]
      %v3435 = vld [vmem:[%s3433 + $0x8] sm:$0xff]
      %v3436 = vld [vmem:[%s3433 + $0x10] sm:$0xff]
      %v3437 = vld [vmem:[%s3433 + $0x18] sm:$0xff]
      %v3438 = vld [vmem:[%s3433 + $0x20] sm:$0xff]
      %v3439 = vld [vmem:[%s3433 + $0x28] sm:$0xff]
      %v3441 = vsel %vm252, %v3399, 0
      %v3444 = vsel %vm252, %v3400, 0
      %v3447 = vsel %vm252, %v3401, 0
      %v3450 = vsel %vm252, %v3402, 0
      %v3453 = vsel %vm252, %v3403, 0
      %v3456 = vsel %vm252, %v3404, 0
      %v3459 = vsel %vm252, %v3405, 0
      %v3462 = vsel %vm252, %v3406, 0
      %v3465 = vsel %vm252, %v3407, 0
      %v3468 = vsel %vm252, %v3408, 0
      %v3471 = vsel %vm252, %v3409, 0
      %v3474 = vsel %vm252, %v3410, 0
      %v3477 = vsel %vm252, %v3411, 0
      %v3480 = vsel %vm252, %v3412, 0
      %v3483 = vsel %vm252, %v3413, 0
      %v3486 = vsel %vm252, %v3414, 0
      %v3489 = vsel %vm252, %v3415, 0
      %v3492 = vsel %vm252, %v3416, 0
      %v3495 = vsel %vm252, %v3417, 0
      %v3498 = vsel %vm252, %v3418, 0
      %v3501 = vsel %vm252, %v3419, 0
      %v3504 = vsel %vm252, %v3420, 0
      %v3507 = vsel %vm252, %v3421, 0
      %v3510 = vsel %vm252, %v3422, 0
      %v3513 = vsel %vm252, %v3423, 0
      %v3516 = vsel %vm252, %v3424, 0
      %v3519 = vsel %vm252, %v3425, 0
      %v3522 = vsel %vm252, %v3426, 0
      %v3525 = vsel %vm252, %v3427, 0
      %v3528 = vsel %vm252, %v3428, 0
      %v3531 = vsel %vm252, %v3429, 0
      %v3534 = vsel %vm252, %v3430, 0
      %v3537 = vsel %vm252, %v3431, 0
      %v3540 = vsel %vm252, %v3432, 0
      %3542 = vmatprep.subr.mxu0 0.0
      %3543 = vmatpush1.msra.mxu0 %v3434
      %3544 = vmatprep.subr.mxu0 0.0
      %3545 = vmatpush1.msra.mxu0 %v3435
      %3546 = vmatprep.subr.mxu0 0.0
      %3547 = vmatpush1.msra.mxu0 %v3436
      %3548 = vmatprep.subr.mxu0 0.0
      %3549 = vmatpush1.msra.mxu0 %v3437
      %3550 = vmatprep.subr.mxu0 0.0
      %3551 = vmatpush1.msra.mxu0 %v3438
      %3552 = vmatprep.subr.mxu0 0.0
      %3553 = vmatpush1.msra.mxu0 %v3439
      %3554 = vmatprep.subr.mxu0 0.0
      %3555 = vmatpush1.msra.mxu0 0.0
      %3556 = vmatprep.subr.mxu0 0.0
      %3557 = vmatpush1.msra.mxu0 0.0
      %3558 = vmatprep.subr.mxu0 0.0
      %3559 = vmatpush1.msra.mxu0 0.0
      %3560 = vmatprep.subr.mxu0 0.0
      %3561 = vmatpush1.msra.mxu0 0.0
      %3562 = vmatprep.subr.mxu0 0.0
      %3563 = vmatpush1.msra.mxu0 0.0
      %3564 = vmatprep.subr.mxu0 0.0
      %3565 = vmatpush1.msra.mxu0 0.0
      %3566 = vmatprep.subr.mxu0 0.0
      %3567 = vmatpush1.msra.mxu0 0.0
      %3568 = vmatprep.subr.mxu0 0.0
      %3569 = vmatpush1.msra.mxu0 0.0
      %3570 = vmatprep.subr.mxu0 0.0
      %3571 = vmatpush1.msra.mxu0 0.0
      %3572 = vmatprep.subr.mxu0 0.0
      %3573 = vmatpush1.msra.mxu0 0.0
      %3574 = vmatprep.subr.mxu0 0.0
      %3575 = vmatpush1.msra.mxu0 0.0
      %3576 = vmatprep.subr.mxu0 0.0
      %3577 = vmatpush1.msra.mxu0 0.0
      %3578 = vmatprep.subr.mxu0 0.0
      %3579 = vmatpush1.msra.mxu0 0.0
      %3580 = vmatprep.subr.mxu0 0.0
      %3581 = vmatpush1.msra.mxu0 0.0
      %3582 = vmatprep.subr.mxu0 0.0
      %3583 = vmatpush1.msra.mxu0 0.0
      %3584 = vmatprep.subr.mxu0 0.0
      %3585 = vmatpush1.msra.mxu0 0.0
      %3586 = vmatprep.subr.mxu0 0.0
      %3587 = vmatpush1.msra.mxu0 0.0
      %3588 = vmatprep.subr.mxu0 0.0
      %3589 = vmatpush1.msra.mxu0 0.0
      %3590 = vmatprep.subr.mxu0 0.0
      %3591 = vmatpush1.msra.mxu0 0.0
      %3592 = vmatprep.subr.mxu0 0.0
      %3593 = vmatpush1.msra.mxu0 0.0
      %3594 = vmatprep.subr.mxu0 0.0
      %3595 = vmatpush1.msra.mxu0 0.0
      %3596 = vmatprep.subr.mxu0 0.0
      %3597 = vmatpush1.msra.mxu0 0.0
      %3598 = vmatprep.subr.mxu0 0.0
      %3599 = vmatpush1.msra.mxu0 0.0
      %3600 = vmatprep.subr.mxu0 0.0
      %3601 = vmatpush1.msra.mxu0 0.0
      %3602 = vmatprep.subr.mxu0 0.0
      %3603 = vmatpush1.msra.mxu0 0.0
      %3604 = vmatprep.subr.mxu0 0.0
      %3605 = vmatpush1.msra.mxu0 0.0
      %3606 = vmatprep.mubr.f32.mxu0 0.0
      %3607 = vmatmul.mubr.f32.gmra.mrb[0].mxu0 %v3441
      %v3608 = vpop.f32.mrb[0].mxu0
      %v3609 = vadd.f32 0.0, %v3608
      %v3610 = vpop.f32.mrb[0].mxu0
      %3611 = vmatprep.mubr.f32.mxu0 0.0
      %3612 = vmatmul.mubr.f32.gmra.mrb[0].mxu0 %v3444
      %v3613 = vpop.f32.mrb[0].mxu0
      %v3614 = vadd.f32 0.0, %v3613
      %v3615 = vpop.f32.mrb[0].mxu0
      %3616 = vmatprep.mubr.f32.mxu0 0.0
      %3617 = vmatmul.mubr.f32.gmra.mrb[0].mxu0 %v3447
      %v3618 = vpop.f32.mrb[0].mxu0
      %v3619 = vadd.f32 0.0, %v3618
      %v3620 = vpop.f32.mrb[0].mxu0
      %3621 = vmatprep.mubr.f32.mxu0 0.0
      %3622 = vmatmul.mubr.f32.gmra.mrb[0].mxu0 %v3450
      %v3623 = vpop.f32.mrb[0].mxu0
      %v3624 = vadd.f32 0.0, %v3623
      %v3625 = vpop.f32.mrb[0].mxu0
      %3626 = vmatprep.mubr.f32.mxu0 0.0
      %3627 = vmatmul.mubr.f32.gmra.mrb[0].mxu0 %v3453
      %v3628 = vpop.f32.mrb[0].mxu0
      %v3629 = vadd.f32 0.0, %v3628
      %v3630 = vpop.f32.mrb[0].mxu0
      %3631 = vmatprep.mubr.f32.mxu0 0.0
      %3632 = vmatmul.mubr.f32.gmra.mrb[0].mxu0 %v3456
      %v3633 = vpop.f32.mrb[0].mxu0
      %v3634 = vadd.f32 0.0, %v3633
      %v3635 = vpop.f32.mrb[0].mxu0
      %3636 = vmatprep.mubr.f32.mxu0 0.0
      %3637 = vmatmul.mubr.f32.gmra.mrb[0].mxu0 %v3459
      %v3638 = vpop.f32.mrb[0].mxu0
      %v3639 = vadd.f32 0.0, %v3638
      %v3640 = vpop.f32.mrb[0].mxu0
      %3641 = vmatprep.mubr.f32.mxu0 0.0
      %3642 = vmatmul.mubr.f32.gmra.mrb[0].mxu0 %v3462
      %v3643 = vpop.f32.mrb[0].mxu0
      %v3644 = vadd.f32 0.0, %v3643
      %v3645 = vpop.f32.mrb[0].mxu0
      %3646 = vmatprep.mubr.f32.mxu0 0.0
      %3647 = vmatmul.mubr.f32.gmra.mrb[0].mxu0 %v3465
      %v3648 = vpop.f32.mrb[0].mxu0
      %v3649 = vadd.f32 0.0, %v3648
      %v3650 = vpop.f32.mrb[0].mxu0
      %3651 = vmatprep.mubr.f32.mxu0 0.0
      %3652 = vmatmul.mubr.f32.gmra.mrb[0].mxu0 %v3468
      %v3653 = vpop.f32.mrb[0].mxu0
      %v3654 = vadd.f32 0.0, %v3653
      %v3655 = vpop.f32.mrb[0].mxu0
      %3656 = vmatprep.mubr.f32.mxu0 0.0
      %3657 = vmatmul.mubr.f32.gmra.mrb[0].mxu0 %v3471
      %v3658 = vpop.f32.mrb[0].mxu0
      %v3659 = vadd.f32 0.0, %v3658
      %v3660 = vpop.f32.mrb[0].mxu0
      %3661 = vmatprep.mubr.f32.mxu0 0.0
      %3662 = vmatmul.mubr.f32.gmra.mrb[0].mxu0 %v3474
      %v3663 = vpop.f32.mrb[0].mxu0
      %v3664 = vadd.f32 0.0, %v3663
      %v3665 = vpop.f32.mrb[0].mxu0
      %3666 = vmatprep.mubr.f32.mxu0 0.0
      %3667 = vmatmul.mubr.f32.gmra.mrb[0].mxu0 %v3477
      %v3668 = vpop.f32.mrb[0].mxu0
      %v3669 = vadd.f32 0.0, %v3668
      %v3670 = vpop.f32.mrb[0].mxu0
      %3671 = vmatprep.mubr.f32.mxu0 0.0
      %3672 = vmatmul.mubr.f32.gmra.mrb[0].mxu0 %v3480
      %v3673 = vpop.f32.mrb[0].mxu0
      %v3674 = vadd.f32 0.0, %v3673
      %v3675 = vpop.f32.mrb[0].mxu0
      %3676 = vmatprep.mubr.f32.mxu0 0.0
      %3677 = vmatmul.mubr.f32.gmra.mrb[0].mxu0 %v3483
      %v3678 = vpop.f32.mrb[0].mxu0
      %v3679 = vadd.f32 0.0, %v3678
      %v3680 = vpop.f32.mrb[0].mxu0
      %3681 = vmatprep.mubr.f32.mxu0 0.0
      %3682 = vmatmul.mubr.f32.gmra.mrb[0].mxu0 %v3486
      %v3683 = vpop.f32.mrb[0].mxu0
      %v3684 = vadd.f32 0.0, %v3683
      %v3685 = vpop.f32.mrb[0].mxu0
      %3686 = vmatprep.mubr.f32.mxu0 0.0
      %3687 = vmatmul.mubr.f32.gmra.mrb[0].mxu0 %v3489
      %v3688 = vpop.f32.mrb[0].mxu0
      %v3689 = vadd.f32 0.0, %v3688
      %v3690 = vpop.f32.mrb[0].mxu0
      %3691 = vmatprep.mubr.f32.mxu0 0.0
      %3692 = vmatmul.mubr.f32.gmra.mrb[0].mxu0 %v3492
      %v3693 = vpop.f32.mrb[0].mxu0
      %v3694 = vadd.f32 0.0, %v3693
      %v3695 = vpop.f32.mrb[0].mxu0
      %3696 = vmatprep.mubr.f32.mxu0 0.0
      %3697 = vmatmul.mubr.f32.gmra.mrb[0].mxu0 %v3495
      %v3698 = vpop.f32.mrb[0].mxu0
      %v3699 = vadd.f32 0.0, %v3698
      %v3700 = vpop.f32.mrb[0].mxu0
      %3701 = vmatprep.mubr.f32.mxu0 0.0
      %3702 = vmatmul.mubr.f32.gmra.mrb[0].mxu0 %v3498
      %v3703 = vpop.f32.mrb[0].mxu0
      %v3704 = vadd.f32 0.0, %v3703
      %v3705 = vpop.f32.mrb[0].mxu0
      %3706 = vmatprep.mubr.f32.mxu0 0.0
      %3707 = vmatmul.mubr.f32.gmra.mrb[0].mxu0 %v3501
      %v3708 = vpop.f32.mrb[0].mxu0
      %v3709 = vadd.f32 0.0, %v3708
      %v3710 = vpop.f32.mrb[0].mxu0
      %3711 = vmatprep.mubr.f32.mxu0 0.0
      %3712 = vmatmul.mubr.f32.gmra.mrb[0].mxu0 %v3504
      %v3713 = vpop.f32.mrb[0].mxu0
      %v3714 = vadd.f32 0.0, %v3713
      %v3715 = vpop.f32.mrb[0].mxu0
      %3716 = vmatprep.mubr.f32.mxu0 0.0
      %3717 = vmatmul.mubr.f32.gmra.mrb[0].mxu0 %v3507
      %v3718 = vpop.f32.mrb[0].mxu0
      %v3719 = vadd.f32 0.0, %v3718
      %v3720 = vpop.f32.mrb[0].mxu0
      %3721 = vmatprep.mubr.f32.mxu0 0.0
      %3722 = vmatmul.mubr.f32.gmra.mrb[0].mxu0 %v3510
      %v3723 = vpop.f32.mrb[0].mxu0
      %v3724 = vadd.f32 0.0, %v3723
      %v3725 = vpop.f32.mrb[0].mxu0
      %3726 = vmatprep.mubr.f32.mxu0 0.0
      %3727 = vmatmul.mubr.f32.gmra.mrb[0].mxu0 %v3513
      %v3728 = vpop.f32.mrb[0].mxu0
      %v3729 = vadd.f32 0.0, %v3728
      %v3730 = vpop.f32.mrb[0].mxu0
      %3731 = vmatprep.mubr.f32.mxu0 0.0
      %3732 = vmatmul.mubr.f32.gmra.mrb[0].mxu0 %v3516
      %v3733 = vpop.f32.mrb[0].mxu0
      %v3734 = vadd.f32 0.0, %v3733
      %v3735 = vpop.f32.mrb[0].mxu0
      %3736 = vmatprep.mubr.f32.mxu0 0.0
      %3737 = vmatmul.mubr.f32.gmra.mrb[0].mxu0 %v3519
      %v3738 = vpop.f32.mrb[0].mxu0
      %v3739 = vadd.f32 0.0, %v3738
      %v3740 = vpop.f32.mrb[0].mxu0
      %3741 = vmatprep.mubr.f32.mxu0 0.0
      %3742 = vmatmul.mubr.f32.gmra.mrb[0].mxu0 %v3522
      %v3743 = vpop.f32.mrb[0].mxu0
      %v3744 = vadd.f32 0.0, %v3743
      %v3745 = vpop.f32.mrb[0].mxu0
      %3746 = vmatprep.mubr.f32.mxu0 0.0
      %3747 = vmatmul.mubr.f32.gmra.mrb[0].mxu0 %v3525
      %v3748 = vpop.f32.mrb[0].mxu0
      %v3749 = vadd.f32 0.0, %v3748
      %v3750 = vpop.f32.mrb[0].mxu0
      %3751 = vmatprep.mubr.f32.mxu0 0.0
      %3752 = vmatmul.mubr.f32.gmra.mrb[0].mxu0 %v3528
      %v3753 = vpop.f32.mrb[0].mxu0
      %v3754 = vadd.f32 0.0, %v3753
      %v3755 = vpop.f32.mrb[0].mxu0
      %3756 = vmatprep.mubr.f32.mxu0 0.0
      %3757 = vmatmul.mubr.f32.gmra.mrb[0].mxu0 %v3531
      %v3758 = vpop.f32.mrb[0].mxu0
      %v3759 = vadd.f32 0.0, %v3758
      %v3760 = vpop.f32.mrb[0].mxu0
      %3761 = vmatprep.mubr.f32.mxu0 0.0
      %3762 = vmatmul.mubr.f32.gmra.mrb[0].mxu0 %v3534
      %v3763 = vpop.f32.mrb[0].mxu0
      %v3764 = vadd.f32 0.0, %v3763
      %v3765 = vpop.f32.mrb[0].mxu0
      %3766 = vmatprep.mubr.f32.mxu0 0.0
      %3767 = vmatmul.mubr.f32.gmra.mrb[0].mxu0 %v3537
      %v3768 = vpop.f32.mrb[0].mxu0
      %v3769 = vadd.f32 0.0, %v3768
      %v3770 = vpop.f32.mrb[0].mxu0
      %3771 = vmatprep.mubr.f32.mxu0 0.0
      %3772 = vmatmul.mubr.f32.gmra.mrb[0].mxu0 %v3540
      %v3773 = vpop.f32.mrb[0].mxu0
      %v3774 = vadd.f32 0.0, %v3773
      %v3775 = vpop.f32.mrb[0].mxu0
      %3776 = vdwg.mxu0
      %v3777 = vadd.f32 %v3365, %v3609
      %v3778 = vadd.f32 %v3366, %v3614
      %v3779 = vadd.f32 %v3367, %v3619
      %v3780 = vadd.f32 %v3368, %v3624
      %v3781 = vadd.f32 %v3369, %v3629
      %v3782 = vadd.f32 %v3370, %v3634
      %v3783 = vadd.f32 %v3371, %v3639
      %v3784 = vadd.f32 %v3372, %v3644
      %v3785 = vadd.f32 %v3373, %v3649
      %v3786 = vadd.f32 %v3374, %v3654
      %v3787 = vadd.f32 %v3375, %v3659
      %v3788 = vadd.f32 %v3376, %v3664
      %v3789 = vadd.f32 %v3377, %v3669
      %v3790 = vadd.f32 %v3378, %v3674
      %v3791 = vadd.f32 %v3379, %v3679
      %v3792 = vadd.f32 %v3380, %v3684
      %v3793 = vadd.f32 %v3381, %v3689
      %v3794 = vadd.f32 %v3382, %v3694
      %v3795 = vadd.f32 %v3383, %v3699
      %v3796 = vadd.f32 %v3384, %v3704
      %v3797 = vadd.f32 %v3385, %v3709
      %v3798 = vadd.f32 %v3386, %v3714
      %v3799 = vadd.f32 %v3387, %v3719
      %v3800 = vadd.f32 %v3388, %v3724
      %v3801 = vadd.f32 %v3389, %v3729
      %v3802 = vadd.f32 %v3390, %v3734
      %v3803 = vadd.f32 %v3391, %v3739
      %v3804 = vadd.f32 %v3392, %v3744
      %v3805 = vadd.f32 %v3393, %v3749
      %v3806 = vadd.f32 %v3394, %v3754
      %v3807 = vadd.f32 %v3395, %v3759
      %v3808 = vadd.f32 %v3396, %v3764
      %v3809 = vadd.f32 %v3397, %v3769
      %v3810 = vadd.f32 %v3398, %v3774
      %v3811 = vld [vmem:[%s2] sm:$0x1]
      %v3813 = vlaneseq
      %v3814 = vshrl.u32 %v3813, 7
      %v3815 = vsub.s32 0, %v3814
      %v3816 = vrot.slane %v3811, %v3815
      %v3818 = vadd.f32 %v3777, %v3816
      %v3819 = vadd.f32 %v3778, %v3816
      %v3820 = vadd.f32 %v3779, %v3816
      %v3821 = vadd.f32 %v3780, %v3816
      %v3822 = vadd.f32 %v3781, %v3816
      %v3823 = vadd.f32 %v3782, %v3816
      %v3824 = vadd.f32 %v3783, %v3816
      %v3825 = vadd.f32 %v3784, %v3816
      %v3826 = vadd.f32 %v3785, %v3816
      %v3827 = vadd.f32 %v3786, %v3816
      %v3828 = vadd.f32 %v3787, %v3816
      %v3829 = vadd.f32 %v3788, %v3816
      %v3830 = vadd.f32 %v3789, %v3816
      %v3831 = vadd.f32 %v3790, %v3816
      %v3832 = vadd.f32 %v3791, %v3816
      %v3833 = vadd.f32 %v3792, %v3816
      %v3834 = vadd.f32 %v3793, %v3816
      %v3835 = vadd.f32 %v3794, %v3816
      %v3836 = vadd.f32 %v3795, %v3816
      %v3837 = vadd.f32 %v3796, %v3816
      %v3838 = vadd.f32 %v3797, %v3816
      %v3839 = vadd.f32 %v3798, %v3816
      %v3840 = vadd.f32 %v3799, %v3816
      %v3841 = vadd.f32 %v3800, %v3816
      %v3842 = vadd.f32 %v3801, %v3816
      %v3843 = vadd.f32 %v3802, %v3816
      %v3844 = vadd.f32 %v3803, %v3816
      %v3845 = vadd.f32 %v3804, %v3816
      %v3846 = vadd.f32 %v3805, %v3816
      %v3847 = vadd.f32 %v3806, %v3816
      %v3848 = vadd.f32 %v3807, %v3816
      %v3849 = vadd.f32 %v3808, %v3816
      %v3850 = vadd.f32 %v3809, %v3816
      %v3851 = vadd.f32 %v3810, %v3816
      %vm3852 = vcmp.ge.f32.partialorder %v3818, 0.0
      %vm3853 = vcmp.ge.f32.partialorder %v3819, 0.0
      %vm3854 = vcmp.ge.f32.partialorder %v3820, 0.0
      %vm3855 = vcmp.ge.f32.partialorder %v3821, 0.0
      %vm3856 = vcmp.ge.f32.partialorder %v3822, 0.0
      %vm3857 = vcmp.ge.f32.partialorder %v3823, 0.0
      %vm3858 = vcmp.ge.f32.partialorder %v3824, 0.0
      %vm3859 = vcmp.ge.f32.partialorder %v3825, 0.0
      %vm3860 = vcmp.ge.f32.partialorder %v3826, 0.0
      %vm3861 = vcmp.ge.f32.partialorder %v3827, 0.0
      %vm3862 = vcmp.ge.f32.partialorder %v3828, 0.0
      %vm3863 = vcmp.ge.f32.partialorder %v3829, 0.0
      %vm3864 = vcmp.ge.f32.partialorder %v3830, 0.0
      %vm3865 = vcmp.ge.f32.partialorder %v3831, 0.0
      %vm3866 = vcmp.ge.f32.partialorder %v3832, 0.0
      %vm3867 = vcmp.ge.f32.partialorder %v3833, 0.0
      %vm3868 = vcmp.ge.f32.partialorder %v3834, 0.0
      %vm3869 = vcmp.ge.f32.partialorder %v3835, 0.0
      %vm3870 = vcmp.ge.f32.partialorder %v3836, 0.0
      %vm3871 = vcmp.ge.f32.partialorder %v3837, 0.0
      %vm3872 = vcmp.ge.f32.partialorder %v3838, 0.0
      %vm3873 = vcmp.ge.f32.partialorder %v3839, 0.0
      %vm3874 = vcmp.ge.f32.partialorder %v3840, 0.0
      %vm3875 = vcmp.ge.f32.partialorder %v3841, 0.0
      %vm3876 = vcmp.ge.f32.partialorder %v3842, 0.0
      %vm3877 = vcmp.ge.f32.partialorder %v3843, 0.0
      %vm3878 = vcmp.ge.f32.partialorder %v3844, 0.0
      %vm3879 = vcmp.ge.f32.partialorder %v3845, 0.0
      %vm3880 = vcmp.ge.f32.partialorder %v3846, 0.0
      %vm3881 = vcmp.ge.f32.partialorder %v3847, 0.0
      %vm3882 = vcmp.ge.f32.partialorder %v3848, 0.0
      %vm3883 = vcmp.ge.f32.partialorder %v3849, 0.0
      %vm3884 = vcmp.ge.f32.partialorder %v3850, 0.0
      %vm3885 = vcmp.ge.f32.partialorder %v3851, 0.0
      %v3886 = vmul.f32 %v3818, 0.1
      %v3887 = vmul.f32 %v3819, 0.1
      %v3888 = vmul.f32 %v3820, 0.1
      %v3889 = vmul.f32 %v3821, 0.1
      %v3890 = vmul.f32 %v3822, 0.1
      %v3891 = vmul.f32 %v3823, 0.1
      %v3892 = vmul.f32 %v3824, 0.1
      %v3893 = vmul.f32 %v3825, 0.1
      %v3894 = vmul.f32 %v3826, 0.1
      %v3895 = vmul.f32 %v3827, 0.1
      %v3896 = vmul.f32 %v3828, 0.1
      %v3897 = vmul.f32 %v3829, 0.1
      %v3898 = vmul.f32 %v3830, 0.1
      %v3899 = vmul.f32 %v3831, 0.1
      %v3900 = vmul.f32 %v3832, 0.1
      %v3901 = vmul.f32 %v3833, 0.1
      %v3902 = vmul.f32 %v3834, 0.1
      %v3903 = vmul.f32 %v3835, 0.1
      %v3904 = vmul.f32 %v3836, 0.1
      %v3905 = vmul.f32 %v3837, 0.1
      %v3906 = vmul.f32 %v3838, 0.1
      %v3907 = vmul.f32 %v3839, 0.1
      %v3908 = vmul.f32 %v3840, 0.1
      %v3909 = vmul.f32 %v3841, 0.1
      %v3910 = vmul.f32 %v3842, 0.1
      %v3911 = vmul.f32 %v3843, 0.1
      %v3912 = vmul.f32 %v3844, 0.1
      %v3913 = vmul.f32 %v3845, 0.1
      %v3914 = vmul.f32 %v3846, 0.1
      %v3915 = vmul.f32 %v3847, 0.1
      %v3916 = vmul.f32 %v3848, 0.1
      %v3917 = vmul.f32 %v3849, 0.1
      %v3918 = vmul.f32 %v3850, 0.1
      %v3919 = vmul.f32 %v3851, 0.1
      %v3920 = vsel %vm3852, %v3818, %v3886
      %v3921 = vsel %vm3853, %v3819, %v3887
      %v3922 = vsel %vm3854, %v3820, %v3888
      %v3923 = vsel %vm3855, %v3821, %v3889
      %v3924 = vsel %vm3856, %v3822, %v3890
      %v3925 = vsel %vm3857, %v3823, %v3891
      %v3926 = vsel %vm3858, %v3824, %v3892
      %v3927 = vsel %vm3859, %v3825, %v3893
      %v3928 = vsel %vm3860, %v3826, %v3894
      %v3929 = vsel %vm3861, %v3827, %v3895
      %v3930 = vsel %vm3862, %v3828, %v3896
      %v3931 = vsel %vm3863, %v3829, %v3897
      %v3932 = vsel %vm3864, %v3830, %v3898
      %v3933 = vsel %vm3865, %v3831, %v3899
      %v3934 = vsel %vm3866, %v3832, %v3900
      %v3935 = vsel %vm3867, %v3833, %v3901
      %v3936 = vsel %vm3868, %v3834, %v3902
      %v3937 = vsel %vm3869, %v3835, %v3903
      %v3938 = vsel %vm3870, %v3836, %v3904
      %v3939 = vsel %vm3871, %v3837, %v3905
      %v3940 = vsel %vm3872, %v3838, %v3906
      %v3941 = vsel %vm3873, %v3839, %v3907
      %v3942 = vsel %vm3874, %v3840, %v3908
      %v3943 = vsel %vm3875, %v3841, %v3909
      %v3944 = vsel %vm3876, %v3842, %v3910
      %v3945 = vsel %vm3877, %v3843, %v3911
      %v3946 = vsel %vm3878, %v3844, %v3912
      %v3947 = vsel %vm3879, %v3845, %v3913
      %v3948 = vsel %vm3880, %v3846, %v3914
      %v3949 = vsel %vm3881, %v3847, %v3915
      %v3950 = vsel %vm3882, %v3848, %v3916
      %v3951 = vsel %vm3883, %v3849, %v3917
      %v3952 = vsel %vm3884, %v3850, %v3918
      %v3953 = vsel %vm3885, %v3851, %v3919
      %3954 = vst.msk [vmem:[%s170] sm:$0xff] %vm252, %v3920
      %3955 = vst.msk [vmem:[%s170 + $0x8] sm:$0xff] %vm252, %v3921
      %3956 = vst.msk [vmem:[%s170 + $0x10] sm:$0xff] %vm252, %v3922
      %3957 = vst.msk [vmem:[%s170 + $0x18] sm:$0xff] %vm252, %v3923
      %3958 = vst.msk [vmem:[%s170 + $0x20] sm:$0xff] %vm252, %v3924
      %3959 = vst.msk [vmem:[%s170 + $0x28] sm:$0xff] %vm252, %v3925
      %3960 = vst.msk [vmem:[%s170 + $0x30] sm:$0xff] %vm252, %v3926
      %3961 = vst.msk [vmem:[%s170 + $0x38] sm:$0xff] %vm252, %v3927
      %3962 = vst.msk [vmem:[%s170 + $0x40] sm:$0xff] %vm252, %v3928
      %3963 = vst.msk [vmem:[%s170 + $0x48] sm:$0xff] %vm252, %v3929
      %3964 = vst.msk [vmem:[%s170 + $0x50] sm:$0xff] %vm252, %v3930
      %3965 = vst.msk [vmem:[%s170 + $0x58] sm:$0xff] %vm252, %v3931
      %3966 = vst.msk [vmem:[%s170 + $0x60] sm:$0xff] %vm252, %v3932
      %3967 = vst.msk [vmem:[%s170 + $0x68] sm:$0xff] %vm252, %v3933
      %3968 = vst.msk [vmem:[%s170 + $0x70] sm:$0xff] %vm252, %v3934
      %3969 = vst.msk [vmem:[%s170 + $0x78] sm:$0xff] %vm252, %v3935
      %3970 = vst.msk [vmem:[%s170 + $0x80] sm:$0xff] %vm252, %v3936
      %3971 = vst.msk [vmem:[%s170 + $0x88] sm:$0xff] %vm252, %v3937
      %3972 = vst.msk [vmem:[%s170 + $0x90] sm:$0xff] %vm252, %v3938
      %3973 = vst.msk [vmem:[%s170 + $0x98] sm:$0xff] %vm252, %v3939
      %3974 = vst.msk [vmem:[%s170 + $0xa0] sm:$0xff] %vm252, %v3940
      %3975 = vst.msk [vmem:[%s170 + $0xa8] sm:$0xff] %vm252, %v3941
      %3976 = vst.msk [vmem:[%s170 + $0xb0] sm:$0xff] %vm252, %v3942
      %3977 = vst.msk [vmem:[%s170 + $0xb8] sm:$0xff] %vm252, %v3943
      %3978 = vst.msk [vmem:[%s170 + $0xc0] sm:$0xff] %vm252, %v3944
      %3979 = vst.msk [vmem:[%s170 + $0xc8] sm:$0xff] %vm252, %v3945
      %3980 = vst.msk [vmem:[%s170 + $0xd0] sm:$0xff] %vm252, %v3946
      %3981 = vst.msk [vmem:[%s170 + $0xd8] sm:$0xff] %vm252, %v3947
      %3982 = vst.msk [vmem:[%s170 + $0xe0] sm:$0xff] %vm252, %v3948
      %3983 = vst.msk [vmem:[%s170 + $0xe8] sm:$0xff] %vm252, %v3949
      %3984 = vst.msk [vmem:[%s170 + $0xf0] sm:$0xff] %vm252, %v3950
      %3985 = vst.msk [vmem:[%s170 + $0xf8] sm:$0xff] %vm252, %v3951
      %3986 = vst.msk [vmem:[%s170 + $0x100] sm:$0xff] %vm252, %v3952
      %3987 = vst.msk [vmem:[%s170 + $0x108] sm:$0xff] %vm252, %v3953
      %p3988 = scmp.lt.s32.totalorder %s14, 7
      %s3989 = scalar_select %p3988, %s14, 7
      %s3990 = smul.addr %s3989, 34
      %s3991 = smul.addr %s3990, 8
      %s3992 = scalar_lea.vmem %s3, %s3991
      // Predicated region
      $region33: #{tpu_custom_call.1} parent=31 // pred_check
        %p3993 = pneg %p100
      $region34: #{tpu_custom_call.1} parent=31 // pred_check_branch
        %3995 = sbr.rel (%p3993) target = $region36
      $region35: #{tpu_custom_call.1} parent=31 // pred_region
        _
      $region36: #{tpu_custom_call.1} parent=31 // pred_fallthru
        _
    $region32: #{tpu_custom_call.1} parent=5 // pred_fallthru
      _
    %p3996 = scmp.le.s32.totalorder 2, %s9
    // Predicated region
    $region37: #{tpu_custom_call.1} parent=5 // pred_check
      %p3997 = pneg %p3996
    $region38: #{tpu_custom_call.1} parent=5 // pred_check_branch
      %3999 = sbr.rel (%p3997) target = $region40
    $region39: #{tpu_custom_call.1} parent=5 // pred_region
      %s4000 = ssub.s32 %s9, 2
      // Predicated region
      $region41: #{tpu_custom_call.1} parent=39 // pred_check
        %p4001 = pneg %p106
      $region42: #{tpu_custom_call.1} parent=39 // pred_check_branch
        %4003 = sbr.rel (%p4001) target = $region44
      $region43: #{tpu_custom_call.1} parent=39 // pred_region
        %p4004 = scmp.lt.s32.totalorder %s15, 7
        %s4005 = scalar_select %p4004, %s15, 7
        %s4006 = smul.addr %s4005, 34
        %s4007 = smul.addr %s4006, 8
        %s4008 = scalar_lea.vmem %s3, %s4007
      $region44: #{tpu_custom_call.1} parent=39 // pred_fallthru
        _
    $region40: #{tpu_custom_call.1} parent=5 // pred_fallthru
      _
  $region6: #{tpu_custom_call.1} parent=0 // loop_footer
    %s13 = sadd.s32 1, %s9
  $region7: #{tpu_custom_call.1} parent=0 // loop_footer_branch
    %8 = sbr.rel target = $region3
  $region8: #{tpu_custom_call.1} parent=0 // loop_exit
    _

</llo_original>
